<compile_context>
chip_gen: v6e
topology: v6e:2x2x1
jax: 0.10.0
libtpu: 0.0.40
codegen_flags: <defaults>
</compile_context>

<pallas_src>
import functools

import jax
import jax.numpy as jnp
from jax.experimental import pallas as pl
from jax.experimental.pallas import tpu as pltpu


def _round_up(n, m):
    return ((n + m - 1) // m) * m


# ----------------------------- Pallas kernel -------------------------------
def _textcnn_head_kernel(x_ref, pooled_ref, w_all_ref, b_all_ref,
                         wfc_ref, bfc_ref, wcp_ref, wcc_ref, bcls_ref,
                         out_ref,
                         xext_ref, m1_ref, m2_ref, m3_ref,
                         *, TB, TL, H):
    """One (batch-tile, seq-tile) grid step of the TextCNN + classifier head.

    Staged layout of xext_ref (TB, TL+16, H) bf16:
      rows 0:5        always zero (so the tile store below is 8-aligned)
      rows 5:8        3-row left halo = previous seq tile's last rows
                      (zeros at l==0; row 7 is the Conv1d(padding=1) left pad)
      rows 8:TL+8     the current seq tile (8-aligned store)
      rows TL+8:TL+16 always zero (row TL+8 is the right pad for the last tile)
    """
    l = pl.program_id(1)
    nl = pl.num_programs(1)
    P = TL + 8          # number of window-start positions evaluated per tile

    # ---- init at the first seq tile of this batch tile ----
    @pl.when(l == 0)
    def _init():
        xext_ref[:, 0:8, :] = jnp.zeros((TB, 8, H), xext_ref.dtype)
        xext_ref[:, TL + 8:TL + 16, :] = jnp.zeros((TB, 8, H), xext_ref.dtype)
        m1_ref[...] = jnp.full((TB, H), -jnp.inf, jnp.float32)
        m2_ref[...] = jnp.full((TB, H), -jnp.inf, jnp.float32)
        m3_ref[...] = jnp.full((TB, H), -jnp.inf, jnp.float32)

    # ---- stage this tile's rows behind the carried halo (aligned store) ----
    xext_ref[:, 8:TL + 8, :] = x_ref[...]
    xext = xext_ref[...]                                    # (TB, TL+16, H) bf16

    # Shifted views of the *bf16 input*: tap shifts are applied to the small
    # staged input rather than the large f32 conv outputs.  xs[j] row p holds
    # staged row p + j.
    xs = [xext[:, j:j + P, :].reshape(TB * P, H) for j in range(4)]

    # window-start index along the staged rows (shared by all three convs)
    p_idx = jax.lax.broadcasted_iota(jnp.int32, (1, P, 1), 1)

    def conv_running_max(tap0, k, m_ref):
        # Per-conv matmuls with f32 accumulation; live f32 intermediate is
        # only (TB*P, H), not a tap-stacked (rows, 9H) slab.
        acc = jnp.dot(xs[0], w_all_ref[tap0],
                      preferred_element_type=jnp.float32)
        for j in range(1, k):
            acc = acc + jnp.dot(xs[j], w_all_ref[tap0 + j],
                                preferred_element_type=jnp.float32)
        acc = acc.reshape(TB, P, H)
        # Keep exactly the Conv1d(padding=1) output positions owned by this
        # seq tile: staged row p maps to global row p - 8 + l*TL; a window
        # starting at p covers rows p..p+k-1 and is owned by the tile
        # containing its end row (the last tile also owns the right-pad window).
        lower = jnp.where(l == 0, 7, 9 - k)
        upper = jnp.where(l == nl - 1, TL + 9 - k, TL + 8 - k)
        acc = jnp.where((p_idx >= lower) & (p_idx <= upper), acc, -jnp.inf)
        m_ref[...] = jnp.maximum(m_ref[...], jnp.max(acc, axis=1))

    conv_running_max(0, 2, m1_ref)       # conv1: kernel_size=2, taps 0..1
    conv_running_max(2, 3, m2_ref)       # conv2: kernel_size=3, taps 2..4
    conv_running_max(5, 4, m3_ref)       # conv3: kernel_size=4, taps 5..8

    # ---- carry the last 3 real rows into the halo for the next seq tile ----
    xext_ref[:, 5:8, :] = xext_ref[:, TL + 5:TL + 8, :]

    # ---- finalize: bias + ReLU + fc + classifier (last seq tile only) ----
    @pl.when(l == nl - 1)
    def _finalize():
        b_all = b_all_ref[...]
        # max_t(relu(conv + b)) == relu(max_t(conv) + b): bias/relu applied once.
        f1 = jnp.maximum(m1_ref[...] + b_all[0:1, :], 0.0)
        f2 = jnp.maximum(m2_ref[...] + b_all[1:2, :], 0.0)
        f3 = jnp.maximum(m3_ref[...] + b_all[2:3, :], 0.0)
        # fc over concat([f1, f2, f3]) == sum of three matmuls (no in-kernel concat)
        cnn = (jnp.dot(f1, wfc_ref[0], preferred_element_type=jnp.float32)
               + jnp.dot(f2, wfc_ref[1], preferred_element_type=jnp.float32)
               + jnp.dot(f3, wfc_ref[2], preferred_element_type=jnp.float32)
               + bfc_ref[...])                               # (TB, CP)
        # classifier over concat([pooled, cnn]) == two matmuls with aligned weights
        logits = (jnp.dot(pooled_ref[...], wcp_ref[...],
                          preferred_element_type=jnp.float32)
                  + jnp.dot(cnn, wcc_ref[...],
                            preferred_element_type=jnp.float32)
                  + bcls_ref[...])                           # (TB, NP)
        out_ref[...] = logits


def mymodel_head(hidden_states, pooled_output, params, *,
                 block_b=8, block_l=128):
    """hidden_states: (B, L, H), pooled_output: (B, H) -> logits (B, num_labels)."""
    B, L, H = hidden_states.shape
    num_labels = params['bcls'].shape[-1]

    block_b = min(block_b, B)
    block_l = min(block_l, L)
    # Prefer >= 2 batch tiles so the "parallel" batch axis can shard across
    # both TensorCores on megacore parts (v7x).
    if B // block_b < 2 and B % 2 == 0 and (B // 2) % 8 == 0:
        block_b = B // 2
    assert B % block_b == 0 and L % block_l == 0, "tile sizes must divide B, L"
    assert block_b % 8 == 0 or block_b == B, "block_b must be 8-aligned or == B"
    assert block_l % 8 == 0 or block_l == L, "block_l must be 8-aligned or == L"

    nb, nl = B // block_b, L // block_l
    CP = _round_up(num_labels, 128)      # lane-dense fc width
    NP = CP                              # lane-dense classifier width

    # ---- kernel-friendly parameter layout (host-side, cheap, done once) ----
    # Conv-tap weights stacked on the leading axis: (9, H, H) bf16.  Tap j of a
    # conv multiplies input row t+j (== torch_conv.weight[:, :, j].T).
    w_all = jnp.concatenate([params['w1'], params['w2'], params['w3']],
                            axis=0).astype(jnp.bfloat16)                 # (9,H,H)
    b_all = jnp.concatenate([params['b1'], params['b2'], params['b3']],
                            axis=0).astype(jnp.float32)                  # (3,H)
    wfc = params['wfc'].reshape(3, H, num_labels)
    wfc_p = (jnp.zeros((3, H, CP), jnp.float32)
             .at[:, :, :num_labels].set(wfc)).astype(jnp.bfloat16)       # bf16 tail
    bfc_p = jnp.zeros((1, CP), jnp.float32).at[:, :num_labels].set(params['bfc'])
    wcls = params['wcls'].astype(jnp.float32)
    wcp = jnp.zeros((H, NP), jnp.float32).at[:, :num_labels].set(wcls[:H])
    wcc = jnp.zeros((CP, NP), jnp.float32).at[:num_labels, :num_labels].set(wcls[H:])
    bcls_p = jnp.zeros((1, NP), jnp.float32).at[:, :num_labels].set(params['bcls'])

    x_bf16 = hidden_states.astype(jnp.bfloat16)
    pooled = pooled_output.astype(jnp.float32)

    kernel = functools.partial(_textcnn_head_kernel,
                               TB=block_b, TL=block_l, H=H)

    # Weights: constant block index + single buffering -> fetched once,
    # VMEM-resident for the whole grid, no wasted second buffer.
    def resident(shape):
        nd = len(shape)
        return pl.BlockSpec(shape, lambda *_: (0,) * nd,
                            pipeline_mode=pl.Buffered(1))

    grid_spec = pltpu.PrefetchScalarGridSpec(
        num_scalar_prefetch=0,
        grid=(nb, nl),
        in_specs=[
            pl.BlockSpec((block_b, block_l, H), lambda b, l: (b, l, 0)),   # x
            pl.BlockSpec((block_b, H), lambda b, l: (b, 0)),               # pooled
            resident((9, H, H)),                                           # w_all
            resident((3, H)),                                              # b_all
            resident((3, H, CP)),                                          # wfc
            resident((1, CP)),                                             # bfc
            resident((H, NP)),                                             # wcls (pooled part)
            resident((CP, NP)),                                            # wcls (cnn part)
            resident((1, NP)),                                             # bcls
        ],
        out_specs=pl.BlockSpec((block_b, NP), lambda b, l: (b, 0)),
        scratch_shapes=[
            pltpu.VMEM((block_b, block_l + 16, H), x_bf16.dtype),  # aligned staging + halo
            pltpu.VMEM((block_b, H), jnp.float32),                 # running max conv1
            pltpu.VMEM((block_b, H), jnp.float32),                 # running max conv2
            pltpu.VMEM((block_b, H), jnp.float32),                 # running max conv3
        ],
    )

    conv_flops = 2 * B * nl * (block_l + 8) * H * (9 * H)
    tail_flops = 2 * B * (3 * H * CP + H * NP + CP * NP)
    bytes_accessed = (x_bf16.size * 2 + pooled.size * 4 + w_all.size * 2
                      + b_all.size * 4 + wfc_p.size * 2 + bfc_p.size * 4
                      + wcp.size * 4 + wcc.size * 4 + bcls_p.size * 4
                      + B * NP * 4)

    out_padded = pl.pallas_call(
        kernel,
        out_shape=jax.ShapeDtypeStruct((B, NP), jnp.float32),
        grid_spec=grid_spec,
        compiler_params=pltpu.CompilerParams(
            dimension_semantics=("parallel", "arbitrary"),
            # Peak live VMEM at production shapes (H=768, block_b=8, block_l=128)
            # is ~35 MB after the per-conv split + single-buffered weights, so a
            # 48 MiB cap fits every generation, including v7x's 64 MiB/core.
            vmem_limit_bytes=48 * 1024 * 1024),
        cost_estimate=pl.CostEstimate(flops=int(conv_flops + tail_flops),
                                      transcendentals=0,
                                      bytes_accessed=int(bytes_accessed)),
    )(x_bf16, pooled, w_all, b_all, wfc_p, bfc_p, wcp, wcc, bcls_p)

    return out_padded[:, :num_labels]


# ----------------------------- plain-JAX glue -------------------------------
# TODO(synk): BertModel.from_pretrained(bert_path) has no Pallas equivalent
# without a checkpoint; replaced with a deterministic embedding + tanh-pooler
# stub producing outputs of the same shapes/dtypes.
def bert_stub(input_ids, attention_mask, emb, wp, bp):
    hidden = emb[input_ids]                                   # (B, L, H)
    hidden = hidden * attention_mask[..., None].astype(hidden.dtype)
    pooled = jnp.tanh(hidden[:, 0, :] @ wp + bp)              # (B, H)
    return hidden, pooled


def init_params(key, H, num_labels):
    ks = jax.random.split(key, 10)
    s = 0.1
    return dict(
        w1=jax.random.normal(ks[0], (2, H, H), jnp.float32) * s,
        b1=jax.random.normal(ks[1], (1, H), jnp.float32) * s,
        w2=jax.random.normal(ks[2], (3, H, H), jnp.float32) * s,
        b2=jax.random.normal(ks[3], (1, H), jnp.float32) * s,
        w3=jax.random.normal(ks[4], (4, H, H), jnp.float32) * s,
        b3=jax.random.normal(ks[5], (1, H), jnp.float32) * s,
        wfc=jax.random.normal(ks[6], (3 * H, num_labels), jnp.float32) * s,
        bfc=jax.random.normal(ks[7], (1, num_labels), jnp.float32) * s,
        wcls=jax.random.normal(ks[8], (H + num_labels, num_labels),
                               jnp.float32) * s,
        bcls=jax.random.normal(ks[9], (1, num_labels), jnp.float32) * s,
    )


def reference_head(hidden_states, pooled, p):
    """Pure-JAX reference mirroring the PyTorch forward (eval mode).

    Inputs / conv-tap / fc weights are rounded to bf16 like the kernel;
    all accumulation is f32.
    """
    hp = jax.lax.Precision.HIGHEST
    x = hidden_states.astype(jnp.bfloat16).astype(jnp.float32)
    B, L, H = x.shape
    xp = jnp.pad(x, ((0, 0), (1, 1), (0, 0)))

    def conv_relu_max(w, b, k):
        w = w.astype(jnp.bfloat16).astype(jnp.float32)
        lout = L + 3 - k
        acc = sum(jnp.einsum('blh,ho->blo', xp[:, j:j + lout, :], w[j],
                             precision=hp)
                  for j in range(k)) + b[None, :, :]
        return jnp.maximum(acc, 0.0).max(axis=1)

    f = jnp.concatenate([conv_relu_max(p['w1'], p['b1'], 2),
                         conv_relu_max(p['w2'], p['b2'], 3),
                         conv_relu_max(p['w3'], p['b3'], 4)], axis=1)
    wfc = p['wfc'].astype(jnp.bfloat16).astype(jnp.float32)
    cnn = jnp.dot(f, wfc, precision=hp) + p['bfc']
    cat = jnp.concatenate([pooled.astype(jnp.float32), cnn], axis=1)
    return jnp.dot(cat, p['wcls'], precision=hp) + p['bcls']


# --------------------------------- main -------------------------------------
if __name__ == "__main__":
    B, L, H, NUM_LABELS, VOCAB = 16, 24, 32, 6, 50

    key = jax.random.PRNGKey(0)
    k_ids, k_emb, k_wp, k_bp, k_params = jax.random.split(key, 5)

    input_ids = jax.random.randint(k_ids, (B, L), 0, VOCAB, dtype=jnp.int32)
    attention_mask = jnp.ones((B, L), dtype=jnp.int32)

    emb = jax.random.normal(k_emb, (VOCAB, H), jnp.float32) * 0.1
    wp = jax.random.normal(k_wp, (H, H), jnp.float32) * 0.1
    bp = jax.random.normal(k_bp, (H,), jnp.float32) * 0.1
    params = init_params(k_params, H, NUM_LABELS)

    hidden_states, pooled_output = bert_stub(input_ids, attention_mask,
                                             emb, wp, bp)
    ref = reference_head(hidden_states, pooled_output, params)

    # grid (2, 3): 2 batch tiles ("parallel") x 3 seq tiles ("arbitrary"),
    # exercising the carried halo + running time-max across two boundaries.
    logits = mymodel_head(hidden_states, pooled_output, params,
                          block_b=8, block_l=8)
    logits = jax.block_until_ready(logits)
    assert logits.shape == (B, NUM_LABELS)
    err = float(jnp.max(jnp.abs(logits - ref)))
    assert jnp.allclose(logits, ref, atol=1e-2, rtol=1e-2), f"tiled mismatch: {err}"

    # single-tile corner (nb = 1, nl = 1) on a slice of the same data
    logits1 = mymodel_head(hidden_states[:8], pooled_output[:8], params,
                           block_b=8, block_l=L)
    logits1 = jax.block_until_ready(logits1)
    err1 = float(jnp.max(jnp.abs(logits1 - ref[:8])))
    assert jnp.allclose(logits1, ref[:8], atol=1e-2, rtol=1e-2), \
        f"single-tile mismatch: {err1}"

    print("KERNEL_OK")
</pallas_src>

<mosaic_0001>
module attributes {stable_mosaic.version = 11 : i64} {
  func.func @_textcnn_head_kernel(%arg0: i32, %arg1: i32, %arg2: memref<8x8x32xbf16, #tpu.memory_space<vmem>>, %arg3: memref<8x32xf32, #tpu.memory_space<vmem>>, %arg4: memref<9x32x32xbf16, #tpu.memory_space<vmem>>, %arg5: memref<3x32xf32, #tpu.memory_space<vmem>>, %arg6: memref<3x32x128xbf16, #tpu.memory_space<vmem>>, %arg7: memref<1x128xf32, #tpu.memory_space<vmem>>, %arg8: memref<32x128xf32, #tpu.memory_space<vmem>>, %arg9: memref<128x128xf32, #tpu.memory_space<vmem>>, %arg10: memref<1x128xf32, #tpu.memory_space<vmem>>, %arg11: memref<8x128xf32, #tpu.memory_space<vmem>>, %arg12: memref<8x24x32xbf16, #tpu.memory_space<vmem>>, %arg13: memref<8x32xf32, #tpu.memory_space<vmem>>, %arg14: memref<8x32xf32, #tpu.memory_space<vmem>>, %arg15: memref<8x32xf32, #tpu.memory_space<vmem>>) attributes {dimension_semantics = [#tpu.dimension_semantics<parallel>, #tpu.dimension_semantics<arbitrary>], iteration_bounds = array<i64: 2, 3>, scalar_prefetch = 0 : i64, scratch_operands = 4 : i64, tpu.core_type = #tpu.core_type<tc>, window_params = [{transform_indices = @transform_0, window_bounds = array<i64: 8, 8, 32>}, {transform_indices = @transform_1, window_bounds = array<i64: 8, 32>}, {pipeline_mode = #tpu.pipeline_mode<synchronous>, transform_indices = @transform_2, window_bounds = array<i64: 9, 32, 32>}, {pipeline_mode = #tpu.pipeline_mode<synchronous>, transform_indices = @transform_3, window_bounds = array<i64: 3, 32>}, {pipeline_mode = #tpu.pipeline_mode<synchronous>, transform_indices = @transform_4, window_bounds = array<i64: 3, 32, 128>}, {pipeline_mode = #tpu.pipeline_mode<synchronous>, transform_indices = @transform_5, window_bounds = array<i64: 1, 128>}, {pipeline_mode = #tpu.pipeline_mode<synchronous>, transform_indices = @transform_6, window_bounds = array<i64: 32, 128>}, {pipeline_mode = #tpu.pipeline_mode<synchronous>, transform_indices = @transform_7, window_bounds = array<i64: 128, 128>}, {pipeline_mode = #tpu.pipeline_mode<synchronous>, transform_indices = @transform_8, window_bounds = array<i64: 1, 128>}, {transform_indices = @transform_9, window_bounds = array<i64: 8, 128>}]} {
    %c0_i32 = arith.constant 0 : i32
    %0 = arith.cmpi eq, %arg1, %c0_i32 : i32
    %1 = arith.extui %0 : i1 to i32
    %c0_i32_0 = arith.constant 0 : i32
    %2 = arith.cmpi ne, %1, %c0_i32_0 : i32
    scf.if %2 {
      %cst_71 = arith.constant 0.000000e+00 : bf16
      %107 = vector.broadcast %cst_71 : bf16 to vector<8x8x32xbf16>
      %c0_72 = arith.constant 0 : index
      %c0_73 = arith.constant 0 : index
      %c0_74 = arith.constant 0 : index
      %108 = vector.load %arg12[%c0_72, %c0_73, %c0_74] : memref<8x24x32xbf16, #tpu.memory_space<vmem>>, vector<8x8x32xbf16>
      tpu.vector_store %arg12[%c0_72, %c0_73, %c0_74], %107 {strides = array<i32>} : memref<8x24x32xbf16, #tpu.memory_space<vmem>>, vector<8x8x32xbf16>,
      %cst_75 = arith.constant 0.000000e+00 : bf16
      %109 = vector.broadcast %cst_75 : bf16 to vector<8x8x32xbf16>
      %c0_76 = arith.constant 0 : index
      %c16 = arith.constant 16 : index
      %c0_77 = arith.constant 0 : index
      %110 = vector.load %arg12[%c0_76, %c16, %c0_77] : memref<8x24x32xbf16, #tpu.memory_space<vmem>>, vector<8x8x32xbf16>
      tpu.vector_store %arg12[%c0_76, %c16, %c0_77], %109 {strides = array<i32>} : memref<8x24x32xbf16, #tpu.memory_space<vmem>>, vector<8x8x32xbf16>,
      %cst_78 = arith.constant 0xFF800000 : f32
      %111 = vector.broadcast %cst_78 : f32 to vector<8x32xf32>
      %c0_79 = arith.constant 0 : index
      %c0_80 = arith.constant 0 : index
      %112 = vector.load %arg13[%c0_79, %c0_80] : memref<8x32xf32, #tpu.memory_space<vmem>>, vector<8x32xf32>
      tpu.vector_store %arg13[%c0_79, %c0_80], %111 {strides = array<i32>} : memref<8x32xf32, #tpu.memory_space<vmem>>, vector<8x32xf32>,
      %cst_81 = arith.constant 0xFF800000 : f32
      %113 = vector.broadcast %cst_81 : f32 to vector<8x32xf32>
      %c0_82 = arith.constant 0 : index
      %c0_83 = arith.constant 0 : index
      %114 = vector.load %arg14[%c0_82, %c0_83] : memref<8x32xf32, #tpu.memory_space<vmem>>, vector<8x32xf32>
      tpu.vector_store %arg14[%c0_82, %c0_83], %113 {strides = array<i32>} : memref<8x32xf32, #tpu.memory_space<vmem>>, vector<8x32xf32>,
      %cst_84 = arith.constant 0xFF800000 : f32
      %115 = vector.broadcast %cst_84 : f32 to vector<8x32xf32>
      %c0_85 = arith.constant 0 : index
      %c0_86 = arith.constant 0 : index
      %116 = vector.load %arg15[%c0_85, %c0_86] : memref<8x32xf32, #tpu.memory_space<vmem>>, vector<8x32xf32>
      tpu.vector_store %arg15[%c0_85, %c0_86], %115 {strides = array<i32>} : memref<8x32xf32, #tpu.memory_space<vmem>>, vector<8x32xf32>,
    } else {
    }
    %c0 = arith.constant 0 : index
    %c0_1 = arith.constant 0 : index
    %c0_2 = arith.constant 0 : index
    %3 = vector.load %arg2[%c0, %c0_1, %c0_2] : memref<8x8x32xbf16, #tpu.memory_space<vmem>>, vector<8x8x32xbf16>
    %c0_3 = arith.constant 0 : index
    %c8 = arith.constant 8 : index
    %c0_4 = arith.constant 0 : index
    %4 = vector.load %arg12[%c0_3, %c8, %c0_4] : memref<8x24x32xbf16, #tpu.memory_space<vmem>>, vector<8x8x32xbf16>
    tpu.vector_store %arg12[%c0_3, %c8, %c0_4], %3 {strides = array<i32>} : memref<8x24x32xbf16, #tpu.memory_space<vmem>>, vector<8x8x32xbf16>,
    %c0_5 = arith.constant 0 : index
    %c0_6 = arith.constant 0 : index
    %c0_7 = arith.constant 0 : index
    %5 = vector.load %arg12[%c0_5, %c0_6, %c0_7] : memref<8x24x32xbf16, #tpu.memory_space<vmem>>, vector<8x24x32xbf16>
    %6 = vector.extract_strided_slice %5 {offsets = [0, 0, 0], sizes = [8, 16, 32], strides = [1, 1, 1]} : vector<8x24x32xbf16> to vector<8x16x32xbf16>
    %7 = vector.shape_cast %6 : vector<8x16x32xbf16> to vector<128x32xbf16>
    %8 = vector.extract_strided_slice %5 {offsets = [0, 1, 0], sizes = [8, 16, 32], strides = [1, 1, 1]} : vector<8x24x32xbf16> to vector<8x16x32xbf16>
    %9 = vector.shape_cast %8 : vector<8x16x32xbf16> to vector<128x32xbf16>
    %10 = vector.extract_strided_slice %5 {offsets = [0, 2, 0], sizes = [8, 16, 32], strides = [1, 1, 1]} : vector<8x24x32xbf16> to vector<8x16x32xbf16>
    %11 = vector.shape_cast %10 : vector<8x16x32xbf16> to vector<128x32xbf16>
    %12 = vector.extract_strided_slice %5 {offsets = [0, 3, 0], sizes = [8, 16, 32], strides = [1, 1, 1]} : vector<8x24x32xbf16> to vector<8x16x32xbf16>
    %13 = vector.shape_cast %12 : vector<8x16x32xbf16> to vector<128x32xbf16>
    %14 = tpu.iota {dimensions = array<i32: 1>} : vector<1x16x1xi32>
    %c0_8 = arith.constant 0 : index
    %c0_9 = arith.constant 0 : index
    %c0_10 = arith.constant 0 : index
    %15 = vector.load %arg4[%c0_8, %c0_9, %c0_10] : memref<9x32x32xbf16, #tpu.memory_space<vmem>>, vector<1x32x32xbf16>
    %16 = vector.shape_cast %15 : vector<1x32x32xbf16> to vector<32x32xbf16>
    %cst = arith.constant dense<0.000000e+00> : vector<128x32xf32>
    %17 = tpu.matmul %7, %16, %cst {dimension_numbers = #tpu.dot_dimension_numbers<[1], [0], [0], [1], [0, 0, 1, 1], [], []>} : vector<128x32xbf16>, vector<32x32xbf16>, vector<128x32xf32> -> vector<128x32xf32>
    %c1 = arith.constant 1 : index
    %c0_11 = arith.constant 0 : index
    %c0_12 = arith.constant 0 : index
    %18 = vector.load %arg4[%c1, %c0_11, %c0_12] : memref<9x32x32xbf16, #tpu.memory_space<vmem>>, vector<1x32x32xbf16>
    %19 = vector.shape_cast %18 : vector<1x32x32xbf16> to vector<32x32xbf16>
    %cst_13 = arith.constant dense<0.000000e+00> : vector<128x32xf32>
    %20 = tpu.matmul %9, %19, %cst_13 {dimension_numbers = #tpu.dot_dimension_numbers<[1], [0], [0], [1], [0, 0, 1, 1], [], []>} : vector<128x32xbf16>, vector<32x32xbf16>, vector<128x32xf32> -> vector<128x32xf32>
    %21 = arith.addf %17, %20 : vector<128x32xf32>
    %22 = vector.shape_cast %21 : vector<128x32xf32> to vector<8x16x32xf32>
    %c0_i32_14 = arith.constant 0 : i32
    %23 = arith.cmpi eq, %arg1, %c0_i32_14 : i32
    %c7_i32 = arith.constant 7 : i32
    %c7_i32_15 = arith.constant 7 : i32
    %24 = arith.select %23, %c7_i32, %c7_i32_15 : i32
    %c2_i32 = arith.constant 2 : i32
    %25 = arith.cmpi eq, %arg1, %c2_i32 : i32
    %c15_i32 = arith.constant 15 : i32
    %c14_i32 = arith.constant 14 : i32
    %26 = arith.select %25, %c15_i32, %c14_i32 : i32
    %27 = vector.broadcast %24 : i32 to vector<1x16x1xi32>
    %28 = arith.cmpi sge, %14, %27 : vector<1x16x1xi32>
    %29 = vector.broadcast %26 : i32 to vector<1x16x1xi32>
    %30 = arith.cmpi sle, %14, %29 : vector<1x16x1xi32>
    %31 = arith.andi %28, %30 : vector<1x16x1xi1>
    %cst_16 = arith.constant 0xFF800000 : f32
    %32 = vector.shape_cast %31 : vector<1x16x1xi1> to vector<1x16x1xi1>
    %33 = vector.broadcast %32 : vector<1x16x1xi1> to vector<8x16x32xi1>
    %34 = vector.broadcast %cst_16 : f32 to vector<8x16x32xf32>
    %35 = arith.select %33, %22, %34 : vector<8x16x32xi1>, vector<8x16x32xf32>
    %c0_17 = arith.constant 0 : index
    %c0_18 = arith.constant 0 : index
    %36 = vector.load %arg13[%c0_17, %c0_18] : memref<8x32xf32, #tpu.memory_space<vmem>>, vector<8x32xf32>
    %cst_19 = arith.constant dense<0xFF800000> : vector<8x32xf32>
    %37 = vector.multi_reduction <maximumf>, %35, %cst_19 [1] : vector<8x16x32xf32> to vector<8x32xf32>
    %38 = arith.maximumf %36, %37 : vector<8x32xf32>
    %c0_20 = arith.constant 0 : index
    %c0_21 = arith.constant 0 : index
    %39 = vector.load %arg13[%c0_20, %c0_21] : memref<8x32xf32, #tpu.memory_space<vmem>>, vector<8x32xf32>
    tpu.vector_store %arg13[%c0_20, %c0_21], %38 {strides = array<i32>} : memref<8x32xf32, #tpu.memory_space<vmem>>, vector<8x32xf32>,
    %c2 = arith.constant 2 : index
    %c0_22 = arith.constant 0 : index
    %c0_23 = arith.constant 0 : index
    %40 = vector.load %arg4[%c2, %c0_22, %c0_23] : memref<9x32x32xbf16, #tpu.memory_space<vmem>>, vector<1x32x32xbf16>
    %41 = vector.shape_cast %40 : vector<1x32x32xbf16> to vector<32x32xbf16>
    %cst_24 = arith.constant dense<0.000000e+00> : vector<128x32xf32>
    %42 = tpu.matmul %7, %41, %cst_24 {dimension_numbers = #tpu.dot_dimension_numbers<[1], [0], [0], [1], [0, 0, 1, 1], [], []>} : vector<128x32xbf16>, vector<32x32xbf16>, vector<128x32xf32> -> vector<128x32xf32>
    %c3 = arith.constant 3 : index
    %c0_25 = arith.constant 0 : index
    %c0_26 = arith.constant 0 : index
    %43 = vector.load %arg4[%c3, %c0_25, %c0_26] : memref<9x32x32xbf16, #tpu.memory_space<vmem>>, vector<1x32x32xbf16>
    %44 = vector.shape_cast %43 : vector<1x32x32xbf16> to vector<32x32xbf16>
    %cst_27 = arith.constant dense<0.000000e+00> : vector<128x32xf32>
    %45 = tpu.matmul %9, %44, %cst_27 {dimension_numbers = #tpu.dot_dimension_numbers<[1], [0], [0], [1], [0, 0, 1, 1], [], []>} : vector<128x32xbf16>, vector<32x32xbf16>, vector<128x32xf32> -> vector<128x32xf32>
    %46 = arith.addf %42, %45 : vector<128x32xf32>
    %c4 = arith.constant 4 : index
    %c0_28 = arith.constant 0 : index
    %c0_29 = arith.constant 0 : index
    %47 = vector.load %arg4[%c4, %c0_28, %c0_29] : memref<9x32x32xbf16, #tpu.memory_space<vmem>>, vector<1x32x32xbf16>
    %48 = vector.shape_cast %47 : vector<1x32x32xbf16> to vector<32x32xbf16>
    %cst_30 = arith.constant dense<0.000000e+00> : vector<128x32xf32>
    %49 = tpu.matmul %11, %48, %cst_30 {dimension_numbers = #tpu.dot_dimension_numbers<[1], [0], [0], [1], [0, 0, 1, 1], [], []>} : vector<128x32xbf16>, vector<32x32xbf16>, vector<128x32xf32> -> vector<128x32xf32>
    %50 = arith.addf %46, %49 : vector<128x32xf32>
    %51 = vector.shape_cast %50 : vector<128x32xf32> to vector<8x16x32xf32>
    %c0_i32_31 = arith.constant 0 : i32
    %52 = arith.cmpi eq, %arg1, %c0_i32_31 : i32
    %c7_i32_32 = arith.constant 7 : i32
    %c6_i32 = arith.constant 6 : i32
    %53 = arith.select %52, %c7_i32_32, %c6_i32 : i32
    %c2_i32_33 = arith.constant 2 : i32
    %54 = arith.cmpi eq, %arg1, %c2_i32_33 : i32
    %c14_i32_34 = arith.constant 14 : i32
    %c13_i32 = arith.constant 13 : i32
    %55 = arith.select %54, %c14_i32_34, %c13_i32 : i32
    %56 = vector.broadcast %53 : i32 to vector<1x16x1xi32>
    %57 = arith.cmpi sge, %14, %56 : vector<1x16x1xi32>
    %58 = vector.broadcast %55 : i32 to vector<1x16x1xi32>
    %59 = arith.cmpi sle, %14, %58 : vector<1x16x1xi32>
    %60 = arith.andi %57, %59 : vector<1x16x1xi1>
    %cst_35 = arith.constant 0xFF800000 : f32
    %61 = vector.shape_cast %60 : vector<1x16x1xi1> to vector<1x16x1xi1>
    %62 = vector.broadcast %61 : vector<1x16x1xi1> to vector<8x16x32xi1>
    %63 = vector.broadcast %cst_35 : f32 to vector<8x16x32xf32>
    %64 = arith.select %62, %51, %63 : vector<8x16x32xi1>, vector<8x16x32xf32>
    %c0_36 = arith.constant 0 : index
    %c0_37 = arith.constant 0 : index
    %65 = vector.load %arg14[%c0_36, %c0_37] : memref<8x32xf32, #tpu.memory_space<vmem>>, vector<8x32xf32>
    %cst_38 = arith.constant dense<0xFF800000> : vector<8x32xf32>
    %66 = vector.multi_reduction <maximumf>, %64, %cst_38 [1] : vector<8x16x32xf32> to vector<8x32xf32>
    %67 = arith.maximumf %65, %66 : vector<8x32xf32>
    %c0_39 = arith.constant 0 : index
    %c0_40 = arith.constant 0 : index
    %68 = vector.load %arg14[%c0_39, %c0_40] : memref<8x32xf32, #tpu.memory_space<vmem>>, vector<8x32xf32>
    tpu.vector_store %arg14[%c0_39, %c0_40], %67 {strides = array<i32>} : memref<8x32xf32, #tpu.memory_space<vmem>>, vector<8x32xf32>,
    %c5 = arith.constant 5 : index
    %c0_41 = arith.constant 0 : index
    %c0_42 = arith.constant 0 : index
    %69 = vector.load %arg4[%c5, %c0_41, %c0_42] : memref<9x32x32xbf16, #tpu.memory_space<vmem>>, vector<1x32x32xbf16>
    %70 = vector.shape_cast %69 : vector<1x32x32xbf16> to vector<32x32xbf16>
    %cst_43 = arith.constant dense<0.000000e+00> : vector<128x32xf32>
    %71 = tpu.matmul %7, %70, %cst_43 {dimension_numbers = #tpu.dot_dimension_numbers<[1], [0], [0], [1], [0, 0, 1, 1], [], []>} : vector<128x32xbf16>, vector<32x32xbf16>, vector<128x32xf32> -> vector<128x32xf32>
    %c6 = arith.constant 6 : index
    %c0_44 = arith.constant 0 : index
    %c0_45 = arith.constant 0 : index
    %72 = vector.load %arg4[%c6, %c0_44, %c0_45] : memref<9x32x32xbf16, #tpu.memory_space<vmem>>, vector<1x32x32xbf16>
    %73 = vector.shape_cast %72 : vector<1x32x32xbf16> to vector<32x32xbf16>
    %cst_46 = arith.constant dense<0.000000e+00> : vector<128x32xf32>
    %74 = tpu.matmul %9, %73, %cst_46 {dimension_numbers = #tpu.dot_dimension_numbers<[1], [0], [0], [1], [0, 0, 1, 1], [], []>} : vector<128x32xbf16>, vector<32x32xbf16>, vector<128x32xf32> -> vector<128x32xf32>
    %75 = arith.addf %71, %74 : vector<128x32xf32>
    %c7 = arith.constant 7 : index
    %c0_47 = arith.constant 0 : index
    %c0_48 = arith.constant 0 : index
    %76 = vector.load %arg4[%c7, %c0_47, %c0_48] : memref<9x32x32xbf16, #tpu.memory_space<vmem>>, vector<1x32x32xbf16>
    %77 = vector.shape_cast %76 : vector<1x32x32xbf16> to vector<32x32xbf16>
    %cst_49 = arith.constant dense<0.000000e+00> : vector<128x32xf32>
    %78 = tpu.matmul %11, %77, %cst_49 {dimension_numbers = #tpu.dot_dimension_numbers<[1], [0], [0], [1], [0, 0, 1, 1], [], []>} : vector<128x32xbf16>, vector<32x32xbf16>, vector<128x32xf32> -> vector<128x32xf32>
    %79 = arith.addf %75, %78 : vector<128x32xf32>
    %c8_50 = arith.constant 8 : index
    %c0_51 = arith.constant 0 : index
    %c0_52 = arith.constant 0 : index
    %80 = vector.load %arg4[%c8_50, %c0_51, %c0_52] : memref<9x32x32xbf16, #tpu.memory_space<vmem>>, vector<1x32x32xbf16>
    %81 = vector.shape_cast %80 : vector<1x32x32xbf16> to vector<32x32xbf16>
    %cst_53 = arith.constant dense<0.000000e+00> : vector<128x32xf32>
    %82 = tpu.matmul %13, %81, %cst_53 {dimension_numbers = #tpu.dot_dimension_numbers<[1], [0], [0], [1], [0, 0, 1, 1], [], []>} : vector<128x32xbf16>, vector<32x32xbf16>, vector<128x32xf32> -> vector<128x32xf32>
    %83 = arith.addf %79, %82 : vector<128x32xf32>
    %84 = vector.shape_cast %83 : vector<128x32xf32> to vector<8x16x32xf32>
    %c0_i32_54 = arith.constant 0 : i32
    %85 = arith.cmpi eq, %arg1, %c0_i32_54 : i32
    %c7_i32_55 = arith.constant 7 : i32
    %c5_i32 = arith.constant 5 : i32
    %86 = arith.select %85, %c7_i32_55, %c5_i32 : i32
    %c2_i32_56 = arith.constant 2 : i32
    %87 = arith.cmpi eq, %arg1, %c2_i32_56 : i32
    %c13_i32_57 = arith.constant 13 : i32
    %c12_i32 = arith.constant 12 : i32
    %88 = arith.select %87, %c13_i32_57, %c12_i32 : i32
    %89 = vector.broadcast %86 : i32 to vector<1x16x1xi32>
    %90 = arith.cmpi sge, %14, %89 : vector<1x16x1xi32>
    %91 = vector.broadcast %88 : i32 to vector<1x16x1xi32>
    %92 = arith.cmpi sle, %14, %91 : vector<1x16x1xi32>
    %93 = arith.andi %90, %92 : vector<1x16x1xi1>
    %cst_58 = arith.constant 0xFF800000 : f32
    %94 = vector.shape_cast %93 : vector<1x16x1xi1> to vector<1x16x1xi1>
    %95 = vector.broadcast %94 : vector<1x16x1xi1> to vector<8x16x32xi1>
    %96 = vector.broadcast %cst_58 : f32 to vector<8x16x32xf32>
    %97 = arith.select %95, %84, %96 : vector<8x16x32xi1>, vector<8x16x32xf32>
    %c0_59 = arith.constant 0 : index
    %c0_60 = arith.constant 0 : index
    %98 = vector.load %arg15[%c0_59, %c0_60] : memref<8x32xf32, #tpu.memory_space<vmem>>, vector<8x32xf32>
    %cst_61 = arith.constant dense<0xFF800000> : vector<8x32xf32>
    %99 = vector.multi_reduction <maximumf>, %97, %cst_61 [1] : vector<8x16x32xf32> to vector<8x32xf32>
    %100 = arith.maximumf %98, %99 : vector<8x32xf32>
    %c0_62 = arith.constant 0 : index
    %c0_63 = arith.constant 0 : index
    %101 = vector.load %arg15[%c0_62, %c0_63] : memref<8x32xf32, #tpu.memory_space<vmem>>, vector<8x32xf32>
    tpu.vector_store %arg15[%c0_62, %c0_63], %100 {strides = array<i32>} : memref<8x32xf32, #tpu.memory_space<vmem>>, vector<8x32xf32>,
    %c0_64 = arith.constant 0 : index
    %c13 = arith.constant 13 : index
    %c0_65 = arith.constant 0 : index
    %102 = vector.load %arg12[%c0_64, %c13, %c0_65] : memref<8x24x32xbf16, #tpu.memory_space<vmem>>, vector<8x3x32xbf16>
    %c0_66 = arith.constant 0 : index
    %c5_67 = arith.constant 5 : index
    %c0_68 = arith.constant 0 : index
    %103 = vector.load %arg12[%c0_66, %c5_67, %c0_68] : memref<8x24x32xbf16, #tpu.memory_space<vmem>>, vector<8x3x32xbf16>
    tpu.vector_store %arg12[%c0_66, %c5_67, %c0_68], %102 {strides = array<i32>} : memref<8x24x32xbf16, #tpu.memory_space<vmem>>, vector<8x3x32xbf16>,
    %c2_i32_69 = arith.constant 2 : i32
    %104 = arith.cmpi eq, %arg1, %c2_i32_69 : i32
    %105 = arith.extui %104 : i1 to i32
    %c0_i32_70 = arith.constant 0 : i32
    %106 = arith.cmpi ne, %105, %c0_i32_70 : i32
    scf.if %106 {
      %c0_71 = arith.constant 0 : index
      %c0_72 = arith.constant 0 : index
      %107 = vector.load %arg5[%c0_71, %c0_72] : memref<3x32xf32, #tpu.memory_space<vmem>>, vector<3x32xf32>
      %c0_73 = arith.constant 0 : index
      %c0_74 = arith.constant 0 : index
      %108 = vector.load %arg13[%c0_73, %c0_74] : memref<8x32xf32, #tpu.memory_space<vmem>>, vector<8x32xf32>
      %109 = vector.extract_strided_slice %107 {offsets = [0, 0], sizes = [1, 32], strides = [1, 1]} : vector<3x32xf32> to vector<1x32xf32>
      %110 = vector.broadcast %109 : vector<1x32xf32> to vector<8x32xf32>
      %111 = arith.addf %108, %110 : vector<8x32xf32>
      %cst_75 = arith.constant 0.000000e+00 : f32
      %112 = vector.broadcast %cst_75 : f32 to vector<8x32xf32>
      %113 = arith.maximumf %111, %112 : vector<8x32xf32>
      %c0_76 = arith.constant 0 : index
      %c0_77 = arith.constant 0 : index
      %114 = vector.load %arg14[%c0_76, %c0_77] : memref<8x32xf32, #tpu.memory_space<vmem>>, vector<8x32xf32>
      %115 = vector.extract_strided_slice %107 {offsets = [1, 0], sizes = [1, 32], strides = [1, 1]} : vector<3x32xf32> to vector<1x32xf32>
      %116 = vector.broadcast %115 : vector<1x32xf32> to vector<8x32xf32>
      %117 = arith.addf %114, %116 : vector<8x32xf32>
      %cst_78 = arith.constant 0.000000e+00 : f32
      %118 = vector.broadcast %cst_78 : f32 to vector<8x32xf32>
      %119 = arith.maximumf %117, %118 : vector<8x32xf32>
      %c0_79 = arith.constant 0 : index
      %c0_80 = arith.constant 0 : index
      %120 = vector.load %arg15[%c0_79, %c0_80] : memref<8x32xf32, #tpu.memory_space<vmem>>, vector<8x32xf32>
      %121 = vector.extract_strided_slice %107 {offsets = [2, 0], sizes = [1, 32], strides = [1, 1]} : vector<3x32xf32> to vector<1x32xf32>
      %122 = vector.broadcast %121 : vector<1x32xf32> to vector<8x32xf32>
      %123 = arith.addf %120, %122 : vector<8x32xf32>
      %cst_81 = arith.constant 0.000000e+00 : f32
      %124 = vector.broadcast %cst_81 : f32 to vector<8x32xf32>
      %125 = arith.maximumf %123, %124 : vector<8x32xf32>
      %c0_82 = arith.constant 0 : index
      %c0_83 = arith.constant 0 : index
      %c0_84 = arith.constant 0 : index
      %126 = vector.load %arg6[%c0_82, %c0_83, %c0_84] : memref<3x32x128xbf16, #tpu.memory_space<vmem>>, vector<1x32x128xbf16>
      %127 = vector.shape_cast %126 : vector<1x32x128xbf16> to vector<32x128xbf16>
      %cst_85 = arith.constant dense<0.000000e+00> : vector<8x128xf32>
      %128 = tpu.matmul %113, %127, %cst_85 {dimension_numbers = #tpu.dot_dimension_numbers<[1], [0], [0], [1], [0, 0, 1, 1], [], []>} : vector<8x32xf32>, vector<32x128xbf16>, vector<8x128xf32> -> vector<8x128xf32>
      %c1_86 = arith.constant 1 : index
      %c0_87 = arith.constant 0 : index
      %c0_88 = arith.constant 0 : index
      %129 = vector.load %arg6[%c1_86, %c0_87, %c0_88] : memref<3x32x128xbf16, #tpu.memory_space<vmem>>, vector<1x32x128xbf16>
      %130 = vector.shape_cast %129 : vector<1x32x128xbf16> to vector<32x128xbf16>
      %cst_89 = arith.constant dense<0.000000e+00> : vector<8x128xf32>
      %131 = tpu.matmul %119, %130, %cst_89 {dimension_numbers = #tpu.dot_dimension_numbers<[1], [0], [0], [1], [0, 0, 1, 1], [], []>} : vector<8x32xf32>, vector<32x128xbf16>, vector<8x128xf32> -> vector<8x128xf32>
      %132 = arith.addf %128, %131 : vector<8x128xf32>
      %c2_90 = arith.constant 2 : index
      %c0_91 = arith.constant 0 : index
      %c0_92 = arith.constant 0 : index
      %133 = vector.load %arg6[%c2_90, %c0_91, %c0_92] : memref<3x32x128xbf16, #tpu.memory_space<vmem>>, vector<1x32x128xbf16>
      %134 = vector.shape_cast %133 : vector<1x32x128xbf16> to vector<32x128xbf16>
      %cst_93 = arith.constant dense<0.000000e+00> : vector<8x128xf32>
      %135 = tpu.matmul %125, %134, %cst_93 {dimension_numbers = #tpu.dot_dimension_numbers<[1], [0], [0], [1], [0, 0, 1, 1], [], []>} : vector<8x32xf32>, vector<32x128xbf16>, vector<8x128xf32> -> vector<8x128xf32>
      %136 = arith.addf %132, %135 : vector<8x128xf32>
      %c0_94 = arith.constant 0 : index
      %c0_95 = arith.constant 0 : index
      %137 = vector.load %arg7[%c0_94, %c0_95] : memref<1x128xf32, #tpu.memory_space<vmem>>, vector<1x128xf32>
      %138 = vector.broadcast %137 : vector<1x128xf32> to vector<8x128xf32>
      %139 = arith.addf %136, %138 : vector<8x128xf32>
      %c0_96 = arith.constant 0 : index
      %c0_97 = arith.constant 0 : index
      %140 = vector.load %arg3[%c0_96, %c0_97] : memref<8x32xf32, #tpu.memory_space<vmem>>, vector<8x32xf32>
      %c0_98 = arith.constant 0 : index
      %c0_99 = arith.constant 0 : index
      %141 = vector.load %arg8[%c0_98, %c0_99] : memref<32x128xf32, #tpu.memory_space<vmem>>, vector<32x128xf32>
      %cst_100 = arith.constant dense<0.000000e+00> : vector<8x128xf32>
      %142 = tpu.matmul %140, %141, %cst_100 {dimension_numbers = #tpu.dot_dimension_numbers<[1], [0], [0], [1], [0, 0, 1, 1], [], []>} : vector<8x32xf32>, vector<32x128xf32>, vector<8x128xf32> -> vector<8x128xf32>
      %c0_101 = arith.constant 0 : index
      %c0_102 = arith.constant 0 : index
      %143 = vector.load %arg9[%c0_101, %c0_102] : memref<128x128xf32, #tpu.memory_space<vmem>>, vector<128x128xf32>
      %cst_103 = arith.constant dense<0.000000e+00> : vector<8x128xf32>
      %144 = tpu.matmul %139, %143, %cst_103 {dimension_numbers = #tpu.dot_dimension_numbers<[1], [0], [0], [1], [0, 0, 1, 1], [], []>} : vector<8x128xf32>, vector<128x128xf32>, vector<8x128xf32> -> vector<8x128xf32>
      %145 = arith.addf %142, %144 : vector<8x128xf32>
      %c0_104 = arith.constant 0 : index
      %c0_105 = arith.constant 0 : index
      %146 = vector.load %arg10[%c0_104, %c0_105] : memref<1x128xf32, #tpu.memory_space<vmem>>, vector<1x128xf32>
      %147 = vector.broadcast %146 : vector<1x128xf32> to vector<8x128xf32>
      %148 = arith.addf %145, %147 : vector<8x128xf32>
      %c0_106 = arith.constant 0 : index
      %c0_107 = arith.constant 0 : index
      %149 = vector.load %arg11[%c0_106, %c0_107] : memref<8x128xf32, #tpu.memory_space<vmem>>, vector<8x128xf32>
      tpu.vector_store %arg11[%c0_106, %c0_107], %148 {strides = array<i32>} : memref<8x128xf32, #tpu.memory_space<vmem>>, vector<8x128xf32>,
    } else {
    }
    return
  }
  func.func @transform_0(%arg0: i32, %arg1: i32) -> (i32, i32, i32) {
    %c0_i32 = arith.constant 0 : i32
    %c0_i32_0 = arith.constant 0 : i32
    return %arg0, %arg1, %c0_i32 : i32, i32, i32
  }
  func.func @transform_1(%arg0: i32, %arg1: i32) -> (i32, i32) {
    %c0_i32 = arith.constant 0 : i32
    %c0_i32_0 = arith.constant 0 : i32
    return %arg0, %c0_i32 : i32, i32
  }
  func.func @transform_2(%arg0: i32, %arg1: i32) -> (i32, i32, i32) {
    %c0_i32 = arith.constant 0 : i32
    %c0_i32_0 = arith.constant 0 : i32
    %c0_i32_1 = arith.constant 0 : i32
    %c0_i32_2 = arith.constant 0 : i32
    return %c0_i32, %c0_i32_0, %c0_i32_1 : i32, i32, i32
  }
  func.func @transform_3(%arg0: i32, %arg1: i32) -> (i32, i32) {
    %c0_i32 = arith.constant 0 : i32
    %c0_i32_0 = arith.constant 0 : i32
    %c0_i32_1 = arith.constant 0 : i32
    return %c0_i32, %c0_i32_0 : i32, i32
  }
  func.func @transform_4(%arg0: i32, %arg1: i32) -> (i32, i32, i32) {
    %c0_i32 = arith.constant 0 : i32
    %c0_i32_0 = arith.constant 0 : i32
    %c0_i32_1 = arith.constant 0 : i32
    %c0_i32_2 = arith.constant 0 : i32
    return %c0_i32, %c0_i32_0, %c0_i32_1 : i32, i32, i32
  }
  func.func @transform_5(%arg0: i32, %arg1: i32) -> (i32, i32) {
    %c0_i32 = arith.constant 0 : i32
    %c0_i32_0 = arith.constant 0 : i32
    %c0_i32_1 = arith.constant 0 : i32
    return %c0_i32, %c0_i32_0 : i32, i32
  }
  func.func @transform_6(%arg0: i32, %arg1: i32) -> (i32, i32) {
    %c0_i32 = arith.constant 0 : i32
    %c0_i32_0 = arith.constant 0 : i32
    %c0_i32_1 = arith.constant 0 : i32
    return %c0_i32, %c0_i32_0 : i32, i32
  }
  func.func @transform_7(%arg0: i32, %arg1: i32) -> (i32, i32) {
    %c0_i32 = arith.constant 0 : i32
    %c0_i32_0 = arith.constant 0 : i32
    %c0_i32_1 = arith.constant 0 : i32
    return %c0_i32, %c0_i32_0 : i32, i32
  }
  func.func @transform_8(%arg0: i32, %arg1: i32) -> (i32, i32) {
    %c0_i32 = arith.constant 0 : i32
    %c0_i32_0 = arith.constant 0 : i32
    %c0_i32_1 = arith.constant 0 : i32
    return %c0_i32, %c0_i32_0 : i32, i32
  }
  func.func @transform_9(%arg0: i32, %arg1: i32) -> (i32, i32) {
    %c0_i32 = arith.constant 0 : i32
    %c0_i32_0 = arith.constant 0 : i32
    return %arg0, %c0_i32 : i32, i32
  }
}

</mosaic_0001>

<llo_original>
// kernel: tpu_custom_call.1
$region0: #{tpu_custom_call.1}
  #allocation0 [shape = 'u32[]', space=smem, size = 0x4, offset = 0x4, fixed_abs, tag = 'smem constant byte address 0x4 - core index']
  #allocation1 [shape = 'u32[144,128]{1,0:T(1,128)}', space=vmem, size = 0x12000, scoped, tag = 'internal scratch']
  #allocation2 [shape = 'bf16[8,24,32]{2,1,0:T(8,128)(2,1)}', space=vmem, size = 0xc000, scoped, tag = 'scratch operand']
  #allocation3 [shape = 'f32[8,32]{1,0:T(8,128)}', space=vmem, size = 0x1000, scoped, tag = 'scratch operand']
  #allocation4 [shape = 'f32[8,32]{1,0:T(8,128)}', space=vmem, size = 0x1000, scoped, tag = 'scratch operand']
  #allocation5 [shape = 'f32[8,32]{1,0:T(8,128)}', space=vmem, size = 0x1000, scoped, tag = 'scratch operand']
  %s0 = inlined_call_operand.hbm [shape: bf16[16,24,32], index: 0, kind: input, shape index: {}]
  %s1 = inlined_call_operand.hbm [shape: f32[16,32], index: 1, kind: input, shape index: {}]
  %s2 = inlined_call_operand.hbm [shape: bf16[9,32,32], index: 2, kind: input, shape index: {}]
  %s3 = inlined_call_operand.vmem [shape: f32[3,32], index: 3, kind: input, shape index: {}]
  %s4 = inlined_call_operand.hbm [shape: bf16[3,32,128], index: 4, kind: input, shape index: {}]
  %s5 = inlined_call_operand.vmem [shape: f32[1,128], index: 5, kind: input, shape index: {}]
  %s6 = inlined_call_operand.hbm [shape: f32[32,128], index: 6, kind: input, shape index: {}]
  %s7 = inlined_call_operand.hbm [shape: f32[128,128], index: 7, kind: input, shape index: {}]
  %s8 = inlined_call_operand.vmem [shape: f32[1,128], index: 8, kind: input, shape index: {}]
  %s9 = inlined_call_operand.hbm [shape: f32[16,128], index: 9, kind: output, shape index: {}]
  %s10 = sld [smem:[#allocation0]]
  $region101: #{tpu_custom_call.1} parent=0
    _
  %s12 = ssub.s32 1, %s10
  %s13 = scalar_select 0, %s12, %s10
  $region1: #{tpu_custom_call.1} parent=0
    #allocation6 [shape = 'u8[32768]{0}', space=vmem, size = 0x8000, scoped, tag = 'input window, operand 0']
    #allocation7 [shape = 's32[2]{0}', space=sflag, size = 0x8, scoped, tag = 'scoped memory for tpu_custom_call.1']
    #allocation8 [shape = 's32[2]{0}', space=sflag, size = 0x8, scoped, tag = 'scoped memory for tpu_custom_call.1']
    #allocation9 [shape = 'u8[8192]{0}', space=vmem, size = 0x2000, scoped, tag = 'input window, operand 1']
    #allocation10 [shape = 's32[2]{0}', space=sflag, size = 0x8, scoped, tag = 'scoped memory for tpu_custom_call.1']
    #allocation11 [shape = 'u8[73728]{0}', space=vmem, size = 0x12000, scoped, tag = 'input window, operand 2, single buffered']
    #allocation12 [shape = 'u8[24576]{0}', space=vmem, size = 0x6000, scoped, tag = 'input window, operand 4, single buffered']
    #allocation13 [shape = 's32[1]{0}', space=sflag, size = 0x4, scoped, tag = 'scoped memory for tpu_custom_call.1']
    #allocation14 [shape = 'u8[16384]{0}', space=vmem, size = 0x4000, scoped, tag = 'input window, operand 6, single buffered']
    #allocation15 [shape = 'u8[65536]{0}', space=vmem, size = 0x10000, scoped, tag = 'input window, operand 7, single buffered']
    #allocation16 [shape = 's32[1]{0}', space=sflag, size = 0x4, scoped, tag = 'scoped memory for tpu_custom_call.1']
    #allocation17 [shape = 'u8[8192]{0}', space=vmem, size = 0x2000, scoped, tag = 'output window, operand 0']
    %14 = vsyncpa [#allocation7], 0
    %s15 = scalar_lea.sflag [#allocation7], 1
    %16 = vsyncpa %s15, 0
    %17 = vsyncpa [#allocation10], 0
    %s18 = scalar_lea.sflag [#allocation10], 1
    %19 = vsyncpa %s18, 0
    %20 = vsyncpa [#allocation13], 0
    %21 = vsyncpa [#allocation16], 0
    %22 = vsyncpa [#allocation8], 0
    %s23 = scalar_lea.sflag [#allocation8], 1
    %24 = vsyncpa %s23, 0
    loop: start=0, step=1, limit=8
    $region2: #{tpu_custom_call.1} parent=1 // loop_pre_header
      _
    $region3: #{tpu_custom_call.1} parent=1 // loop_header
      %s26 = sphi 0, %s30
      %p27 = scmp.ge.s32.totalorder %s26, 8
      %s33 = sphi 0, %s45
      %s34 = sphi 0, %s41
      %s35 = sphi 0, %s33
      %s36 = sphi 0, %s34
      %s37 = sphi 0, %s35
      %s38 = sphi 0, %s36
      %s50 = sphi 0, %s52
      %s53 = sphi 0, %s50
      %s54 = sphi 0, %s53
      %s70 = sphi 0, %s54
      %s76 = sphi 0, %s78
      %s79 = sphi 0, %s76
      %s80 = sphi 0, %s79
      %s96 = sphi 0, %s80
      %s100 = sphi 0, %s100
      %s102 = sphi 0, %s100
      %s103 = sphi 0, %s102
      %s117 = sphi 0, %s103
      %s121 = sphi 0, %s121
      %s123 = sphi 0, %s121
      %s124 = sphi 0, %s123
      %s138 = sphi 0, %s124
      %s142 = sphi 0, %s142
      %s144 = sphi 0, %s142
      %s145 = sphi 0, %s144
      %s159 = sphi 0, %s145
      %s163 = sphi 0, %s163
      %s165 = sphi 0, %s163
      %s166 = sphi 0, %s165
      %s180 = sphi 0, %s166
      %s184 = sphi 0, %s184
      %s186 = sphi 0, %s184
      %s187 = sphi 0, %s186
      %s201 = sphi 0, %s187
      %s205 = sphi 0, %s205
      %s207 = sphi 0, %s205
      %s208 = sphi 0, %s207
      %s222 = sphi 0, %s208
      %s226 = sphi 0, %s226
      %s228 = sphi 0, %s226
      %s229 = sphi 0, %s228
      %s243 = sphi 0, %s229
      %s249 = sphi 0, %s251
      %s252 = sphi 0, %s249
      %s253 = sphi 0, %s252
      %s269 = sphi 0, %s253
    $region4: #{tpu_custom_call.1} parent=1 // loop_header_branch
      %29 = sbr.rel (%p27) target = $region8
    $region5: #{tpu_custom_call.1} parent=1 // loop_body
      %s31 = ssub.s32 %s26, 1
      %s32 = ssub.s32 %s26, 2
      %s39 = sadd.s32 1, %s34
      %p40 = scmp.ge.s32.totalorder %s39, 3
      %s41 = scalar_select %p40, 0, %s39
      %s42 = sadd.s32 1, %s33
      %s43 = scalar_select %p40, %s42, %s33
      %p44 = scmp.ge.s32.totalorder %s43, 2
      %s45 = scalar_select %p44, 0, %s43
      %s46 = ssub.s32 %s33, %s45
      %s47 = ssub.s32 %s34, %s41
      %s48 = sor.u32 %s46, %s47
      %p49 = scmp.eq.s32.totalorder %s48, 0
      %s51 = sadd.s32 %s50, 1
      %s52 = scalar_select %p49, %s50, %s51
      %p55 = pneg %p49
      %p56 = scmp.eq.s32.totalorder %s26, 5
      %p57 = por %p55, %p56
      %p58 = scmp.ne.s32.totalorder %s50, %s53
      %p59 = scmp.eq.s32.totalorder %s26, 0
      %p60 = por %p58, %p59
      %p61 = scmp.ne.s32.totalorder %s50, %s53
      %p62 = scmp.eq.s32.totalorder %s31, 5
      %p63 = por %p61, %p62
      %p64 = scmp.ne.s32.totalorder %s53, %s54
      %p65 = scmp.eq.s32.totalorder %s31, 0
      %p66 = por %p64, %p65
      %p67 = scmp.ne.s32.totalorder %s53, %s54
      %p68 = scmp.eq.s32.totalorder %s32, 5
      %p69 = por %p67, %p68
      %p71 = scmp.ne.s32.totalorder %s54, %s70
      %p72 = scmp.eq.s32.totalorder %s32, 0
      %p73 = por %p71, %p72
      %s74 = ssub.s32 %s33, %s45
      %p75 = scmp.eq.s32.totalorder %s74, 0
      %s77 = sadd.s32 %s76, 1
      %s78 = scalar_select %p75, %s76, %s77
      %p81 = pneg %p75
      %p82 = scmp.eq.s32.totalorder %s26, 5
      %p83 = por %p81, %p82
      %p84 = scmp.ne.s32.totalorder %s76, %s79
      %p85 = scmp.eq.s32.totalorder %s26, 0
      %p86 = por %p84, %p85
      %p87 = scmp.ne.s32.totalorder %s76, %s79
      %p88 = scmp.eq.s32.totalorder %s31, 5
      %p89 = por %p87, %p88
      %p90 = scmp.ne.s32.totalorder %s79, %s80
      %p91 = scmp.eq.s32.totalorder %s31, 0
      %p92 = por %p90, %p91
      %p93 = scmp.ne.s32.totalorder %s79, %s80
      %p94 = scmp.eq.s32.totalorder %s32, 5
      %p95 = por %p93, %p94
      %p97 = scmp.ne.s32.totalorder %s80, %s96
      %p98 = scmp.eq.s32.totalorder %s32, 0
      %p99 = por %p97, %p98
      %s101 = sadd.s32 %s100, 1
      %p104 = scmp.eq.s32.totalorder %s26, 5
      %p105 = scmp.ne.s32.totalorder %s100, %s102
      %p106 = scmp.eq.s32.totalorder %s26, 0
      %p107 = por %p105, %p106
      %p108 = scmp.ne.s32.totalorder %s100, %s102
      %p109 = scmp.eq.s32.totalorder %s31, 5
      %p110 = por %p108, %p109
      %p111 = scmp.ne.s32.totalorder %s102, %s103
      %p112 = scmp.eq.s32.totalorder %s31, 0
      %p113 = por %p111, %p112
      %p114 = scmp.ne.s32.totalorder %s102, %s103
      %p115 = scmp.eq.s32.totalorder %s32, 5
      %p116 = por %p114, %p115
      %p118 = scmp.ne.s32.totalorder %s103, %s117
      %p119 = scmp.eq.s32.totalorder %s32, 0
      %p120 = por %p118, %p119
      %s122 = sadd.s32 %s121, 1
      %p125 = scmp.eq.s32.totalorder %s26, 5
      %p126 = scmp.ne.s32.totalorder %s121, %s123
      %p127 = scmp.eq.s32.totalorder %s26, 0
      %p128 = por %p126, %p127
      %p129 = scmp.ne.s32.totalorder %s121, %s123
      %p130 = scmp.eq.s32.totalorder %s31, 5
      %p131 = por %p129, %p130
      %p132 = scmp.ne.s32.totalorder %s123, %s124
      %p133 = scmp.eq.s32.totalorder %s31, 0
      %p134 = por %p132, %p133
      %p135 = scmp.ne.s32.totalorder %s123, %s124
      %p136 = scmp.eq.s32.totalorder %s32, 5
      %p137 = por %p135, %p136
      %p139 = scmp.ne.s32.totalorder %s124, %s138
      %p140 = scmp.eq.s32.totalorder %s32, 0
      %p141 = por %p139, %p140
      %s143 = sadd.s32 %s142, 1
      %p146 = scmp.eq.s32.totalorder %s26, 5
      %p147 = scmp.ne.s32.totalorder %s142, %s144
      %p148 = scmp.eq.s32.totalorder %s26, 0
      %p149 = por %p147, %p148
      %p150 = scmp.ne.s32.totalorder %s142, %s144
      %p151 = scmp.eq.s32.totalorder %s31, 5
      %p152 = por %p150, %p151
      %p153 = scmp.ne.s32.totalorder %s144, %s145
      %p154 = scmp.eq.s32.totalorder %s31, 0
      %p155 = por %p153, %p154
      %p156 = scmp.ne.s32.totalorder %s144, %s145
      %p157 = scmp.eq.s32.totalorder %s32, 5
      %p158 = por %p156, %p157
      %p160 = scmp.ne.s32.totalorder %s145, %s159
      %p161 = scmp.eq.s32.totalorder %s32, 0
      %p162 = por %p160, %p161
      %s164 = sadd.s32 %s163, 1
      %p167 = scmp.eq.s32.totalorder %s26, 5
      %p168 = scmp.ne.s32.totalorder %s163, %s165
      %p169 = scmp.eq.s32.totalorder %s26, 0
      %p170 = por %p168, %p169
      %p171 = scmp.ne.s32.totalorder %s163, %s165
      %p172 = scmp.eq.s32.totalorder %s31, 5
      %p173 = por %p171, %p172
      %p174 = scmp.ne.s32.totalorder %s165, %s166
      %p175 = scmp.eq.s32.totalorder %s31, 0
      %p176 = por %p174, %p175
      %p177 = scmp.ne.s32.totalorder %s165, %s166
      %p178 = scmp.eq.s32.totalorder %s32, 5
      %p179 = por %p177, %p178
      %p181 = scmp.ne.s32.totalorder %s166, %s180
      %p182 = scmp.eq.s32.totalorder %s32, 0
      %p183 = por %p181, %p182
      %s185 = sadd.s32 %s184, 1
      %p188 = scmp.eq.s32.totalorder %s26, 5
      %p189 = scmp.ne.s32.totalorder %s184, %s186
      %p190 = scmp.eq.s32.totalorder %s26, 0
      %p191 = por %p189, %p190
      %p192 = scmp.ne.s32.totalorder %s184, %s186
      %p193 = scmp.eq.s32.totalorder %s31, 5
      %p194 = por %p192, %p193
      %p195 = scmp.ne.s32.totalorder %s186, %s187
      %p196 = scmp.eq.s32.totalorder %s31, 0
      %p197 = por %p195, %p196
      %p198 = scmp.ne.s32.totalorder %s186, %s187
      %p199 = scmp.eq.s32.totalorder %s32, 5
      %p200 = por %p198, %p199
      %p202 = scmp.ne.s32.totalorder %s187, %s201
      %p203 = scmp.eq.s32.totalorder %s32, 0
      %p204 = por %p202, %p203
      %s206 = sadd.s32 %s205, 1
      %p209 = scmp.eq.s32.totalorder %s26, 5
      %p210 = scmp.ne.s32.totalorder %s205, %s207
      %p211 = scmp.eq.s32.totalorder %s26, 0
      %p212 = por %p210, %p211
      %p213 = scmp.ne.s32.totalorder %s205, %s207
      %p214 = scmp.eq.s32.totalorder %s31, 5
      %p215 = por %p213, %p214
      %p216 = scmp.ne.s32.totalorder %s207, %s208
      %p217 = scmp.eq.s32.totalorder %s31, 0
      %p218 = por %p216, %p217
      %p219 = scmp.ne.s32.totalorder %s207, %s208
      %p220 = scmp.eq.s32.totalorder %s32, 5
      %p221 = por %p219, %p220
      %p223 = scmp.ne.s32.totalorder %s208, %s222
      %p224 = scmp.eq.s32.totalorder %s32, 0
      %p225 = por %p223, %p224
      %s227 = sadd.s32 %s226, 1
      %p230 = scmp.eq.s32.totalorder %s26, 5
      %p231 = scmp.ne.s32.totalorder %s226, %s228
      %p232 = scmp.eq.s32.totalorder %s26, 0
      %p233 = por %p231, %p232
      %p234 = scmp.ne.s32.totalorder %s226, %s228
      %p235 = scmp.eq.s32.totalorder %s31, 5
      %p236 = por %p234, %p235
      %p237 = scmp.ne.s32.totalorder %s228, %s229
      %p238 = scmp.eq.s32.totalorder %s31, 0
      %p239 = por %p237, %p238
      %p240 = scmp.ne.s32.totalorder %s228, %s229
      %p241 = scmp.eq.s32.totalorder %s32, 5
      %p242 = por %p240, %p241
      %p244 = scmp.ne.s32.totalorder %s229, %s243
      %p245 = scmp.eq.s32.totalorder %s32, 0
      %p246 = por %p244, %p245
      %s247 = ssub.s32 %s33, %s45
      %p248 = scmp.eq.s32.totalorder %s247, 0
      %s250 = sadd.s32 %s249, 1
      %s251 = scalar_select %p248, %s249, %s250
      %p254 = pneg %p248
      %p255 = scmp.eq.s32.totalorder %s26, 5
      %p256 = por %p254, %p255
      %p257 = scmp.ne.s32.totalorder %s249, %s252
      %p258 = scmp.eq.s32.totalorder %s26, 0
      %p259 = por %p257, %p258
      %p260 = scmp.ne.s32.totalorder %s249, %s252
      %p261 = scmp.eq.s32.totalorder %s31, 5
      %p262 = por %p260, %p261
      %p263 = scmp.ne.s32.totalorder %s252, %s253
      %p264 = scmp.eq.s32.totalorder %s31, 0
      %p265 = por %p263, %p264
      %p266 = scmp.ne.s32.totalorder %s252, %s253
      %p267 = scmp.eq.s32.totalorder %s32, 5
      %p268 = por %p266, %p267
      %p270 = scmp.ne.s32.totalorder %s253, %s269
      %p271 = scmp.eq.s32.totalorder %s32, 0
      %p272 = por %p270, %p271
      %p273 = scmp.le.s32.totalorder 1, %s26
      %p274 = scmp.lt.s32.totalorder %s26, 7
      %p275 = pnand %p273, %p274
      %p276 = pneg %p275
      // Predicated region
      $region9: #{tpu_custom_call.1} parent=5 // pred_check
        _
      $region10: #{tpu_custom_call.1} parent=5 // pred_check_branch
        %278 = sbr.rel (%p275) target = $region12
      $region11: #{tpu_custom_call.1} parent=5 // pred_region
        %s279 = ssub.s32 %s26, 1
        // Predicated region
        $region13: #{tpu_custom_call.1} parent=11 // pred_check
          %p280 = pneg %p113
        $region14: #{tpu_custom_call.1} parent=11 // pred_check_branch
          %282 = sbr.rel (%p280) target = $region16
        $region15: #{tpu_custom_call.1} parent=11 // pred_region
          %s284 = ssub.s32 2304, 2304
          %285 = vsyncadd [#allocation10], %s284
          %s286 = sshll.u32 [#allocation11], 4
          %s287 = int_to_ptr.vmem [resolvable:$true] %s286
          %292 = dma.hbm_to_vmem [thread:$0]  %s2, 2304, %s287, [#allocation10], 64, 64, 4
        $region16: #{tpu_custom_call.1} parent=11 // pred_fallthru
          _
        // Predicated region
        $region17: #{tpu_custom_call.1} parent=11 // pred_check
          %p293 = pneg %p134
        $region18: #{tpu_custom_call.1} parent=11 // pred_check_branch
          %295 = sbr.rel (%p293) target = $region20
        $region19: #{tpu_custom_call.1} parent=11 // pred_region
          _
        $region20: #{tpu_custom_call.1} parent=11 // pred_fallthru
          _
        // Predicated region
        $region21: #{tpu_custom_call.1} parent=11 // pred_check
          %p296 = pneg %p155
        $region22: #{tpu_custom_call.1} parent=11 // pred_check_branch
          %298 = sbr.rel (%p296) target = $region24
        $region23: #{tpu_custom_call.1} parent=11 // pred_region
          %s300 = ssub.s32 768, 768
          %301 = vsyncadd [#allocation13], %s300
          %s302 = sshll.u32 [#allocation12], 4
          %s303 = int_to_ptr.vmem [resolvable:$true] %s302
          %308 = dma.hbm_to_vmem [thread:$0]  %s4, 768, %s303, [#allocation13], 64, 64, 4
        $region24: #{tpu_custom_call.1} parent=11 // pred_fallthru
          _
        // Predicated region
        $region25: #{tpu_custom_call.1} parent=11 // pred_check
          %p309 = pneg %p176
        $region26: #{tpu_custom_call.1} parent=11 // pred_check_branch
          %311 = sbr.rel (%p309) target = $region28
        $region27: #{tpu_custom_call.1} parent=11 // pred_region
          _
        $region28: #{tpu_custom_call.1} parent=11 // pred_fallthru
          _
        // Predicated region
        $region29: #{tpu_custom_call.1} parent=11 // pred_check
          %p312 = pneg %p197
        $region30: #{tpu_custom_call.1} parent=11 // pred_check_branch
          %314 = sbr.rel (%p312) target = $region32
        $region31: #{tpu_custom_call.1} parent=11 // pred_region
          %s316 = ssub.s32 512, 512
          %317 = vsyncadd [#allocation13], %s316
          %s318 = sshll.u32 [#allocation14], 4
          %s319 = int_to_ptr.vmem [resolvable:$true] %s318
          %324 = dma.hbm_to_vmem [thread:$0]  %s6, 512, %s319, [#allocation13], 128, 128, 8
        $region32: #{tpu_custom_call.1} parent=11 // pred_fallthru
          _
        // Predicated region
        $region33: #{tpu_custom_call.1} parent=11 // pred_check
          %p325 = pneg %p218
        $region34: #{tpu_custom_call.1} parent=11 // pred_check_branch
          %327 = sbr.rel (%p325) target = $region36
        $region35: #{tpu_custom_call.1} parent=11 // pred_region
          %s329 = ssub.s32 2048, 2048
          %330 = vsyncadd [#allocation16], %s329
          %s331 = sshll.u32 [#allocation15], 4
          %s332 = int_to_ptr.vmem [resolvable:$true] %s331
          %337 = dma.hbm_to_vmem [thread:$0]  %s7, 2048, %s332, [#allocation16], 128, 128, 8
        $region36: #{tpu_custom_call.1} parent=11 // pred_fallthru
          _
        // Predicated region
        $region37: #{tpu_custom_call.1} parent=11 // pred_check
          %p338 = pneg %p239
        $region38: #{tpu_custom_call.1} parent=11 // pred_check_branch
          %340 = sbr.rel (%p338) target = $region40
        $region39: #{tpu_custom_call.1} parent=11 // pred_region
          _
        $region40: #{tpu_custom_call.1} parent=11 // pred_fallthru
          _
      $region12: #{tpu_custom_call.1} parent=5 // pred_fallthru
        _
      %p341 = scmp.lt.s32.totalorder %s26, 6
      // Predicated region
      $region41: #{tpu_custom_call.1} parent=5 // pred_check
        %p342 = pneg %p341
      $region42: #{tpu_custom_call.1} parent=5 // pred_check_branch
        %344 = sbr.rel (%p342) target = $region44
      $region43: #{tpu_custom_call.1} parent=5 // pred_region
        // Predicated region
        $region45: #{tpu_custom_call.1} parent=43 // pred_check
          %p345 = pneg %p60
        $region46: #{tpu_custom_call.1} parent=43 // pred_check_branch
          %347 = sbr.rel (%p345) target = $region48
        $region47: #{tpu_custom_call.1} parent=43 // pred_region
          %s348 = sand.u32 %s50, 1
          %s349 = scalar_lea.sflag [#allocation7], %s348
          %s350 = sand.u32 %s50, 1
          %s351 = smul.addr %s350, 32
          %s352 = scalar_lea.vmem [#allocation6], %s351
          %s353 = smul.u32 8, %s33
          %s355 = ssub.s32 512, 512
          %356 = vsyncadd %s349, %s355
          %s357 = smul.addr %s353, 3
          %s358 = sadd.s32 %s34, %s357
          %s359 = smul.addr %s358, 64
          %s360 = scalar_lea.hbm %s0, %s359
          %s361 = sshll.u32 %s352, 4
          %s362 = int_to_ptr.vmem [resolvable:$true] %s361
          %367 = dma.hbm_to_vmem [thread:$0]  %s360, 512, %s362, %s349, 192, 64, 4
        $region48: #{tpu_custom_call.1} parent=43 // pred_fallthru
          _
        // Predicated region
        $region49: #{tpu_custom_call.1} parent=43 // pred_check
          %p368 = pneg %p86
        $region50: #{tpu_custom_call.1} parent=43 // pred_check_branch
          %370 = sbr.rel (%p368) target = $region52
        $region51: #{tpu_custom_call.1} parent=43 // pred_region
          %s371 = sand.u32 %s26, 1
          %s372 = scalar_lea.sflag [#allocation10], %s371
          %s373 = sand.u32 %s76, 1
          %s374 = smul.addr %s373, 8
          %s375 = scalar_lea.vmem [#allocation9], %s374
          %s377 = ssub.s32 128, 128
          %378 = vsyncadd %s372, %s377
          %s379 = smul.addr %s33, 128
          %s380 = scalar_lea.hbm %s1, %s379
          %s382 = sshll.u32 %s375, 4
          %s383 = int_to_ptr.vmem [resolvable:$true] %s382
          %385 = dma.hbm_to_vmem [thread:$0]  %s380, 128, %s383, %s372
        $region52: #{tpu_custom_call.1} parent=43 // pred_fallthru
          _
      $region44: #{tpu_custom_call.1} parent=5 // pred_fallthru
        _
      %p386 = scmp.le.s32.totalorder 1, %s26
      %p387 = scmp.lt.s32.totalorder %s26, 7
      %p388 = pnand %p386, %p387
      %p389 = pneg %p388
      // Predicated region
      $region53: #{tpu_custom_call.1} parent=5 // pred_check
        _
      $region54: #{tpu_custom_call.1} parent=5 // pred_check_branch
        %391 = sbr.rel (%p388) target = $region56
      $region55: #{tpu_custom_call.1} parent=5 // pred_region
        %s392 = ssub.s32 %s26, 1
        %s393 = sand.u32 %s53, 1
        %s394 = scalar_lea.sflag [#allocation7], %s393
        %s395 = sand.u32 %s53, 1
        %s396 = smul.addr %s395, 32
        %s397 = scalar_lea.vmem [#allocation6], %s396
        // Predicated region
        $region57: #{tpu_custom_call.1} parent=55 // pred_check
          %p398 = pneg %p66
        $region58: #{tpu_custom_call.1} parent=55 // pred_check_branch
          %400 = sbr.rel (%p398) target = $region60
        $region59: #{tpu_custom_call.1} parent=55 // pred_region
          %401 = dma.done %s394, 512
        $region60: #{tpu_custom_call.1} parent=55 // pred_fallthru
          _
        %s402 = sand.u32 %s31, 1
        %s403 = scalar_lea.sflag [#allocation10], %s402
        %s404 = sand.u32 %s79, 1
        %s405 = smul.addr %s404, 8
        %s406 = scalar_lea.vmem [#allocation9], %s405
        // Predicated region
        $region61: #{tpu_custom_call.1} parent=55 // pred_check
          %p407 = pneg %p92
        $region62: #{tpu_custom_call.1} parent=55 // pred_check_branch
          %409 = sbr.rel (%p407) target = $region64
        $region63: #{tpu_custom_call.1} parent=55 // pred_region
          %410 = dma.done %s403, 128
        $region64: #{tpu_custom_call.1} parent=55 // pred_fallthru
          _
        // Predicated region
        $region65: #{tpu_custom_call.1} parent=55 // pred_check
          %p411 = pneg %p113
        $region66: #{tpu_custom_call.1} parent=55 // pred_check_branch
          %413 = sbr.rel (%p411) target = $region68
        $region67: #{tpu_custom_call.1} parent=55 // pred_region
          %414 = dma.done [#allocation10], 2304
        $region68: #{tpu_custom_call.1} parent=55 // pred_fallthru
          _
        // Predicated region
        $region69: #{tpu_custom_call.1} parent=55 // pred_check
          %p415 = pneg %p155
        $region70: #{tpu_custom_call.1} parent=55 // pred_check_branch
          %417 = sbr.rel (%p415) target = $region72
        $region71: #{tpu_custom_call.1} parent=55 // pred_region
          %418 = dma.done [#allocation13], 768
        $region72: #{tpu_custom_call.1} parent=55 // pred_fallthru
          _
        // Predicated region
        $region73: #{tpu_custom_call.1} parent=55 // pred_check
          %p419 = pneg %p197
        $region74: #{tpu_custom_call.1} parent=55 // pred_check_branch
          %421 = sbr.rel (%p419) target = $region76
        $region75: #{tpu_custom_call.1} parent=55 // pred_region
          %422 = dma.done [#allocation13], 512
        $region76: #{tpu_custom_call.1} parent=55 // pred_fallthru
          _
        // Predicated region
        $region77: #{tpu_custom_call.1} parent=55 // pred_check
          %p423 = pneg %p218
        $region78: #{tpu_custom_call.1} parent=55 // pred_check_branch
          %425 = sbr.rel (%p423) target = $region80
        $region79: #{tpu_custom_call.1} parent=55 // pred_region
          %426 = dma.done [#allocation16], 2048
        $region80: #{tpu_custom_call.1} parent=55 // pred_fallthru
          _
        %s427 = sand.u32 %s53, 1
        %s428 = scalar_lea.sflag [#allocation7], %s427
        %s429 = sand.u32 %s53, 1
        %s430 = smul.addr %s429, 32
        %s431 = scalar_lea.vmem [#allocation6], %s430
        %p432 = pneg %p66
        %p433 = pneg %p63
        %s434 = sand.u32 %s31, 1
        %s435 = scalar_lea.sflag [#allocation10], %s434
        %s436 = sand.u32 %s79, 1
        %s437 = smul.addr %s436, 8
        %s438 = scalar_lea.vmem [#allocation9], %s437
        %p439 = pneg %p92
        %p440 = pneg %p89
        %p441 = pneg %p113
        %p442 = pneg %p110
        %p443 = pneg %p134
        %p444 = pneg %p131
        %p445 = pneg %p155
        %p446 = pneg %p152
        %p447 = pneg %p176
        %p448 = pneg %p173
        %p449 = pneg %p197
        %p450 = pneg %p194
        %p451 = pneg %p218
        %p452 = pneg %p215
        %p453 = pneg %p239
        %p454 = pneg %p236
        %p455 = pneg %p265
        %p456 = pneg %p262
        %s457 = sand.u32 %s252, 1
        %s458 = scalar_lea.sflag [#allocation8], %s457
        %s459 = sand.u32 %s252, 1
        %s460 = smul.addr %s459, 8
        %s461 = scalar_lea.vmem [#allocation17], %s460
        %s462 = smul.u32 8, %s35
        %p464 = scmp.eq.s32.totalorder %s36, 0
        // Predicated region
        $region81: #{tpu_custom_call.1} parent=55 // pred_check
          %p465 = pneg %p464
        $region82: #{tpu_custom_call.1} parent=55 // pred_check_branch
          %467 = sbr.rel (%p465) target = $region84
        $region83: #{tpu_custom_call.1} parent=55 // pred_region
          %vm468 = vcmask 257024
          %469 = vst.msk [vmem:[#allocation2] sm:$0xf] %vm468, 0
          %470 = vst.msk [vmem:[#allocation2 + $0xc] sm:$0xf] %vm468, 0
          %471 = vst.msk [vmem:[#allocation2 + $0x18] sm:$0xf] %vm468, 0
          %472 = vst.msk [vmem:[#allocation2 + $0x24] sm:$0xf] %vm468, 0
          %473 = vst.msk [vmem:[#allocation2 + $0x30] sm:$0xf] %vm468, 0
          %474 = vst.msk [vmem:[#allocation2 + $0x3c] sm:$0xf] %vm468, 0
          %475 = vst.msk [vmem:[#allocation2 + $0x48] sm:$0xf] %vm468, 0
          %476 = vst.msk [vmem:[#allocation2 + $0x54] sm:$0xf] %vm468, 0
          %477 = vst.msk [vmem:[#allocation2 + $0x8] sm:$0xf] %vm468, 0
          %478 = vst.msk [vmem:[#allocation2 + $0x14] sm:$0xf] %vm468, 0
          %479 = vst.msk [vmem:[#allocation2 + $0x20] sm:$0xf] %vm468, 0
          %480 = vst.msk [vmem:[#allocation2 + $0x2c] sm:$0xf] %vm468, 0
          %481 = vst.msk [vmem:[#allocation2 + $0x38] sm:$0xf] %vm468, 0
          %482 = vst.msk [vmem:[#allocation2 + $0x44] sm:$0xf] %vm468, 0
          %483 = vst.msk [vmem:[#allocation2 + $0x50] sm:$0xf] %vm468, 0
          %484 = vst.msk [vmem:[#allocation2 + $0x5c] sm:$0xf] %vm468, 0
          %vm485 = vcmask 261120
          %486 = vst.msk [vmem:[#allocation3] sm:$0xff] %vm485, -inf
          %487 = vst.msk [vmem:[#allocation4] sm:$0xff] %vm485, -inf
          %488 = vst.msk [vmem:[#allocation5] sm:$0xff] %vm485, -inf
        $region84: #{tpu_custom_call.1} parent=55 // pred_fallthru
          _
        %v489 = vld [vmem:[%s397] sm:$0xf]
        %v490 = vld [vmem:[%s397 + $0x4] sm:$0xf]
        %v491 = vld [vmem:[%s397 + $0x8] sm:$0xf]
        %v492 = vld [vmem:[%s397 + $0xc] sm:$0xf]
        %v493 = vld [vmem:[%s397 + $0x10] sm:$0xf]
        %v494 = vld [vmem:[%s397 + $0x14] sm:$0xf]
        %v495 = vld [vmem:[%s397 + $0x18] sm:$0xf]
        %v496 = vld [vmem:[%s397 + $0x1c] sm:$0xf]
        %vm497 = vcmask 257024
        %498 = vst.msk [vmem:[#allocation2 + $0x4] sm:$0xf] %vm497, %v489
        %499 = vst.msk [vmem:[#allocation2 + $0x10] sm:$0xf] %vm497, %v490
        %500 = vst.msk [vmem:[#allocation2 + $0x1c] sm:$0xf] %vm497, %v491
        %501 = vst.msk [vmem:[#allocation2 + $0x28] sm:$0xf] %vm497, %v492
        %502 = vst.msk [vmem:[#allocation2 + $0x34] sm:$0xf] %vm497, %v493
        %503 = vst.msk [vmem:[#allocation2 + $0x40] sm:$0xf] %vm497, %v494
        %504 = vst.msk [vmem:[#allocation2 + $0x4c] sm:$0xf] %vm497, %v495
        %505 = vst.msk [vmem:[#allocation2 + $0x58] sm:$0xf] %vm497, %v496
        %v506 = vld [vmem:[#allocation2] sm:$0xf]
        %v507 = vld [vmem:[#allocation2 + $0x4] sm:$0xf]
        %v508 = vld [vmem:[#allocation2 + $0x8] sm:$0xf]
        %v509 = vld [vmem:[#allocation2 + $0xc] sm:$0xf]
        %v510 = vld [vmem:[#allocation2 + $0x10] sm:$0xf]
        %v511 = vld [vmem:[#allocation2 + $0x14] sm:$0xf]
        %v512 = vld [vmem:[#allocation2 + $0x18] sm:$0xf]
        %v513 = vld [vmem:[#allocation2 + $0x1c] sm:$0xf]
        %v514 = vld [vmem:[#allocation2 + $0x20] sm:$0xf]
        %v515 = vld [vmem:[#allocation2 + $0x24] sm:$0xf]
        %v516 = vld [vmem:[#allocation2 + $0x28] sm:$0xf]
        %v517 = vld [vmem:[#allocation2 + $0x2c] sm:$0xf]
        %v518 = vld [vmem:[#allocation2 + $0x30] sm:$0xf]
        %v519 = vld [vmem:[#allocation2 + $0x34] sm:$0xf]
        %v520 = vld [vmem:[#allocation2 + $0x38] sm:$0xf]
        %v521 = vld [vmem:[#allocation2 + $0x3c] sm:$0xf]
        %v522 = vld [vmem:[#allocation2 + $0x40] sm:$0xf]
        %v523 = vld [vmem:[#allocation2 + $0x44] sm:$0xf]
        %v524 = vld [vmem:[#allocation2 + $0x48] sm:$0xf]
        %v525 = vld [vmem:[#allocation2 + $0x4c] sm:$0xf]
        %v526 = vld [vmem:[#allocation2 + $0x50] sm:$0xf]
        %v527 = vld [vmem:[#allocation2 + $0x54] sm:$0xf]
        %v528 = vld [vmem:[#allocation2 + $0x58] sm:$0xf]
        %v529 = vld [vmem:[#allocation2 + $0x5c] sm:$0xf]
        %vm530 = vsmask.f32 3328
        %vm531 = vsmask.f32 7440
        %vm532 = vmor %vm530, %vm531
        %v534 = vshrl.u32 %v506, 16
        %v536 = vrot.slane %v534, 4
        %v537 = vshll.u32 %v506, 16
        %v539 = vrot.slane %v537, 5
        %v540 = vor.u32 %v536, %v539
        %v541 = vrot.slane %v540, 4
        %v543 = vshll.u32 %v507, 16
        %v545 = vrot.slane %v543, 5
        %v546 = vsel %vm532, %v541, %v545
        %v547 = vshrl.u32 %v507, 16
        %v549 = vrot.slane %v547, 4
        %v550 = vor.u32 %v549, %v545
        %v551 = vrot.slane %v550, 4
        %v553 = vshll.u32 %v508, 16
        %v555 = vrot.slane %v553, 5
        %v556 = vsel %vm532, %v551, %v555
        %v558 = vshrl.u32 %v509, 16
        %v560 = vrot.slane %v558, 4
        %v561 = vshll.u32 %v509, 16
        %v563 = vrot.slane %v561, 5
        %v564 = vor.u32 %v560, %v563
        %v565 = vrot.slane %v564, 4
        %v567 = vshll.u32 %v510, 16
        %v569 = vrot.slane %v567, 5
        %v570 = vsel %vm532, %v565, %v569
        %v571 = vshrl.u32 %v510, 16
        %v573 = vrot.slane %v571, 4
        %v574 = vor.u32 %v573, %v569
        %v575 = vrot.slane %v574, 4
        %v577 = vshll.u32 %v511, 16
        %v579 = vrot.slane %v577, 5
        %v580 = vsel %vm532, %v575, %v579
        %v582 = vshrl.u32 %v512, 16
        %v584 = vrot.slane %v582, 4
        %v585 = vshll.u32 %v512, 16
        %v587 = vrot.slane %v585, 5
        %v588 = vor.u32 %v584, %v587
        %v589 = vrot.slane %v588, 4
        %v591 = vshll.u32 %v513, 16
        %v593 = vrot.slane %v591, 5
        %v594 = vsel %vm532, %v589, %v593
        %v595 = vshrl.u32 %v513, 16
        %v597 = vrot.slane %v595, 4
        %v598 = vor.u32 %v597, %v593
        %v599 = vrot.slane %v598, 4
        %v601 = vshll.u32 %v514, 16
        %v603 = vrot.slane %v601, 5
        %v604 = vsel %vm532, %v599, %v603
        %v606 = vshrl.u32 %v515, 16
        %v608 = vrot.slane %v606, 4
        %v609 = vshll.u32 %v515, 16
        %v611 = vrot.slane %v609, 5
        %v612 = vor.u32 %v608, %v611
        %v613 = vrot.slane %v612, 4
        %v615 = vshll.u32 %v516, 16
        %v617 = vrot.slane %v615, 5
        %v618 = vsel %vm532, %v613, %v617
        %v619 = vshrl.u32 %v516, 16
        %v621 = vrot.slane %v619, 4
        %v622 = vor.u32 %v621, %v617
        %v623 = vrot.slane %v622, 4
        %v625 = vshll.u32 %v517, 16
        %v627 = vrot.slane %v625, 5
        %v628 = vsel %vm532, %v623, %v627
        %v630 = vshrl.u32 %v518, 16
        %v632 = vrot.slane %v630, 4
        %v633 = vshll.u32 %v518, 16
        %v635 = vrot.slane %v633, 5
        %v636 = vor.u32 %v632, %v635
        %v637 = vrot.slane %v636, 4
        %v639 = vshll.u32 %v519, 16
        %v641 = vrot.slane %v639, 5
        %v642 = vsel %vm532, %v637, %v641
        %v643 = vshrl.u32 %v519, 16
        %v645 = vrot.slane %v643, 4
        %v646 = vor.u32 %v645, %v641
        %v647 = vrot.slane %v646, 4
        %v649 = vshll.u32 %v520, 16
        %v651 = vrot.slane %v649, 5
        %v652 = vsel %vm532, %v647, %v651
        %v654 = vshrl.u32 %v521, 16
        %v656 = vrot.slane %v654, 4
        %v657 = vshll.u32 %v521, 16
        %v659 = vrot.slane %v657, 5
        %v660 = vor.u32 %v656, %v659
        %v661 = vrot.slane %v660, 4
        %v663 = vshll.u32 %v522, 16
        %v665 = vrot.slane %v663, 5
        %v666 = vsel %vm532, %v661, %v665
        %v667 = vshrl.u32 %v522, 16
        %v669 = vrot.slane %v667, 4
        %v670 = vor.u32 %v669, %v665
        %v671 = vrot.slane %v670, 4
        %v673 = vshll.u32 %v523, 16
        %v675 = vrot.slane %v673, 5
        %v676 = vsel %vm532, %v671, %v675
        %v678 = vshrl.u32 %v524, 16
        %v680 = vrot.slane %v678, 4
        %v681 = vshll.u32 %v524, 16
        %v683 = vrot.slane %v681, 5
        %v684 = vor.u32 %v680, %v683
        %v685 = vrot.slane %v684, 4
        %v687 = vshll.u32 %v525, 16
        %v689 = vrot.slane %v687, 5
        %v690 = vsel %vm532, %v685, %v689
        %v691 = vshrl.u32 %v525, 16
        %v693 = vrot.slane %v691, 4
        %v694 = vor.u32 %v693, %v689
        %v695 = vrot.slane %v694, 4
        %v697 = vshll.u32 %v526, 16
        %v699 = vrot.slane %v697, 5
        %v700 = vsel %vm532, %v695, %v699
        %v702 = vshrl.u32 %v527, 16
        %v704 = vrot.slane %v702, 4
        %v705 = vshll.u32 %v527, 16
        %v707 = vrot.slane %v705, 5
        %v708 = vor.u32 %v704, %v707
        %v709 = vrot.slane %v708, 4
        %v711 = vshll.u32 %v528, 16
        %v713 = vrot.slane %v711, 5
        %v714 = vsel %vm532, %v709, %v713
        %v715 = vshrl.u32 %v528, 16
        %v717 = vrot.slane %v715, 4
        %v718 = vor.u32 %v717, %v713
        %v719 = vrot.slane %v718, 4
        %v721 = vshll.u32 %v529, 16
        %v723 = vrot.slane %v721, 5
        %v724 = vsel %vm532, %v719, %v723
        %vm749 = vcmask 1042432
        %vm750 = vcmask 1046532
        %vm751 = vmor %vm749, %vm750
        %v752 = vrot.slane %v506, 5
        %v753 = vrot.slane %v752, 4
        %v754 = vrot.slane %v507, 5
        %v755 = vsel %vm751, %v753, %v754
        %v756 = vrot.slane %v754, 4
        %v757 = vrot.slane %v508, 5
        %v758 = vsel %vm751, %v756, %v757
        %v759 = vrot.slane %v509, 5
        %v760 = vrot.slane %v759, 4
        %v761 = vrot.slane %v510, 5
        %v762 = vsel %vm751, %v760, %v761
        %v763 = vrot.slane %v761, 4
        %v764 = vrot.slane %v511, 5
        %v765 = vsel %vm751, %v763, %v764
        %v766 = vrot.slane %v512, 5
        %v767 = vrot.slane %v766, 4
        %v768 = vrot.slane %v513, 5
        %v769 = vsel %vm751, %v767, %v768
        %v770 = vrot.slane %v768, 4
        %v771 = vrot.slane %v514, 5
        %v772 = vsel %vm751, %v770, %v771
        %v773 = vrot.slane %v515, 5
        %v774 = vrot.slane %v773, 4
        %v775 = vrot.slane %v516, 5
        %v776 = vsel %vm751, %v774, %v775
        %v777 = vrot.slane %v775, 4
        %v778 = vrot.slane %v517, 5
        %v779 = vsel %vm751, %v777, %v778
        %v780 = vrot.slane %v518, 5
        %v781 = vrot.slane %v780, 4
        %v782 = vrot.slane %v519, 5
        %v783 = vsel %vm751, %v781, %v782
        %v784 = vrot.slane %v782, 4
        %v785 = vrot.slane %v520, 5
        %v786 = vsel %vm751, %v784, %v785
        %v787 = vrot.slane %v521, 5
        %v788 = vrot.slane %v787, 4
        %v789 = vrot.slane %v522, 5
        %v790 = vsel %vm751, %v788, %v789
        %v791 = vrot.slane %v789, 4
        %v792 = vrot.slane %v523, 5
        %v793 = vsel %vm751, %v791, %v792
        %v794 = vrot.slane %v524, 5
        %v795 = vrot.slane %v794, 4
        %v796 = vrot.slane %v525, 5
        %v797 = vsel %vm751, %v795, %v796
        %v798 = vrot.slane %v796, 4
        %v799 = vrot.slane %v526, 5
        %v800 = vsel %vm751, %v798, %v799
        %v801 = vrot.slane %v527, 5
        %v802 = vrot.slane %v801, 4
        %v803 = vrot.slane %v528, 5
        %v804 = vsel %vm751, %v802, %v803
        %v805 = vrot.slane %v803, 4
        %v806 = vrot.slane %v529, 5
        %v807 = vsel %vm751, %v805, %v806
        %vm808 = vsmask.f32 2304
        %vm809 = vsmask.f32 6416
        %vm810 = vmor %vm808, %vm809
        %v811 = vrot.slane %v534, 5
        %v812 = vrot.slane %v537, 6
        %v813 = vor.u32 %v811, %v812
        %v814 = vrot.slane %v813, 4
        %v815 = vrot.slane %v547, 5
        %v816 = vrot.slane %v543, 6
        %v817 = vor.u32 %v815, %v816
        %v818 = vsel %vm810, %v814, %v817
        %v819 = vrot.slane %v817, 4
        %v820 = vshrl.u32 %v508, 16
        %v822 = vrot.slane %v820, 5
        %v823 = vrot.slane %v553, 6
        %v824 = vor.u32 %v822, %v823
        %v825 = vsel %vm810, %v819, %v824
        %v826 = vrot.slane %v558, 5
        %v827 = vrot.slane %v561, 6
        %v828 = vor.u32 %v826, %v827
        %v829 = vrot.slane %v828, 4
        %v830 = vrot.slane %v571, 5
        %v831 = vrot.slane %v567, 6
        %v832 = vor.u32 %v830, %v831
        %v833 = vsel %vm810, %v829, %v832
        %v834 = vrot.slane %v832, 4
        %v835 = vshrl.u32 %v511, 16
        %v837 = vrot.slane %v835, 5
        %v838 = vrot.slane %v577, 6
        %v839 = vor.u32 %v837, %v838
        %v840 = vsel %vm810, %v834, %v839
        %v841 = vrot.slane %v582, 5
        %v842 = vrot.slane %v585, 6
        %v843 = vor.u32 %v841, %v842
        %v844 = vrot.slane %v843, 4
        %v845 = vrot.slane %v595, 5
        %v846 = vrot.slane %v591, 6
        %v847 = vor.u32 %v845, %v846
        %v848 = vsel %vm810, %v844, %v847
        %v849 = vrot.slane %v847, 4
        %v850 = vshrl.u32 %v514, 16
        %v852 = vrot.slane %v850, 5
        %v853 = vrot.slane %v601, 6
        %v854 = vor.u32 %v852, %v853
        %v855 = vsel %vm810, %v849, %v854
        %v856 = vrot.slane %v606, 5
        %v857 = vrot.slane %v609, 6
        %v858 = vor.u32 %v856, %v857
        %v859 = vrot.slane %v858, 4
        %v860 = vrot.slane %v619, 5
        %v861 = vrot.slane %v615, 6
        %v862 = vor.u32 %v860, %v861
        %v863 = vsel %vm810, %v859, %v862
        %v864 = vrot.slane %v862, 4
        %v865 = vshrl.u32 %v517, 16
        %v867 = vrot.slane %v865, 5
        %v868 = vrot.slane %v625, 6
        %v869 = vor.u32 %v867, %v868
        %v870 = vsel %vm810, %v864, %v869
        %v871 = vrot.slane %v630, 5
        %v872 = vrot.slane %v633, 6
        %v873 = vor.u32 %v871, %v872
        %v874 = vrot.slane %v873, 4
        %v875 = vrot.slane %v643, 5
        %v876 = vrot.slane %v639, 6
        %v877 = vor.u32 %v875, %v876
        %v878 = vsel %vm810, %v874, %v877
        %v879 = vrot.slane %v877, 4
        %v880 = vshrl.u32 %v520, 16
        %v882 = vrot.slane %v880, 5
        %v883 = vrot.slane %v649, 6
        %v884 = vor.u32 %v882, %v883
        %v885 = vsel %vm810, %v879, %v884
        %v886 = vrot.slane %v654, 5
        %v887 = vrot.slane %v657, 6
        %v888 = vor.u32 %v886, %v887
        %v889 = vrot.slane %v888, 4
        %v890 = vrot.slane %v667, 5
        %v891 = vrot.slane %v663, 6
        %v892 = vor.u32 %v890, %v891
        %v893 = vsel %vm810, %v889, %v892
        %v894 = vrot.slane %v892, 4
        %v895 = vshrl.u32 %v523, 16
        %v897 = vrot.slane %v895, 5
        %v898 = vrot.slane %v673, 6
        %v899 = vor.u32 %v897, %v898
        %v900 = vsel %vm810, %v894, %v899
        %v901 = vrot.slane %v678, 5
        %v902 = vrot.slane %v681, 6
        %v903 = vor.u32 %v901, %v902
        %v904 = vrot.slane %v903, 4
        %v905 = vrot.slane %v691, 5
        %v906 = vrot.slane %v687, 6
        %v907 = vor.u32 %v905, %v906
        %v908 = vsel %vm810, %v904, %v907
        %v909 = vrot.slane %v907, 4
        %v910 = vshrl.u32 %v526, 16
        %v912 = vrot.slane %v910, 5
        %v913 = vrot.slane %v697, 6
        %v914 = vor.u32 %v912, %v913
        %v915 = vsel %vm810, %v909, %v914
        %v916 = vrot.slane %v702, 5
        %v917 = vrot.slane %v705, 6
        %v918 = vor.u32 %v916, %v917
        %v919 = vrot.slane %v918, 4
        %v920 = vrot.slane %v715, 5
        %v921 = vrot.slane %v711, 6
        %v922 = vor.u32 %v920, %v921
        %v923 = vsel %vm810, %v919, %v922
        %v924 = vrot.slane %v922, 4
        %v925 = vshrl.u32 %v529, 16
        %v927 = vrot.slane %v925, 5
        %v928 = vrot.slane %v721, 6
        %v929 = vor.u32 %v927, %v928
        %v930 = vsel %vm810, %v924, %v929
        %v931 = vlaneseq
        %v932 = vshrl.u32 %v931, 7
        %v933 = vadd.s32 %v932, 8
        %v934 = vld [vmem:[#allocation11] sm:$0xf]
        %v935 = vld [vmem:[#allocation11 + $0x4] sm:$0xf]
        %v936 = vld [vmem:[#allocation11 + $0x8] sm:$0xf]
        %v937 = vld [vmem:[#allocation11 + $0xc] sm:$0xf]
        %s938 = scalar_lea.vmem [#allocation11], 16
        %v939 = vld [vmem:[%s938] sm:$0xf]
        %v940 = vld [vmem:[%s938 + $0x4] sm:$0xf]
        %v941 = vld [vmem:[%s938 + $0x8] sm:$0xf]
        %v942 = vld [vmem:[%s938 + $0xc] sm:$0xf]
        %v943 = vunpack.c.l.b16 %v546
        %v944 = vunpack.c.l.b16 %v556
        %v945 = vunpack.c.l.b16 %v570
        %v946 = vunpack.c.l.b16 %v580
        %v947 = vunpack.c.l.b16 %v594
        %v948 = vunpack.c.l.b16 %v604
        %v949 = vunpack.c.l.b16 %v618
        %v950 = vunpack.c.l.b16 %v628
        %v951 = vunpack.c.l.b16 %v642
        %v952 = vunpack.c.l.b16 %v652
        %v953 = vunpack.c.l.b16 %v666
        %v954 = vunpack.c.l.b16 %v676
        %v955 = vunpack.c.l.b16 %v690
        %v956 = vunpack.c.l.b16 %v700
        %v957 = vunpack.c.l.b16 %v714
        %v958 = vunpack.c.l.b16 %v724
        %v959 = vpack.c.b16 %v944, %v943
        %v960 = vpack.c.b16 %v946, %v945
        %v961 = vpack.c.b16 %v948, %v947
        %v962 = vpack.c.b16 %v950, %v949
        %v963 = vpack.c.b16 %v952, %v951
        %v964 = vpack.c.b16 %v954, %v953
        %v965 = vpack.c.b16 %v956, %v955
        %v966 = vpack.c.b16 %v958, %v957
        %v971 = vunpack.c.l.b16 %v939
        %v972 = vunpack.c.l.b16 %v940
        %v973 = vunpack.c.l.b16 %v941
        %v974 = vunpack.c.l.b16 %v942
        %v975 = vpack.c.b16 %v972, %v971
        %v976 = vpack.c.b16 %v974, %v973
        %vm979 = vcmask 261120
        %v981 = vsel %vm979, %v959, 0
        %v984 = vsel %vm979, %v960, 0
        %v987 = vsel %vm979, %v961, 0
        %v990 = vsel %vm979, %v962, 0
        %v993 = vsel %vm979, %v963, 0
        %v996 = vsel %vm979, %v964, 0
        %v999 = vsel %vm979, %v965, 0
        %v1002 = vsel %vm979, %v966, 0
        %1004 = vmatprep.subr.bf16.mxu0 0
        %1005 = vmatpush1.bf16.msra.mxu0 0
        %1006 = vmatprep.subr.bf16.mxu0 0
        %1007 = vmatpush1.bf16.msra.mxu0 0
        %1008 = vmatprep.subr.bf16.mxu0 0
        %1009 = vmatpush1.bf16.msra.mxu0 0
        %1010 = vmatprep.subr.bf16.mxu0 0
        %1011 = vmatpush1.bf16.msra.mxu0 0
        %1012 = vmatprep.subr.bf16.mxu0 0
        %1013 = vmatpush1.bf16.msra.mxu0 0
        %1014 = vmatprep.subr.bf16.mxu0 0
        %1015 = vmatpush1.bf16.msra.mxu0 0
        %1016 = vmatprep.subr.bf16.mxu0 0
        %1017 = vmatpush1.bf16.msra.mxu0 %v976
        %1018 = vmatprep.subr.bf16.mxu0 0
        %1019 = vmatpush1.bf16.msra.mxu0 %v975
        %1020 = vmatprep.subr.bf16.mxu0 0
        %1021 = vmatpush2.bf16.msra.mxu0 0
        %1022 = vmatprep.subr.bf16.mxu0 0
        %1023 = vmatpush2.bf16.msra.mxu0 0
        %1024 = vmatprep.subr.bf16.mxu0 0
        %1025 = vmatpush2.bf16.msra.mxu0 0
        %1026 = vmatprep.subr.bf16.mxu0 0
        %1027 = vmatpush2.bf16.msra.mxu0 0
        %1028 = vmatprep.subr.bf16.mxu0 0
        %1029 = vmatpush2.bf16.msra.mxu0 0
        %1030 = vmatprep.subr.bf16.mxu0 0
        %1031 = vmatpush2.bf16.msra.mxu0 0
        %1032 = vmatprep.subr.bf16.mxu0 0
        %1033 = vmatpush2.bf16.msra.mxu0 0
        %1034 = vmatprep.subr.bf16.mxu0 0
        %1035 = vmatpush2.bf16.msra.mxu0 0
        %1036 = vmatprep.mubr.bf16.mxu0 0
        %1037 = vmatmul.mubr.bf16.gmra.mxu0 %v981
        %v1038 = vpop.f32.mrf.mxu0
        %v1039 = vadd.f32 0.0, %v1038
        %v1040 = vpop.f32.mrf.mxu0
        %v1041 = vpop.f32.mrf.mxu0
        %v1042 = vadd.f32 0.0, %v1041
        %v1043 = vpop.f32.mrf.mxu0
        %1044 = vmatprep.mubr.bf16.mxu0 0
        %1045 = vmatmul.mubr.bf16.gmra.mxu0 %v984
        %v1046 = vpop.f32.mrf.mxu0
        %v1047 = vadd.f32 0.0, %v1046
        %v1048 = vpop.f32.mrf.mxu0
        %v1049 = vpop.f32.mrf.mxu0
        %v1050 = vadd.f32 0.0, %v1049
        %v1051 = vpop.f32.mrf.mxu0
        %1052 = vmatprep.mubr.bf16.mxu0 0
        %1053 = vmatmul.mubr.bf16.gmra.mxu0 %v987
        %v1054 = vpop.f32.mrf.mxu0
        %v1055 = vadd.f32 0.0, %v1054
        %v1056 = vpop.f32.mrf.mxu0
        %v1057 = vpop.f32.mrf.mxu0
        %v1058 = vadd.f32 0.0, %v1057
        %v1059 = vpop.f32.mrf.mxu0
        %1060 = vmatprep.mubr.bf16.mxu0 0
        %1061 = vmatmul.mubr.bf16.gmra.mxu0 %v990
        %v1062 = vpop.f32.mrf.mxu0
        %v1063 = vadd.f32 0.0, %v1062
        %v1064 = vpop.f32.mrf.mxu0
        %v1065 = vpop.f32.mrf.mxu0
        %v1066 = vadd.f32 0.0, %v1065
        %v1067 = vpop.f32.mrf.mxu0
        %1068 = vmatprep.mubr.bf16.mxu0 0
        %1069 = vmatmul.mubr.bf16.gmra.mxu0 %v993
        %v1070 = vpop.f32.mrf.mxu0
        %v1071 = vadd.f32 0.0, %v1070
        %v1072 = vpop.f32.mrf.mxu0
        %v1073 = vpop.f32.mrf.mxu0
        %v1074 = vadd.f32 0.0, %v1073
        %v1075 = vpop.f32.mrf.mxu0
        %1076 = vmatprep.mubr.bf16.mxu0 0
        %1077 = vmatmul.mubr.bf16.gmra.mxu0 %v996
        %v1078 = vpop.f32.mrf.mxu0
        %v1079 = vadd.f32 0.0, %v1078
        %v1080 = vpop.f32.mrf.mxu0
        %v1081 = vpop.f32.mrf.mxu0
        %v1082 = vadd.f32 0.0, %v1081
        %v1083 = vpop.f32.mrf.mxu0
        %1084 = vmatprep.mubr.bf16.mxu0 0
        %1085 = vmatmul.mubr.bf16.gmra.mxu0 %v999
        %v1086 = vpop.f32.mrf.mxu0
        %v1087 = vadd.f32 0.0, %v1086
        %v1088 = vpop.f32.mrf.mxu0
        %v1089 = vpop.f32.mrf.mxu0
        %v1090 = vadd.f32 0.0, %v1089
        %v1091 = vpop.f32.mrf.mxu0
        %1092 = vmatprep.mubr.bf16.mxu0 0
        %1093 = vmatmul.mubr.bf16.gmra.mxu0 %v1002
        %v1094 = vpop.f32.mrf.mxu0
        %v1095 = vadd.f32 0.0, %v1094
        %v1096 = vpop.f32.mrf.mxu0
        %v1097 = vpop.f32.mrf.mxu0
        %v1098 = vadd.f32 0.0, %v1097
        %v1099 = vpop.f32.mrf.mxu0
        %1100 = vdwg.mxu0
        %v1101 = vunpack.c.l.b16 %v506
        %v1102 = vunpack.c.l.b16 %v507
        %v1103 = vunpack.c.l.b16 %v509
        %v1104 = vunpack.c.l.b16 %v510
        %v1105 = vunpack.c.l.b16 %v512
        %v1106 = vunpack.c.l.b16 %v513
        %v1107 = vunpack.c.l.b16 %v515
        %v1108 = vunpack.c.l.b16 %v516
        %v1109 = vunpack.c.l.b16 %v518
        %v1110 = vunpack.c.l.b16 %v519
        %v1111 = vunpack.c.l.b16 %v521
        %v1112 = vunpack.c.l.b16 %v522
        %v1113 = vunpack.c.l.b16 %v524
        %v1114 = vunpack.c.l.b16 %v525
        %v1115 = vunpack.c.l.b16 %v527
        %v1116 = vunpack.c.l.b16 %v528
        %v1117 = vpack.c.b16 %v1102, %v1101
        %v1118 = vpack.c.b16 %v1104, %v1103
        %v1119 = vpack.c.b16 %v1106, %v1105
        %v1120 = vpack.c.b16 %v1108, %v1107
        %v1121 = vpack.c.b16 %v1110, %v1109
        %v1122 = vpack.c.b16 %v1112, %v1111
        %v1123 = vpack.c.b16 %v1114, %v1113
        %v1124 = vpack.c.b16 %v1116, %v1115
        %v1129 = vunpack.c.l.b16 %v934
        %v1130 = vunpack.c.l.b16 %v935
        %v1131 = vunpack.c.l.b16 %v936
        %v1132 = vunpack.c.l.b16 %v937
        %v1133 = vpack.c.b16 %v1130, %v1129
        %v1134 = vpack.c.b16 %v1132, %v1131
        %v1138 = vsel %vm979, %v1117, 0
        %v1141 = vsel %vm979, %v1118, 0
        %v1144 = vsel %vm979, %v1119, 0
        %v1147 = vsel %vm979, %v1120, 0
        %v1150 = vsel %vm979, %v1121, 0
        %v1153 = vsel %vm979, %v1122, 0
        %v1156 = vsel %vm979, %v1123, 0
        %v1159 = vsel %vm979, %v1124, 0
        %1161 = vmatprep.subr.bf16.mxu0 0
        %1162 = vmatpush1.bf16.msra.mxu0 0
        %1163 = vmatprep.subr.bf16.mxu0 0
        %1164 = vmatpush1.bf16.msra.mxu0 0
        %1165 = vmatprep.subr.bf16.mxu0 0
        %1166 = vmatpush1.bf16.msra.mxu0 0
        %1167 = vmatprep.subr.bf16.mxu0 0
        %1168 = vmatpush1.bf16.msra.mxu0 0
        %1169 = vmatprep.subr.bf16.mxu0 0
        %1170 = vmatpush1.bf16.msra.mxu0 0
        %1171 = vmatprep.subr.bf16.mxu0 0
        %1172 = vmatpush1.bf16.msra.mxu0 0
        %1173 = vmatprep.subr.bf16.mxu0 0
        %1174 = vmatpush1.bf16.msra.mxu0 %v1134
        %1175 = vmatprep.subr.bf16.mxu0 0
        %1176 = vmatpush1.bf16.msra.mxu0 %v1133
        %1177 = vmatprep.subr.bf16.mxu0 0
        %1178 = vmatpush2.bf16.msra.mxu0 0
        %1179 = vmatprep.subr.bf16.mxu0 0
        %1180 = vmatpush2.bf16.msra.mxu0 0
        %1181 = vmatprep.subr.bf16.mxu0 0
        %1182 = vmatpush2.bf16.msra.mxu0 0
        %1183 = vmatprep.subr.bf16.mxu0 0
        %1184 = vmatpush2.bf16.msra.mxu0 0
        %1185 = vmatprep.subr.bf16.mxu0 0
        %1186 = vmatpush2.bf16.msra.mxu0 0
        %1187 = vmatprep.subr.bf16.mxu0 0
        %1188 = vmatpush2.bf16.msra.mxu0 0
        %1189 = vmatprep.subr.bf16.mxu0 0
        %1190 = vmatpush2.bf16.msra.mxu0 0
        %1191 = vmatprep.subr.bf16.mxu0 0
        %1192 = vmatpush2.bf16.msra.mxu0 0
        %1193 = vmatprep.mubr.bf16.mxu0 0
        %1194 = vmatmul.mubr.bf16.gmra.mxu0 %v1138
        %v1195 = vpop.f32.mrf.mxu0
        %v1196 = vadd.f32 %v1039, %v1195
        %v1197 = vpop.f32.mrf.mxu0
        %v1198 = vpop.f32.mrf.mxu0
        %v1199 = vadd.f32 %v1042, %v1198
        %v1200 = vpop.f32.mrf.mxu0
        %1201 = vmatprep.mubr.bf16.mxu0 0
        %1202 = vmatmul.mubr.bf16.gmra.mxu0 %v1141
        %v1203 = vpop.f32.mrf.mxu0
        %v1204 = vadd.f32 %v1047, %v1203
        %v1205 = vpop.f32.mrf.mxu0
        %v1206 = vpop.f32.mrf.mxu0
        %v1207 = vadd.f32 %v1050, %v1206
        %v1208 = vpop.f32.mrf.mxu0
        %1209 = vmatprep.mubr.bf16.mxu0 0
        %1210 = vmatmul.mubr.bf16.gmra.mxu0 %v1144
        %v1211 = vpop.f32.mrf.mxu0
        %v1212 = vadd.f32 %v1055, %v1211
        %v1213 = vpop.f32.mrf.mxu0
        %v1214 = vpop.f32.mrf.mxu0
        %v1215 = vadd.f32 %v1058, %v1214
        %v1216 = vpop.f32.mrf.mxu0
        %1217 = vmatprep.mubr.bf16.mxu0 0
        %1218 = vmatmul.mubr.bf16.gmra.mxu0 %v1147
        %v1219 = vpop.f32.mrf.mxu0
        %v1220 = vadd.f32 %v1063, %v1219
        %v1221 = vpop.f32.mrf.mxu0
        %v1222 = vpop.f32.mrf.mxu0
        %v1223 = vadd.f32 %v1066, %v1222
        %v1224 = vpop.f32.mrf.mxu0
        %1225 = vmatprep.mubr.bf16.mxu0 0
        %1226 = vmatmul.mubr.bf16.gmra.mxu0 %v1150
        %v1227 = vpop.f32.mrf.mxu0
        %v1228 = vadd.f32 %v1071, %v1227
        %v1229 = vpop.f32.mrf.mxu0
        %v1230 = vpop.f32.mrf.mxu0
        %v1231 = vadd.f32 %v1074, %v1230
        %v1232 = vpop.f32.mrf.mxu0
        %1233 = vmatprep.mubr.bf16.mxu0 0
        %1234 = vmatmul.mubr.bf16.gmra.mxu0 %v1153
        %v1235 = vpop.f32.mrf.mxu0
        %v1236 = vadd.f32 %v1079, %v1235
        %v1237 = vpop.f32.mrf.mxu0
        %v1238 = vpop.f32.mrf.mxu0
        %v1239 = vadd.f32 %v1082, %v1238
        %v1240 = vpop.f32.mrf.mxu0
        %1241 = vmatprep.mubr.bf16.mxu0 0
        %1242 = vmatmul.mubr.bf16.gmra.mxu0 %v1156
        %v1243 = vpop.f32.mrf.mxu0
        %v1244 = vadd.f32 %v1087, %v1243
        %v1245 = vpop.f32.mrf.mxu0
        %v1246 = vpop.f32.mrf.mxu0
        %v1247 = vadd.f32 %v1090, %v1246
        %v1248 = vpop.f32.mrf.mxu0
        %1249 = vmatprep.mubr.bf16.mxu0 0
        %1250 = vmatmul.mubr.bf16.gmra.mxu0 %v1159
        %v1251 = vpop.f32.mrf.mxu0
        %v1252 = vadd.f32 %v1095, %v1251
        %v1253 = vpop.f32.mrf.mxu0
        %v1254 = vpop.f32.mrf.mxu0
        %v1255 = vadd.f32 %v1098, %v1254
        %v1256 = vpop.f32.mrf.mxu0
        %1257 = vdwg.mxu0
        %p1258 = scmp.eq.s32.totalorder %s36, 2
        %s1259 = scalar_select %p1258, 15, 14
        %vm1260 = vcmp.ge.s32.totalorder %v932, 7
        %vm1261 = vcmp.ge.s32.totalorder %v933, 7
        %v1262 = vstv %s1259
        %vm1263 = vcmp.le.s32.totalorder %v932, %v1262
        %vm1264 = vcmp.le.s32.totalorder %v933, %v1262
        %vm1265 = vmand %vm1260, %vm1263
        %vm1266 = vmand %vm1261, %vm1264
        %v1267 = vsel %vm1265, 1, 0
        %v1268 = vsel %vm1266, 1, 0
        %vm1269 = vcmp.eq.s32.totalorder %v1267, 1
        %vm1270 = vcmp.eq.s32.totalorder %v1268, 1
        %v1271 = vsel %vm1269, %v1196, -inf
        %v1272 = vsel %vm1270, %v1199, -inf
        %v1273 = vsel %vm1269, %v1204, -inf
        %v1274 = vsel %vm1270, %v1207, -inf
        %v1275 = vsel %vm1269, %v1212, -inf
        %v1276 = vsel %vm1270, %v1215, -inf
        %v1277 = vsel %vm1269, %v1220, -inf
        %v1278 = vsel %vm1270, %v1223, -inf
        %v1279 = vsel %vm1269, %v1228, -inf
        %v1280 = vsel %vm1270, %v1231, -inf
        %v1281 = vsel %vm1269, %v1236, -inf
        %v1282 = vsel %vm1270, %v1239, -inf
        %v1283 = vsel %vm1269, %v1244, -inf
        %v1284 = vsel %vm1270, %v1247, -inf
        %v1285 = vsel %vm1269, %v1252, -inf
        %v1286 = vsel %vm1270, %v1255, -inf
        %v1287 = vld [vmem:[#allocation3] sm:$0xff]
        %v1288 = vsel %vm979, %v1271, -inf
        %v1289 = vsel %vm979, %v1272, -inf
        %v1290 = vmax.f32 %v1288, %v1289
        %v1291 = vrot.slane %v1290, 4
        %v1292 = vmax.f32 %v1290, %v1291
        %v1293 = vrot.slane %v1292, 2
        %v1294 = vmax.f32 %v1292, %v1293
        %v1295 = vrot.slane %v1294, 1
        %v1296 = vmax.f32 %v1294, %v1295
        %v1297 = vsel %vm979, %v1273, -inf
        %v1298 = vsel %vm979, %v1274, -inf
        %v1299 = vmax.f32 %v1297, %v1298
        %v1300 = vrot.slane %v1299, 4
        %v1301 = vmax.f32 %v1299, %v1300
        %v1302 = vrot.slane %v1301, 2
        %v1303 = vmax.f32 %v1301, %v1302
        %v1304 = vrot.slane %v1303, 1
        %v1305 = vmax.f32 %v1303, %v1304
        %v1306 = vsel %vm979, %v1275, -inf
        %v1307 = vsel %vm979, %v1276, -inf
        %v1308 = vmax.f32 %v1306, %v1307
        %v1309 = vrot.slane %v1308, 4
        %v1310 = vmax.f32 %v1308, %v1309
        %v1311 = vrot.slane %v1310, 2
        %v1312 = vmax.f32 %v1310, %v1311
        %v1313 = vrot.slane %v1312, 1
        %v1314 = vmax.f32 %v1312, %v1313
        %v1315 = vsel %vm979, %v1277, -inf
        %v1316 = vsel %vm979, %v1278, -inf
        %v1317 = vmax.f32 %v1315, %v1316
        %v1318 = vrot.slane %v1317, 4
        %v1319 = vmax.f32 %v1317, %v1318
        %v1320 = vrot.slane %v1319, 2
        %v1321 = vmax.f32 %v1319, %v1320
        %v1322 = vrot.slane %v1321, 1
        %v1323 = vmax.f32 %v1321, %v1322
        %v1324 = vsel %vm979, %v1279, -inf
        %v1325 = vsel %vm979, %v1280, -inf
        %v1326 = vmax.f32 %v1324, %v1325
        %v1327 = vrot.slane %v1326, 4
        %v1328 = vmax.f32 %v1326, %v1327
        %v1329 = vrot.slane %v1328, 2
        %v1330 = vmax.f32 %v1328, %v1329
        %v1331 = vrot.slane %v1330, 1
        %v1332 = vmax.f32 %v1330, %v1331
        %v1333 = vsel %vm979, %v1281, -inf
        %v1334 = vsel %vm979, %v1282, -inf
        %v1335 = vmax.f32 %v1333, %v1334
        %v1336 = vrot.slane %v1335, 4
        %v1337 = vmax.f32 %v1335, %v1336
        %v1338 = vrot.slane %v1337, 2
        %v1339 = vmax.f32 %v1337, %v1338
        %v1340 = vrot.slane %v1339, 1
        %v1341 = vmax.f32 %v1339, %v1340
        %v1342 = vsel %vm979, %v1283, -inf
        %v1343 = vsel %vm979, %v1284, -inf
        %v1344 = vmax.f32 %v1342, %v1343
        %v1345 = vrot.slane %v1344, 4
        %v1346 = vmax.f32 %v1344, %v1345
        %v1347 = vrot.slane %v1346, 2
        %v1348 = vmax.f32 %v1346, %v1347
        %v1349 = vrot.slane %v1348, 1
        %v1350 = vmax.f32 %v1348, %v1349
        %v1351 = vsel %vm979, %v1285, -inf
        %v1352 = vsel %vm979, %v1286, -inf
        %v1353 = vmax.f32 %v1351, %v1352
        %v1354 = vrot.slane %v1353, 4
        %v1355 = vmax.f32 %v1353, %v1354
        %v1356 = vrot.slane %v1355, 2
        %v1357 = vmax.f32 %v1355, %v1356
        %v1358 = vrot.slane %v1357, 1
        %v1359 = vmax.f32 %v1357, %v1358
        %vm1368 = vcmask 1041409
        %v1369 = vsel %vm1368, %v1305, %v1296
        %vm1370 = vcmask 1042434
        %v1371 = vsel %vm1370, %v1314, %v1369
        %vm1372 = vcmask 1043459
        %v1373 = vsel %vm1372, %v1323, %v1371
        %vm1374 = vcmask 1044484
        %v1375 = vsel %vm1374, %v1332, %v1373
        %vm1376 = vcmask 1045509
        %v1377 = vsel %vm1376, %v1341, %v1375
        %vm1378 = vcmask 1046534
        %v1379 = vsel %vm1378, %v1350, %v1377
        %vm1380 = vcmask 1047559
        %v1381 = vsel %vm1380, %v1359, %v1379
        %v1383 = vmax.f32 %v1287, %v1381
        %1384 = vst.msk [vmem:[#allocation3] sm:$0xff] %vm979, %v1383
        %s1385 = scalar_lea.vmem [#allocation11], 32
        %v1386 = vld [vmem:[%s1385] sm:$0xf]
        %v1387 = vld [vmem:[%s1385 + $0x4] sm:$0xf]
        %v1388 = vld [vmem:[%s1385 + $0x8] sm:$0xf]
        %v1389 = vld [vmem:[%s1385 + $0xc] sm:$0xf]
        %s1390 = scalar_lea.vmem [#allocation11], 48
        %v1391 = vld [vmem:[%s1390] sm:$0xf]
        %v1392 = vld [vmem:[%s1390 + $0x4] sm:$0xf]
        %v1393 = vld [vmem:[%s1390 + $0x8] sm:$0xf]
        %v1394 = vld [vmem:[%s1390 + $0xc] sm:$0xf]
        %v1399 = vunpack.c.l.b16 %v1391
        %v1400 = vunpack.c.l.b16 %v1392
        %v1401 = vunpack.c.l.b16 %v1393
        %v1402 = vunpack.c.l.b16 %v1394
        %v1403 = vpack.c.b16 %v1400, %v1399
        %v1404 = vpack.c.b16 %v1402, %v1401
        %1407 = vmatprep.subr.bf16.mxu0 0
        %1408 = vmatpush1.bf16.msra.mxu0 0
        %1409 = vmatprep.subr.bf16.mxu0 0
        %1410 = vmatpush1.bf16.msra.mxu0 0
        %1411 = vmatprep.subr.bf16.mxu0 0
        %1412 = vmatpush1.bf16.msra.mxu0 0
        %1413 = vmatprep.subr.bf16.mxu0 0
        %1414 = vmatpush1.bf16.msra.mxu0 0
        %1415 = vmatprep.subr.bf16.mxu0 0
        %1416 = vmatpush1.bf16.msra.mxu0 0
        %1417 = vmatprep.subr.bf16.mxu0 0
        %1418 = vmatpush1.bf16.msra.mxu0 0
        %1419 = vmatprep.subr.bf16.mxu0 0
        %1420 = vmatpush1.bf16.msra.mxu0 %v1404
        %1421 = vmatprep.subr.bf16.mxu0 0
        %1422 = vmatpush1.bf16.msra.mxu0 %v1403
        %1423 = vmatprep.subr.bf16.mxu0 0
        %1424 = vmatpush2.bf16.msra.mxu0 0
        %1425 = vmatprep.subr.bf16.mxu0 0
        %1426 = vmatpush2.bf16.msra.mxu0 0
        %1427 = vmatprep.subr.bf16.mxu0 0
        %1428 = vmatpush2.bf16.msra.mxu0 0
        %1429 = vmatprep.subr.bf16.mxu0 0
        %1430 = vmatpush2.bf16.msra.mxu0 0
        %1431 = vmatprep.subr.bf16.mxu0 0
        %1432 = vmatpush2.bf16.msra.mxu0 0
        %1433 = vmatprep.subr.bf16.mxu0 0
        %1434 = vmatpush2.bf16.msra.mxu0 0
        %1435 = vmatprep.subr.bf16.mxu0 0
        %1436 = vmatpush2.bf16.msra.mxu0 0
        %1437 = vmatprep.subr.bf16.mxu0 0
        %1438 = vmatpush2.bf16.msra.mxu0 0
        %1439 = vmatprep.mubr.bf16.mxu0 0
        %1440 = vmatmul.mubr.bf16.gmra.mxu0 %v981
        %v1441 = vpop.f32.mrf.mxu0
        %v1442 = vadd.f32 0.0, %v1441
        %v1443 = vpop.f32.mrf.mxu0
        %v1444 = vpop.f32.mrf.mxu0
        %v1445 = vadd.f32 0.0, %v1444
        %v1446 = vpop.f32.mrf.mxu0
        %1447 = vmatprep.mubr.bf16.mxu0 0
        %1448 = vmatmul.mubr.bf16.gmra.mxu0 %v984
        %v1449 = vpop.f32.mrf.mxu0
        %v1450 = vadd.f32 0.0, %v1449
        %v1451 = vpop.f32.mrf.mxu0
        %v1452 = vpop.f32.mrf.mxu0
        %v1453 = vadd.f32 0.0, %v1452
        %v1454 = vpop.f32.mrf.mxu0
        %1455 = vmatprep.mubr.bf16.mxu0 0
        %1456 = vmatmul.mubr.bf16.gmra.mxu0 %v987
        %v1457 = vpop.f32.mrf.mxu0
        %v1458 = vadd.f32 0.0, %v1457
        %v1459 = vpop.f32.mrf.mxu0
        %v1460 = vpop.f32.mrf.mxu0
        %v1461 = vadd.f32 0.0, %v1460
        %v1462 = vpop.f32.mrf.mxu0
        %1463 = vmatprep.mubr.bf16.mxu0 0
        %1464 = vmatmul.mubr.bf16.gmra.mxu0 %v990
        %v1465 = vpop.f32.mrf.mxu0
        %v1466 = vadd.f32 0.0, %v1465
        %v1467 = vpop.f32.mrf.mxu0
        %v1468 = vpop.f32.mrf.mxu0
        %v1469 = vadd.f32 0.0, %v1468
        %v1470 = vpop.f32.mrf.mxu0
        %1471 = vmatprep.mubr.bf16.mxu0 0
        %1472 = vmatmul.mubr.bf16.gmra.mxu0 %v993
        %v1473 = vpop.f32.mrf.mxu0
        %v1474 = vadd.f32 0.0, %v1473
        %v1475 = vpop.f32.mrf.mxu0
        %v1476 = vpop.f32.mrf.mxu0
        %v1477 = vadd.f32 0.0, %v1476
        %v1478 = vpop.f32.mrf.mxu0
        %1479 = vmatprep.mubr.bf16.mxu0 0
        %1480 = vmatmul.mubr.bf16.gmra.mxu0 %v996
        %v1481 = vpop.f32.mrf.mxu0
        %v1482 = vadd.f32 0.0, %v1481
        %v1483 = vpop.f32.mrf.mxu0
        %v1484 = vpop.f32.mrf.mxu0
        %v1485 = vadd.f32 0.0, %v1484
        %v1486 = vpop.f32.mrf.mxu0
        %1487 = vmatprep.mubr.bf16.mxu0 0
        %1488 = vmatmul.mubr.bf16.gmra.mxu0 %v999
        %v1489 = vpop.f32.mrf.mxu0
        %v1490 = vadd.f32 0.0, %v1489
        %v1491 = vpop.f32.mrf.mxu0
        %v1492 = vpop.f32.mrf.mxu0
        %v1493 = vadd.f32 0.0, %v1492
        %v1494 = vpop.f32.mrf.mxu0
        %1495 = vmatprep.mubr.bf16.mxu0 0
        %1496 = vmatmul.mubr.bf16.gmra.mxu0 %v1002
        %v1497 = vpop.f32.mrf.mxu0
        %v1498 = vadd.f32 0.0, %v1497
        %v1499 = vpop.f32.mrf.mxu0
        %v1500 = vpop.f32.mrf.mxu0
        %v1501 = vadd.f32 0.0, %v1500
        %v1502 = vpop.f32.mrf.mxu0
        %1503 = vdwg.mxu0
        %v1508 = vunpack.c.l.b16 %v1386
        %v1509 = vunpack.c.l.b16 %v1387
        %v1510 = vunpack.c.l.b16 %v1388
        %v1511 = vunpack.c.l.b16 %v1389
        %v1512 = vpack.c.b16 %v1509, %v1508
        %v1513 = vpack.c.b16 %v1511, %v1510
        %1516 = vmatprep.subr.bf16.mxu0 0
        %1517 = vmatpush1.bf16.msra.mxu0 0
        %1518 = vmatprep.subr.bf16.mxu0 0
        %1519 = vmatpush1.bf16.msra.mxu0 0
        %1520 = vmatprep.subr.bf16.mxu0 0
        %1521 = vmatpush1.bf16.msra.mxu0 0
        %1522 = vmatprep.subr.bf16.mxu0 0
        %1523 = vmatpush1.bf16.msra.mxu0 0
        %1524 = vmatprep.subr.bf16.mxu0 0
        %1525 = vmatpush1.bf16.msra.mxu0 0
        %1526 = vmatprep.subr.bf16.mxu0 0
        %1527 = vmatpush1.bf16.msra.mxu0 0
        %1528 = vmatprep.subr.bf16.mxu0 0
        %1529 = vmatpush1.bf16.msra.mxu0 %v1513
        %1530 = vmatprep.subr.bf16.mxu0 0
        %1531 = vmatpush1.bf16.msra.mxu0 %v1512
        %1532 = vmatprep.subr.bf16.mxu0 0
        %1533 = vmatpush2.bf16.msra.mxu0 0
        %1534 = vmatprep.subr.bf16.mxu0 0
        %1535 = vmatpush2.bf16.msra.mxu0 0
        %1536 = vmatprep.subr.bf16.mxu0 0
        %1537 = vmatpush2.bf16.msra.mxu0 0
        %1538 = vmatprep.subr.bf16.mxu0 0
        %1539 = vmatpush2.bf16.msra.mxu0 0
        %1540 = vmatprep.subr.bf16.mxu0 0
        %1541 = vmatpush2.bf16.msra.mxu0 0
        %1542 = vmatprep.subr.bf16.mxu0 0
        %1543 = vmatpush2.bf16.msra.mxu0 0
        %1544 = vmatprep.subr.bf16.mxu0 0
        %1545 = vmatpush2.bf16.msra.mxu0 0
        %1546 = vmatprep.subr.bf16.mxu0 0
        %1547 = vmatpush2.bf16.msra.mxu0 0
        %1548 = vmatprep.mubr.bf16.mxu0 0
        %1549 = vmatmul.mubr.bf16.gmra.mxu0 %v1138
        %v1550 = vpop.f32.mrf.mxu0
        %v1551 = vadd.f32 %v1442, %v1550
        %v1552 = vpop.f32.mrf.mxu0
        %v1553 = vpop.f32.mrf.mxu0
        %v1554 = vadd.f32 %v1445, %v1553
        %v1555 = vpop.f32.mrf.mxu0
        %1556 = vmatprep.mubr.bf16.mxu0 0
        %1557 = vmatmul.mubr.bf16.gmra.mxu0 %v1141
        %v1558 = vpop.f32.mrf.mxu0
        %v1559 = vadd.f32 %v1450, %v1558
        %v1560 = vpop.f32.mrf.mxu0
        %v1561 = vpop.f32.mrf.mxu0
        %v1562 = vadd.f32 %v1453, %v1561
        %v1563 = vpop.f32.mrf.mxu0
        %1564 = vmatprep.mubr.bf16.mxu0 0
        %1565 = vmatmul.mubr.bf16.gmra.mxu0 %v1144
        %v1566 = vpop.f32.mrf.mxu0
        %v1567 = vadd.f32 %v1458, %v1566
        %v1568 = vpop.f32.mrf.mxu0
        %v1569 = vpop.f32.mrf.mxu0
        %v1570 = vadd.f32 %v1461, %v1569
        %v1571 = vpop.f32.mrf.mxu0
        %1572 = vmatprep.mubr.bf16.mxu0 0
        %1573 = vmatmul.mubr.bf16.gmra.mxu0 %v1147
        %v1574 = vpop.f32.mrf.mxu0
        %v1575 = vadd.f32 %v1466, %v1574
        %v1576 = vpop.f32.mrf.mxu0
        %v1577 = vpop.f32.mrf.mxu0
        %v1578 = vadd.f32 %v1469, %v1577
        %v1579 = vpop.f32.mrf.mxu0
        %1580 = vmatprep.mubr.bf16.mxu0 0
        %1581 = vmatmul.mubr.bf16.gmra.mxu0 %v1150
        %v1582 = vpop.f32.mrf.mxu0
        %v1583 = vadd.f32 %v1474, %v1582
        %v1584 = vpop.f32.mrf.mxu0
        %v1585 = vpop.f32.mrf.mxu0
        %v1586 = vadd.f32 %v1477, %v1585
        %v1587 = vpop.f32.mrf.mxu0
        %1588 = vmatprep.mubr.bf16.mxu0 0
        %1589 = vmatmul.mubr.bf16.gmra.mxu0 %v1153
        %v1590 = vpop.f32.mrf.mxu0
        %v1591 = vadd.f32 %v1482, %v1590
        %v1592 = vpop.f32.mrf.mxu0
        %v1593 = vpop.f32.mrf.mxu0
        %v1594 = vadd.f32 %v1485, %v1593
        %v1595 = vpop.f32.mrf.mxu0
        %1596 = vmatprep.mubr.bf16.mxu0 0
        %1597 = vmatmul.mubr.bf16.gmra.mxu0 %v1156
        %v1598 = vpop.f32.mrf.mxu0
        %v1599 = vadd.f32 %v1490, %v1598
        %v1600 = vpop.f32.mrf.mxu0
        %v1601 = vpop.f32.mrf.mxu0
        %v1602 = vadd.f32 %v1493, %v1601
        %v1603 = vpop.f32.mrf.mxu0
        %1604 = vmatprep.mubr.bf16.mxu0 0
        %1605 = vmatmul.mubr.bf16.gmra.mxu0 %v1159
        %v1606 = vpop.f32.mrf.mxu0
        %v1607 = vadd.f32 %v1498, %v1606
        %v1608 = vpop.f32.mrf.mxu0
        %v1609 = vpop.f32.mrf.mxu0
        %v1610 = vadd.f32 %v1501, %v1609
        %v1611 = vpop.f32.mrf.mxu0
        %1612 = vdwg.mxu0
        %s1613 = scalar_lea.vmem [#allocation11], 64
        %v1614 = vld [vmem:[%s1613] sm:$0xf]
        %v1615 = vld [vmem:[%s1613 + $0x4] sm:$0xf]
        %v1616 = vld [vmem:[%s1613 + $0x8] sm:$0xf]
        %v1617 = vld [vmem:[%s1613 + $0xc] sm:$0xf]
        %v1618 = vunpack.c.l.b16 %v755
        %v1619 = vunpack.c.l.b16 %v758
        %v1620 = vunpack.c.l.b16 %v762
        %v1621 = vunpack.c.l.b16 %v765
        %v1622 = vunpack.c.l.b16 %v769
        %v1623 = vunpack.c.l.b16 %v772
        %v1624 = vunpack.c.l.b16 %v776
        %v1625 = vunpack.c.l.b16 %v779
        %v1626 = vunpack.c.l.b16 %v783
        %v1627 = vunpack.c.l.b16 %v786
        %v1628 = vunpack.c.l.b16 %v790
        %v1629 = vunpack.c.l.b16 %v793
        %v1630 = vunpack.c.l.b16 %v797
        %v1631 = vunpack.c.l.b16 %v800
        %v1632 = vunpack.c.l.b16 %v804
        %v1633 = vunpack.c.l.b16 %v807
        %v1634 = vpack.c.b16 %v1619, %v1618
        %v1635 = vpack.c.b16 %v1621, %v1620
        %v1636 = vpack.c.b16 %v1623, %v1622
        %v1637 = vpack.c.b16 %v1625, %v1624
        %v1638 = vpack.c.b16 %v1627, %v1626
        %v1639 = vpack.c.b16 %v1629, %v1628
        %v1640 = vpack.c.b16 %v1631, %v1630
        %v1641 = vpack.c.b16 %v1633, %v1632
        %v1646 = vunpack.c.l.b16 %v1614
        %v1647 = vunpack.c.l.b16 %v1615
        %v1648 = vunpack.c.l.b16 %v1616
        %v1649 = vunpack.c.l.b16 %v1617
        %v1650 = vpack.c.b16 %v1647, %v1646
        %v1651 = vpack.c.b16 %v1649, %v1648
        %v1655 = vsel %vm979, %v1634, 0
        %v1658 = vsel %vm979, %v1635, 0
        %v1661 = vsel %vm979, %v1636, 0
        %v1664 = vsel %vm979, %v1637, 0
        %v1667 = vsel %vm979, %v1638, 0
        %v1670 = vsel %vm979, %v1639, 0
        %v1673 = vsel %vm979, %v1640, 0
        %v1676 = vsel %vm979, %v1641, 0
        %1678 = vmatprep.subr.bf16.mxu0 0
        %1679 = vmatpush1.bf16.msra.mxu0 0
        %1680 = vmatprep.subr.bf16.mxu0 0
        %1681 = vmatpush1.bf16.msra.mxu0 0
        %1682 = vmatprep.subr.bf16.mxu0 0
        %1683 = vmatpush1.bf16.msra.mxu0 0
        %1684 = vmatprep.subr.bf16.mxu0 0
        %1685 = vmatpush1.bf16.msra.mxu0 0
        %1686 = vmatprep.subr.bf16.mxu0 0
        %1687 = vmatpush1.bf16.msra.mxu0 0
        %1688 = vmatprep.subr.bf16.mxu0 0
        %1689 = vmatpush1.bf16.msra.mxu0 0
        %1690 = vmatprep.subr.bf16.mxu0 0
        %1691 = vmatpush1.bf16.msra.mxu0 %v1651
        %1692 = vmatprep.subr.bf16.mxu0 0
        %1693 = vmatpush1.bf16.msra.mxu0 %v1650
        %1694 = vmatprep.subr.bf16.mxu0 0
        %1695 = vmatpush2.bf16.msra.mxu0 0
        %1696 = vmatprep.subr.bf16.mxu0 0
        %1697 = vmatpush2.bf16.msra.mxu0 0
        %1698 = vmatprep.subr.bf16.mxu0 0
        %1699 = vmatpush2.bf16.msra.mxu0 0
        %1700 = vmatprep.subr.bf16.mxu0 0
        %1701 = vmatpush2.bf16.msra.mxu0 0
        %1702 = vmatprep.subr.bf16.mxu0 0
        %1703 = vmatpush2.bf16.msra.mxu0 0
        %1704 = vmatprep.subr.bf16.mxu0 0
        %1705 = vmatpush2.bf16.msra.mxu0 0
        %1706 = vmatprep.subr.bf16.mxu0 0
        %1707 = vmatpush2.bf16.msra.mxu0 0
        %1708 = vmatprep.subr.bf16.mxu0 0
        %1709 = vmatpush2.bf16.msra.mxu0 0
        %1710 = vmatprep.mubr.bf16.mxu0 0
        %1711 = vmatmul.mubr.bf16.gmra.mxu0 %v1655
        %v1712 = vpop.f32.mrf.mxu0
        %v1713 = vadd.f32 0.0, %v1712
        %v1714 = vpop.f32.mrf.mxu0
        %v1715 = vpop.f32.mrf.mxu0
        %v1716 = vadd.f32 0.0, %v1715
        %v1717 = vpop.f32.mrf.mxu0
        %1718 = vmatprep.mubr.bf16.mxu0 0
        %1719 = vmatmul.mubr.bf16.gmra.mxu0 %v1658
        %v1720 = vpop.f32.mrf.mxu0
        %v1721 = vadd.f32 0.0, %v1720
        %v1722 = vpop.f32.mrf.mxu0
        %v1723 = vpop.f32.mrf.mxu0
        %v1724 = vadd.f32 0.0, %v1723
        %v1725 = vpop.f32.mrf.mxu0
        %1726 = vmatprep.mubr.bf16.mxu0 0
        %1727 = vmatmul.mubr.bf16.gmra.mxu0 %v1661
        %v1728 = vpop.f32.mrf.mxu0
        %v1729 = vadd.f32 0.0, %v1728
        %v1730 = vpop.f32.mrf.mxu0
        %v1731 = vpop.f32.mrf.mxu0
        %v1732 = vadd.f32 0.0, %v1731
        %v1733 = vpop.f32.mrf.mxu0
        %1734 = vmatprep.mubr.bf16.mxu0 0
        %1735 = vmatmul.mubr.bf16.gmra.mxu0 %v1664
        %v1736 = vpop.f32.mrf.mxu0
        %v1737 = vadd.f32 0.0, %v1736
        %v1738 = vpop.f32.mrf.mxu0
        %v1739 = vpop.f32.mrf.mxu0
        %v1740 = vadd.f32 0.0, %v1739
        %v1741 = vpop.f32.mrf.mxu0
        %1742 = vmatprep.mubr.bf16.mxu0 0
        %1743 = vmatmul.mubr.bf16.gmra.mxu0 %v1667
        %v1744 = vpop.f32.mrf.mxu0
        %v1745 = vadd.f32 0.0, %v1744
        %v1746 = vpop.f32.mrf.mxu0
        %v1747 = vpop.f32.mrf.mxu0
        %v1748 = vadd.f32 0.0, %v1747
        %v1749 = vpop.f32.mrf.mxu0
        %1750 = vmatprep.mubr.bf16.mxu0 0
        %1751 = vmatmul.mubr.bf16.gmra.mxu0 %v1670
        %v1752 = vpop.f32.mrf.mxu0
        %v1753 = vadd.f32 0.0, %v1752
        %v1754 = vpop.f32.mrf.mxu0
        %v1755 = vpop.f32.mrf.mxu0
        %v1756 = vadd.f32 0.0, %v1755
        %v1757 = vpop.f32.mrf.mxu0
        %1758 = vmatprep.mubr.bf16.mxu0 0
        %1759 = vmatmul.mubr.bf16.gmra.mxu0 %v1673
        %v1760 = vpop.f32.mrf.mxu0
        %v1761 = vadd.f32 0.0, %v1760
        %v1762 = vpop.f32.mrf.mxu0
        %v1763 = vpop.f32.mrf.mxu0
        %v1764 = vadd.f32 0.0, %v1763
        %v1765 = vpop.f32.mrf.mxu0
        %1766 = vmatprep.mubr.bf16.mxu0 0
        %1767 = vmatmul.mubr.bf16.gmra.mxu0 %v1676
        %v1768 = vpop.f32.mrf.mxu0
        %v1769 = vadd.f32 0.0, %v1768
        %v1770 = vpop.f32.mrf.mxu0
        %v1771 = vpop.f32.mrf.mxu0
        %v1772 = vadd.f32 0.0, %v1771
        %v1773 = vpop.f32.mrf.mxu0
        %1774 = vdwg.mxu0
        %v1775 = vadd.f32 %v1551, %v1713
        %v1776 = vadd.f32 %v1554, %v1716
        %v1777 = vadd.f32 %v1559, %v1721
        %v1778 = vadd.f32 %v1562, %v1724
        %v1779 = vadd.f32 %v1567, %v1729
        %v1780 = vadd.f32 %v1570, %v1732
        %v1781 = vadd.f32 %v1575, %v1737
        %v1782 = vadd.f32 %v1578, %v1740
        %v1783 = vadd.f32 %v1583, %v1745
        %v1784 = vadd.f32 %v1586, %v1748
        %v1785 = vadd.f32 %v1591, %v1753
        %v1786 = vadd.f32 %v1594, %v1756
        %v1787 = vadd.f32 %v1599, %v1761
        %v1788 = vadd.f32 %v1602, %v1764
        %v1789 = vadd.f32 %v1607, %v1769
        %v1790 = vadd.f32 %v1610, %v1772
        %s1791 = scalar_select %p464, 7, 6
        %s1792 = scalar_select %p1258, 14, 13
        %v1793 = vstv %s1791
        %vm1794 = vcmp.ge.s32.totalorder %v932, %v1793
        %vm1795 = vcmp.ge.s32.totalorder %v933, %v1793
        %v1796 = vstv %s1792
        %vm1797 = vcmp.le.s32.totalorder %v932, %v1796
        %vm1798 = vcmp.le.s32.totalorder %v933, %v1796
        %vm1799 = vmand %vm1794, %vm1797
        %vm1800 = vmand %vm1795, %vm1798
        %v1801 = vsel %vm1799, 1, 0
        %v1802 = vsel %vm1800, 1, 0
        %vm1803 = vcmp.eq.s32.totalorder %v1801, 1
        %vm1804 = vcmp.eq.s32.totalorder %v1802, 1
        %v1805 = vsel %vm1803, %v1775, -inf
        %v1806 = vsel %vm1804, %v1776, -inf
        %v1807 = vsel %vm1803, %v1777, -inf
        %v1808 = vsel %vm1804, %v1778, -inf
        %v1809 = vsel %vm1803, %v1779, -inf
        %v1810 = vsel %vm1804, %v1780, -inf
        %v1811 = vsel %vm1803, %v1781, -inf
        %v1812 = vsel %vm1804, %v1782, -inf
        %v1813 = vsel %vm1803, %v1783, -inf
        %v1814 = vsel %vm1804, %v1784, -inf
        %v1815 = vsel %vm1803, %v1785, -inf
        %v1816 = vsel %vm1804, %v1786, -inf
        %v1817 = vsel %vm1803, %v1787, -inf
        %v1818 = vsel %vm1804, %v1788, -inf
        %v1819 = vsel %vm1803, %v1789, -inf
        %v1820 = vsel %vm1804, %v1790, -inf
        %v1821 = vld [vmem:[#allocation4] sm:$0xff]
        %v1822 = vsel %vm979, %v1805, -inf
        %v1823 = vsel %vm979, %v1806, -inf
        %v1824 = vmax.f32 %v1822, %v1823
        %v1825 = vrot.slane %v1824, 4
        %v1826 = vmax.f32 %v1824, %v1825
        %v1827 = vrot.slane %v1826, 2
        %v1828 = vmax.f32 %v1826, %v1827
        %v1829 = vrot.slane %v1828, 1
        %v1830 = vmax.f32 %v1828, %v1829
        %v1831 = vsel %vm979, %v1807, -inf
        %v1832 = vsel %vm979, %v1808, -inf
        %v1833 = vmax.f32 %v1831, %v1832
        %v1834 = vrot.slane %v1833, 4
        %v1835 = vmax.f32 %v1833, %v1834
        %v1836 = vrot.slane %v1835, 2
        %v1837 = vmax.f32 %v1835, %v1836
        %v1838 = vrot.slane %v1837, 1
        %v1839 = vmax.f32 %v1837, %v1838
        %v1840 = vsel %vm979, %v1809, -inf
        %v1841 = vsel %vm979, %v1810, -inf
        %v1842 = vmax.f32 %v1840, %v1841
        %v1843 = vrot.slane %v1842, 4
        %v1844 = vmax.f32 %v1842, %v1843
        %v1845 = vrot.slane %v1844, 2
        %v1846 = vmax.f32 %v1844, %v1845
        %v1847 = vrot.slane %v1846, 1
        %v1848 = vmax.f32 %v1846, %v1847
        %v1849 = vsel %vm979, %v1811, -inf
        %v1850 = vsel %vm979, %v1812, -inf
        %v1851 = vmax.f32 %v1849, %v1850
        %v1852 = vrot.slane %v1851, 4
        %v1853 = vmax.f32 %v1851, %v1852
        %v1854 = vrot.slane %v1853, 2
        %v1855 = vmax.f32 %v1853, %v1854
        %v1856 = vrot.slane %v1855, 1
        %v1857 = vmax.f32 %v1855, %v1856
        %v1858 = vsel %vm979, %v1813, -inf
        %v1859 = vsel %vm979, %v1814, -inf
        %v1860 = vmax.f32 %v1858, %v1859
        %v1861 = vrot.slane %v1860, 4
        %v1862 = vmax.f32 %v1860, %v1861
        %v1863 = vrot.slane %v1862, 2
        %v1864 = vmax.f32 %v1862, %v1863
        %v1865 = vrot.slane %v1864, 1
        %v1866 = vmax.f32 %v1864, %v1865
        %v1867 = vsel %vm979, %v1815, -inf
        %v1868 = vsel %vm979, %v1816, -inf
        %v1869 = vmax.f32 %v1867, %v1868
        %v1870 = vrot.slane %v1869, 4
        %v1871 = vmax.f32 %v1869, %v1870
        %v1872 = vrot.slane %v1871, 2
        %v1873 = vmax.f32 %v1871, %v1872
        %v1874 = vrot.slane %v1873, 1
        %v1875 = vmax.f32 %v1873, %v1874
        %v1876 = vsel %vm979, %v1817, -inf
        %v1877 = vsel %vm979, %v1818, -inf
        %v1878 = vmax.f32 %v1876, %v1877
        %v1879 = vrot.slane %v1878, 4
        %v1880 = vmax.f32 %v1878, %v1879
        %v1881 = vrot.slane %v1880, 2
        %v1882 = vmax.f32 %v1880, %v1881
        %v1883 = vrot.slane %v1882, 1
        %v1884 = vmax.f32 %v1882, %v1883
        %v1885 = vsel %vm979, %v1819, -inf
        %v1886 = vsel %vm979, %v1820, -inf
        %v1887 = vmax.f32 %v1885, %v1886
        %v1888 = vrot.slane %v1887, 4
        %v1889 = vmax.f32 %v1887, %v1888
        %v1890 = vrot.slane %v1889, 2
        %v1891 = vmax.f32 %v1889, %v1890
        %v1892 = vrot.slane %v1891, 1
        %v1893 = vmax.f32 %v1891, %v1892
        %v1902 = vsel %vm1368, %v1839, %v1830
        %v1903 = vsel %vm1370, %v1848, %v1902
        %v1904 = vsel %vm1372, %v1857, %v1903
        %v1905 = vsel %vm1374, %v1866, %v1904
        %v1906 = vsel %vm1376, %v1875, %v1905
        %v1907 = vsel %vm1378, %v1884, %v1906
        %v1908 = vsel %vm1380, %v1893, %v1907
        %v1910 = vmax.f32 %v1821, %v1908
        %1911 = vst.msk [vmem:[#allocation4] sm:$0xff] %vm979, %v1910
        %s1912 = scalar_lea.vmem [#allocation11], 80
        %v1913 = vld [vmem:[%s1912] sm:$0xf]
        %v1914 = vld [vmem:[%s1912 + $0x4] sm:$0xf]
        %v1915 = vld [vmem:[%s1912 + $0x8] sm:$0xf]
        %v1916 = vld [vmem:[%s1912 + $0xc] sm:$0xf]
        %s1917 = scalar_lea.vmem [#allocation11], 96
        %v1918 = vld [vmem:[%s1917] sm:$0xf]
        %v1919 = vld [vmem:[%s1917 + $0x4] sm:$0xf]
        %v1920 = vld [vmem:[%s1917 + $0x8] sm:$0xf]
        %v1921 = vld [vmem:[%s1917 + $0xc] sm:$0xf]
        %v1926 = vunpack.c.l.b16 %v1918
        %v1927 = vunpack.c.l.b16 %v1919
        %v1928 = vunpack.c.l.b16 %v1920
        %v1929 = vunpack.c.l.b16 %v1921
        %v1930 = vpack.c.b16 %v1927, %v1926
        %v1931 = vpack.c.b16 %v1929, %v1928
        %1934 = vmatprep.subr.bf16.mxu0 0
        %1935 = vmatpush1.bf16.msra.mxu0 0
        %1936 = vmatprep.subr.bf16.mxu0 0
        %1937 = vmatpush1.bf16.msra.mxu0 0
        %1938 = vmatprep.subr.bf16.mxu0 0
        %1939 = vmatpush1.bf16.msra.mxu0 0
        %1940 = vmatprep.subr.bf16.mxu0 0
        %1941 = vmatpush1.bf16.msra.mxu0 0
        %1942 = vmatprep.subr.bf16.mxu0 0
        %1943 = vmatpush1.bf16.msra.mxu0 0
        %1944 = vmatprep.subr.bf16.mxu0 0
        %1945 = vmatpush1.bf16.msra.mxu0 0
        %1946 = vmatprep.subr.bf16.mxu0 0
        %1947 = vmatpush1.bf16.msra.mxu0 %v1931
        %1948 = vmatprep.subr.bf16.mxu0 0
        %1949 = vmatpush1.bf16.msra.mxu0 %v1930
        %1950 = vmatprep.subr.bf16.mxu0 0
        %1951 = vmatpush2.bf16.msra.mxu0 0
        %1952 = vmatprep.subr.bf16.mxu0 0
        %1953 = vmatpush2.bf16.msra.mxu0 0
        %1954 = vmatprep.subr.bf16.mxu0 0
        %1955 = vmatpush2.bf16.msra.mxu0 0
        %1956 = vmatprep.subr.bf16.mxu0 0
        %1957 = vmatpush2.bf16.msra.mxu0 0
        %1958 = vmatprep.subr.bf16.mxu0 0
        %1959 = vmatpush2.bf16.msra.mxu0 0
        %1960 = vmatprep.subr.bf16.mxu0 0
        %1961 = vmatpush2.bf16.msra.mxu0 0
        %1962 = vmatprep.subr.bf16.mxu0 0
        %1963 = vmatpush2.bf16.msra.mxu0 0
        %1964 = vmatprep.subr.bf16.mxu0 0
        %1965 = vmatpush2.bf16.msra.mxu0 0
        %1966 = vmatprep.mubr.bf16.mxu0 0
        %1967 = vmatmul.mubr.bf16.gmra.mxu0 %v981
        %v1968 = vpop.f32.mrf.mxu0
        %v1969 = vadd.f32 0.0, %v1968
        %v1970 = vpop.f32.mrf.mxu0
        %v1971 = vpop.f32.mrf.mxu0
        %v1972 = vadd.f32 0.0, %v1971
        %v1973 = vpop.f32.mrf.mxu0
        %1974 = vmatprep.mubr.bf16.mxu0 0
        %1975 = vmatmul.mubr.bf16.gmra.mxu0 %v984
        %v1976 = vpop.f32.mrf.mxu0
        %v1977 = vadd.f32 0.0, %v1976
        %v1978 = vpop.f32.mrf.mxu0
        %v1979 = vpop.f32.mrf.mxu0
        %v1980 = vadd.f32 0.0, %v1979
        %v1981 = vpop.f32.mrf.mxu0
        %1982 = vmatprep.mubr.bf16.mxu0 0
        %1983 = vmatmul.mubr.bf16.gmra.mxu0 %v987
        %v1984 = vpop.f32.mrf.mxu0
        %v1985 = vadd.f32 0.0, %v1984
        %v1986 = vpop.f32.mrf.mxu0
        %v1987 = vpop.f32.mrf.mxu0
        %v1988 = vadd.f32 0.0, %v1987
        %v1989 = vpop.f32.mrf.mxu0
        %1990 = vmatprep.mubr.bf16.mxu0 0
        %1991 = vmatmul.mubr.bf16.gmra.mxu0 %v990
        %v1992 = vpop.f32.mrf.mxu0
        %v1993 = vadd.f32 0.0, %v1992
        %v1994 = vpop.f32.mrf.mxu0
        %v1995 = vpop.f32.mrf.mxu0
        %v1996 = vadd.f32 0.0, %v1995
        %v1997 = vpop.f32.mrf.mxu0
        %1998 = vmatprep.mubr.bf16.mxu0 0
        %1999 = vmatmul.mubr.bf16.gmra.mxu0 %v993
        %v2000 = vpop.f32.mrf.mxu0
        %v2001 = vadd.f32 0.0, %v2000
        %v2002 = vpop.f32.mrf.mxu0
        %v2003 = vpop.f32.mrf.mxu0
        %v2004 = vadd.f32 0.0, %v2003
        %v2005 = vpop.f32.mrf.mxu0
        %2006 = vmatprep.mubr.bf16.mxu0 0
        %2007 = vmatmul.mubr.bf16.gmra.mxu0 %v996
        %v2008 = vpop.f32.mrf.mxu0
        %v2009 = vadd.f32 0.0, %v2008
        %v2010 = vpop.f32.mrf.mxu0
        %v2011 = vpop.f32.mrf.mxu0
        %v2012 = vadd.f32 0.0, %v2011
        %v2013 = vpop.f32.mrf.mxu0
        %2014 = vmatprep.mubr.bf16.mxu0 0
        %2015 = vmatmul.mubr.bf16.gmra.mxu0 %v999
        %v2016 = vpop.f32.mrf.mxu0
        %v2017 = vadd.f32 0.0, %v2016
        %v2018 = vpop.f32.mrf.mxu0
        %v2019 = vpop.f32.mrf.mxu0
        %v2020 = vadd.f32 0.0, %v2019
        %v2021 = vpop.f32.mrf.mxu0
        %2022 = vmatprep.mubr.bf16.mxu0 0
        %2023 = vmatmul.mubr.bf16.gmra.mxu0 %v1002
        %v2024 = vpop.f32.mrf.mxu0
        %v2025 = vadd.f32 0.0, %v2024
        %v2026 = vpop.f32.mrf.mxu0
        %v2027 = vpop.f32.mrf.mxu0
        %v2028 = vadd.f32 0.0, %v2027
        %v2029 = vpop.f32.mrf.mxu0
        %2030 = vdwg.mxu0
        %v2035 = vunpack.c.l.b16 %v1913
        %v2036 = vunpack.c.l.b16 %v1914
        %v2037 = vunpack.c.l.b16 %v1915
        %v2038 = vunpack.c.l.b16 %v1916
        %v2039 = vpack.c.b16 %v2036, %v2035
        %v2040 = vpack.c.b16 %v2038, %v2037
        %2043 = vmatprep.subr.bf16.mxu0 0
        %2044 = vmatpush1.bf16.msra.mxu0 0
        %2045 = vmatprep.subr.bf16.mxu0 0
        %2046 = vmatpush1.bf16.msra.mxu0 0
        %2047 = vmatprep.subr.bf16.mxu0 0
        %2048 = vmatpush1.bf16.msra.mxu0 0
        %2049 = vmatprep.subr.bf16.mxu0 0
        %2050 = vmatpush1.bf16.msra.mxu0 0
        %2051 = vmatprep.subr.bf16.mxu0 0
        %2052 = vmatpush1.bf16.msra.mxu0 0
        %2053 = vmatprep.subr.bf16.mxu0 0
        %2054 = vmatpush1.bf16.msra.mxu0 0
        %2055 = vmatprep.subr.bf16.mxu0 0
        %2056 = vmatpush1.bf16.msra.mxu0 %v2040
        %2057 = vmatprep.subr.bf16.mxu0 0
        %2058 = vmatpush1.bf16.msra.mxu0 %v2039
        %2059 = vmatprep.subr.bf16.mxu0 0
        %2060 = vmatpush2.bf16.msra.mxu0 0
        %2061 = vmatprep.subr.bf16.mxu0 0
        %2062 = vmatpush2.bf16.msra.mxu0 0
        %2063 = vmatprep.subr.bf16.mxu0 0
        %2064 = vmatpush2.bf16.msra.mxu0 0
        %2065 = vmatprep.subr.bf16.mxu0 0
        %2066 = vmatpush2.bf16.msra.mxu0 0
        %2067 = vmatprep.subr.bf16.mxu0 0
        %2068 = vmatpush2.bf16.msra.mxu0 0
        %2069 = vmatprep.subr.bf16.mxu0 0
        %2070 = vmatpush2.bf16.msra.mxu0 0
        %2071 = vmatprep.subr.bf16.mxu0 0
        %2072 = vmatpush2.bf16.msra.mxu0 0
        %2073 = vmatprep.subr.bf16.mxu0 0
        %2074 = vmatpush2.bf16.msra.mxu0 0
        %2075 = vmatprep.mubr.bf16.mxu0 0
        %2076 = vmatmul.mubr.bf16.gmra.mxu0 %v1138
        %v2077 = vpop.f32.mrf.mxu0
        %v2078 = vadd.f32 %v1969, %v2077
        %v2079 = vpop.f32.mrf.mxu0
        %v2080 = vpop.f32.mrf.mxu0
        %v2081 = vadd.f32 %v1972, %v2080
        %v2082 = vpop.f32.mrf.mxu0
        %2083 = vmatprep.mubr.bf16.mxu0 0
        %2084 = vmatmul.mubr.bf16.gmra.mxu0 %v1141
        %v2085 = vpop.f32.mrf.mxu0
        %v2086 = vadd.f32 %v1977, %v2085
        %v2087 = vpop.f32.mrf.mxu0
        %v2088 = vpop.f32.mrf.mxu0
        %v2089 = vadd.f32 %v1980, %v2088
        %v2090 = vpop.f32.mrf.mxu0
        %2091 = vmatprep.mubr.bf16.mxu0 0
        %2092 = vmatmul.mubr.bf16.gmra.mxu0 %v1144
        %v2093 = vpop.f32.mrf.mxu0
        %v2094 = vadd.f32 %v1985, %v2093
        %v2095 = vpop.f32.mrf.mxu0
        %v2096 = vpop.f32.mrf.mxu0
        %v2097 = vadd.f32 %v1988, %v2096
        %v2098 = vpop.f32.mrf.mxu0
        %2099 = vmatprep.mubr.bf16.mxu0 0
        %2100 = vmatmul.mubr.bf16.gmra.mxu0 %v1147
        %v2101 = vpop.f32.mrf.mxu0
        %v2102 = vadd.f32 %v1993, %v2101
        %v2103 = vpop.f32.mrf.mxu0
        %v2104 = vpop.f32.mrf.mxu0
        %v2105 = vadd.f32 %v1996, %v2104
        %v2106 = vpop.f32.mrf.mxu0
        %2107 = vmatprep.mubr.bf16.mxu0 0
        %2108 = vmatmul.mubr.bf16.gmra.mxu0 %v1150
        %v2109 = vpop.f32.mrf.mxu0
        %v2110 = vadd.f32 %v2001, %v2109
        %v2111 = vpop.f32.mrf.mxu0
        %v2112 = vpop.f32.mrf.mxu0
        %v2113 = vadd.f32 %v2004, %v2112
        %v2114 = vpop.f32.mrf.mxu0
        %2115 = vmatprep.mubr.bf16.mxu0 0
        %2116 = vmatmul.mubr.bf16.gmra.mxu0 %v1153
        %v2117 = vpop.f32.mrf.mxu0
        %v2118 = vadd.f32 %v2009, %v2117
        %v2119 = vpop.f32.mrf.mxu0
        %v2120 = vpop.f32.mrf.mxu0
        %v2121 = vadd.f32 %v2012, %v2120
        %v2122 = vpop.f32.mrf.mxu0
        %2123 = vmatprep.mubr.bf16.mxu0 0
        %2124 = vmatmul.mubr.bf16.gmra.mxu0 %v1156
        %v2125 = vpop.f32.mrf.mxu0
        %v2126 = vadd.f32 %v2017, %v2125
        %v2127 = vpop.f32.mrf.mxu0
        %v2128 = vpop.f32.mrf.mxu0
        %v2129 = vadd.f32 %v2020, %v2128
        %v2130 = vpop.f32.mrf.mxu0
        %2131 = vmatprep.mubr.bf16.mxu0 0
        %2132 = vmatmul.mubr.bf16.gmra.mxu0 %v1159
        %v2133 = vpop.f32.mrf.mxu0
        %v2134 = vadd.f32 %v2025, %v2133
        %v2135 = vpop.f32.mrf.mxu0
        %v2136 = vpop.f32.mrf.mxu0
        %v2137 = vadd.f32 %v2028, %v2136
        %v2138 = vpop.f32.mrf.mxu0
        %2139 = vdwg.mxu0
        %s2140 = scalar_lea.vmem [#allocation11], 112
        %v2141 = vld [vmem:[%s2140] sm:$0xf]
        %v2142 = vld [vmem:[%s2140 + $0x4] sm:$0xf]
        %v2143 = vld [vmem:[%s2140 + $0x8] sm:$0xf]
        %v2144 = vld [vmem:[%s2140 + $0xc] sm:$0xf]
        %v2149 = vunpack.c.l.b16 %v2141
        %v2150 = vunpack.c.l.b16 %v2142
        %v2151 = vunpack.c.l.b16 %v2143
        %v2152 = vunpack.c.l.b16 %v2144
        %v2153 = vpack.c.b16 %v2150, %v2149
        %v2154 = vpack.c.b16 %v2152, %v2151
        %2157 = vmatprep.subr.bf16.mxu0 0
        %2158 = vmatpush1.bf16.msra.mxu0 0
        %2159 = vmatprep.subr.bf16.mxu0 0
        %2160 = vmatpush1.bf16.msra.mxu0 0
        %2161 = vmatprep.subr.bf16.mxu0 0
        %2162 = vmatpush1.bf16.msra.mxu0 0
        %2163 = vmatprep.subr.bf16.mxu0 0
        %2164 = vmatpush1.bf16.msra.mxu0 0
        %2165 = vmatprep.subr.bf16.mxu0 0
        %2166 = vmatpush1.bf16.msra.mxu0 0
        %2167 = vmatprep.subr.bf16.mxu0 0
        %2168 = vmatpush1.bf16.msra.mxu0 0
        %2169 = vmatprep.subr.bf16.mxu0 0
        %2170 = vmatpush1.bf16.msra.mxu0 %v2154
        %2171 = vmatprep.subr.bf16.mxu0 0
        %2172 = vmatpush1.bf16.msra.mxu0 %v2153
        %2173 = vmatprep.subr.bf16.mxu0 0
        %2174 = vmatpush2.bf16.msra.mxu0 0
        %2175 = vmatprep.subr.bf16.mxu0 0
        %2176 = vmatpush2.bf16.msra.mxu0 0
        %2177 = vmatprep.subr.bf16.mxu0 0
        %2178 = vmatpush2.bf16.msra.mxu0 0
        %2179 = vmatprep.subr.bf16.mxu0 0
        %2180 = vmatpush2.bf16.msra.mxu0 0
        %2181 = vmatprep.subr.bf16.mxu0 0
        %2182 = vmatpush2.bf16.msra.mxu0 0
        %2183 = vmatprep.subr.bf16.mxu0 0
        %2184 = vmatpush2.bf16.msra.mxu0 0
        %2185 = vmatprep.subr.bf16.mxu0 0
        %2186 = vmatpush2.bf16.msra.mxu0 0
        %2187 = vmatprep.subr.bf16.mxu0 0
        %2188 = vmatpush2.bf16.msra.mxu0 0
        %2189 = vmatprep.mubr.bf16.mxu0 0
        %2190 = vmatmul.mubr.bf16.gmra.mxu0 %v1655
        %v2191 = vpop.f32.mrf.mxu0
        %v2192 = vadd.f32 0.0, %v2191
        %v2193 = vpop.f32.mrf.mxu0
        %v2194 = vpop.f32.mrf.mxu0
        %v2195 = vadd.f32 0.0, %v2194
        %v2196 = vpop.f32.mrf.mxu0
        %2197 = vmatprep.mubr.bf16.mxu0 0
        %2198 = vmatmul.mubr.bf16.gmra.mxu0 %v1658
        %v2199 = vpop.f32.mrf.mxu0
        %v2200 = vadd.f32 0.0, %v2199
        %v2201 = vpop.f32.mrf.mxu0
        %v2202 = vpop.f32.mrf.mxu0
        %v2203 = vadd.f32 0.0, %v2202
        %v2204 = vpop.f32.mrf.mxu0
        %2205 = vmatprep.mubr.bf16.mxu0 0
        %2206 = vmatmul.mubr.bf16.gmra.mxu0 %v1661
        %v2207 = vpop.f32.mrf.mxu0
        %v2208 = vadd.f32 0.0, %v2207
        %v2209 = vpop.f32.mrf.mxu0
        %v2210 = vpop.f32.mrf.mxu0
        %v2211 = vadd.f32 0.0, %v2210
        %v2212 = vpop.f32.mrf.mxu0
        %2213 = vmatprep.mubr.bf16.mxu0 0
        %2214 = vmatmul.mubr.bf16.gmra.mxu0 %v1664
        %v2215 = vpop.f32.mrf.mxu0
        %v2216 = vadd.f32 0.0, %v2215
        %v2217 = vpop.f32.mrf.mxu0
        %v2218 = vpop.f32.mrf.mxu0
        %v2219 = vadd.f32 0.0, %v2218
        %v2220 = vpop.f32.mrf.mxu0
        %2221 = vmatprep.mubr.bf16.mxu0 0
        %2222 = vmatmul.mubr.bf16.gmra.mxu0 %v1667
        %v2223 = vpop.f32.mrf.mxu0
        %v2224 = vadd.f32 0.0, %v2223
        %v2225 = vpop.f32.mrf.mxu0
        %v2226 = vpop.f32.mrf.mxu0
        %v2227 = vadd.f32 0.0, %v2226
        %v2228 = vpop.f32.mrf.mxu0
        %2229 = vmatprep.mubr.bf16.mxu0 0
        %2230 = vmatmul.mubr.bf16.gmra.mxu0 %v1670
        %v2231 = vpop.f32.mrf.mxu0
        %v2232 = vadd.f32 0.0, %v2231
        %v2233 = vpop.f32.mrf.mxu0
        %v2234 = vpop.f32.mrf.mxu0
        %v2235 = vadd.f32 0.0, %v2234
        %v2236 = vpop.f32.mrf.mxu0
        %2237 = vmatprep.mubr.bf16.mxu0 0
        %2238 = vmatmul.mubr.bf16.gmra.mxu0 %v1673
        %v2239 = vpop.f32.mrf.mxu0
        %v2240 = vadd.f32 0.0, %v2239
        %v2241 = vpop.f32.mrf.mxu0
        %v2242 = vpop.f32.mrf.mxu0
        %v2243 = vadd.f32 0.0, %v2242
        %v2244 = vpop.f32.mrf.mxu0
        %2245 = vmatprep.mubr.bf16.mxu0 0
        %2246 = vmatmul.mubr.bf16.gmra.mxu0 %v1676
        %v2247 = vpop.f32.mrf.mxu0
        %v2248 = vadd.f32 0.0, %v2247
        %v2249 = vpop.f32.mrf.mxu0
        %v2250 = vpop.f32.mrf.mxu0
        %v2251 = vadd.f32 0.0, %v2250
        %v2252 = vpop.f32.mrf.mxu0
        %2253 = vdwg.mxu0
        %v2254 = vadd.f32 %v2078, %v2192
        %v2255 = vadd.f32 %v2081, %v2195
        %v2256 = vadd.f32 %v2086, %v2200
        %v2257 = vadd.f32 %v2089, %v2203
        %v2258 = vadd.f32 %v2094, %v2208
        %v2259 = vadd.f32 %v2097, %v2211
        %v2260 = vadd.f32 %v2102, %v2216
        %v2261 = vadd.f32 %v2105, %v2219
        %v2262 = vadd.f32 %v2110, %v2224
        %v2263 = vadd.f32 %v2113, %v2227
        %v2264 = vadd.f32 %v2118, %v2232
        %v2265 = vadd.f32 %v2121, %v2235
        %v2266 = vadd.f32 %v2126, %v2240
        %v2267 = vadd.f32 %v2129, %v2243
        %v2268 = vadd.f32 %v2134, %v2248
        %v2269 = vadd.f32 %v2137, %v2251
        %s2270 = scalar_lea.vmem [#allocation11], 128
        %v2271 = vld [vmem:[%s2270] sm:$0xf]
        %v2272 = vld [vmem:[%s2270 + $0x4] sm:$0xf]
        %v2273 = vld [vmem:[%s2270 + $0x8] sm:$0xf]
        %v2274 = vld [vmem:[%s2270 + $0xc] sm:$0xf]
        %v2275 = vunpack.c.l.b16 %v818
        %v2276 = vunpack.c.l.b16 %v825
        %v2277 = vunpack.c.l.b16 %v833
        %v2278 = vunpack.c.l.b16 %v840
        %v2279 = vunpack.c.l.b16 %v848
        %v2280 = vunpack.c.l.b16 %v855
        %v2281 = vunpack.c.l.b16 %v863
        %v2282 = vunpack.c.l.b16 %v870
        %v2283 = vunpack.c.l.b16 %v878
        %v2284 = vunpack.c.l.b16 %v885
        %v2285 = vunpack.c.l.b16 %v893
        %v2286 = vunpack.c.l.b16 %v900
        %v2287 = vunpack.c.l.b16 %v908
        %v2288 = vunpack.c.l.b16 %v915
        %v2289 = vunpack.c.l.b16 %v923
        %v2290 = vunpack.c.l.b16 %v930
        %v2291 = vpack.c.b16 %v2276, %v2275
        %v2292 = vpack.c.b16 %v2278, %v2277
        %v2293 = vpack.c.b16 %v2280, %v2279
        %v2294 = vpack.c.b16 %v2282, %v2281
        %v2295 = vpack.c.b16 %v2284, %v2283
        %v2296 = vpack.c.b16 %v2286, %v2285
        %v2297 = vpack.c.b16 %v2288, %v2287
        %v2298 = vpack.c.b16 %v2290, %v2289
        %v2303 = vunpack.c.l.b16 %v2271
        %v2304 = vunpack.c.l.b16 %v2272
        %v2305 = vunpack.c.l.b16 %v2273
        %v2306 = vunpack.c.l.b16 %v2274
        %v2307 = vpack.c.b16 %v2304, %v2303
        %v2308 = vpack.c.b16 %v2306, %v2305
        %v2312 = vsel %vm979, %v2291, 0
        %v2315 = vsel %vm979, %v2292, 0
        %v2318 = vsel %vm979, %v2293, 0
        %v2321 = vsel %vm979, %v2294, 0
        %v2324 = vsel %vm979, %v2295, 0
        %v2327 = vsel %vm979, %v2296, 0
        %v2330 = vsel %vm979, %v2297, 0
        %v2333 = vsel %vm979, %v2298, 0
        %2335 = vmatprep.subr.bf16.mxu0 0
        %2336 = vmatpush1.bf16.msra.mxu0 0
        %2337 = vmatprep.subr.bf16.mxu0 0
        %2338 = vmatpush1.bf16.msra.mxu0 0
        %2339 = vmatprep.subr.bf16.mxu0 0
        %2340 = vmatpush1.bf16.msra.mxu0 0
        %2341 = vmatprep.subr.bf16.mxu0 0
        %2342 = vmatpush1.bf16.msra.mxu0 0
        %2343 = vmatprep.subr.bf16.mxu0 0
        %2344 = vmatpush1.bf16.msra.mxu0 0
        %2345 = vmatprep.subr.bf16.mxu0 0
        %2346 = vmatpush1.bf16.msra.mxu0 0
        %2347 = vmatprep.subr.bf16.mxu0 0
        %2348 = vmatpush1.bf16.msra.mxu0 %v2308
        %2349 = vmatprep.subr.bf16.mxu0 0
        %2350 = vmatpush1.bf16.msra.mxu0 %v2307
        %2351 = vmatprep.subr.bf16.mxu0 0
        %2352 = vmatpush2.bf16.msra.mxu0 0
        %2353 = vmatprep.subr.bf16.mxu0 0
        %2354 = vmatpush2.bf16.msra.mxu0 0
        %2355 = vmatprep.subr.bf16.mxu0 0
        %2356 = vmatpush2.bf16.msra.mxu0 0
        %2357 = vmatprep.subr.bf16.mxu0 0
        %2358 = vmatpush2.bf16.msra.mxu0 0
        %2359 = vmatprep.subr.bf16.mxu0 0
        %2360 = vmatpush2.bf16.msra.mxu0 0
        %2361 = vmatprep.subr.bf16.mxu0 0
        %2362 = vmatpush2.bf16.msra.mxu0 0
        %2363 = vmatprep.subr.bf16.mxu0 0
        %2364 = vmatpush2.bf16.msra.mxu0 0
        %2365 = vmatprep.subr.bf16.mxu0 0
        %2366 = vmatpush2.bf16.msra.mxu0 0
        %2367 = vmatprep.mubr.bf16.mxu0 0
        %2368 = vmatmul.mubr.bf16.gmra.mxu0 %v2312
        %v2369 = vpop.f32.mrf.mxu0
        %v2370 = vadd.f32 0.0, %v2369
        %v2371 = vpop.f32.mrf.mxu0
        %v2372 = vpop.f32.mrf.mxu0
        %v2373 = vadd.f32 0.0, %v2372
        %v2374 = vpop.f32.mrf.mxu0
        %2375 = vmatprep.mubr.bf16.mxu0 0
        %2376 = vmatmul.mubr.bf16.gmra.mxu0 %v2315
        %v2377 = vpop.f32.mrf.mxu0
        %v2378 = vadd.f32 0.0, %v2377
        %v2379 = vpop.f32.mrf.mxu0
        %v2380 = vpop.f32.mrf.mxu0
        %v2381 = vadd.f32 0.0, %v2380
        %v2382 = vpop.f32.mrf.mxu0
        %2383 = vmatprep.mubr.bf16.mxu0 0
        %2384 = vmatmul.mubr.bf16.gmra.mxu0 %v2318
        %v2385 = vpop.f32.mrf.mxu0
        %v2386 = vadd.f32 0.0, %v2385
        %v2387 = vpop.f32.mrf.mxu0
        %v2388 = vpop.f32.mrf.mxu0
        %v2389 = vadd.f32 0.0, %v2388
        %v2390 = vpop.f32.mrf.mxu0
        %2391 = vmatprep.mubr.bf16.mxu0 0
        %2392 = vmatmul.mubr.bf16.gmra.mxu0 %v2321
        %v2393 = vpop.f32.mrf.mxu0
        %v2394 = vadd.f32 0.0, %v2393
        %v2395 = vpop.f32.mrf.mxu0
        %v2396 = vpop.f32.mrf.mxu0
        %v2397 = vadd.f32 0.0, %v2396
        %v2398 = vpop.f32.mrf.mxu0
        %2399 = vmatprep.mubr.bf16.mxu0 0
        %2400 = vmatmul.mubr.bf16.gmra.mxu0 %v2324
        %v2401 = vpop.f32.mrf.mxu0
        %v2402 = vadd.f32 0.0, %v2401
        %v2403 = vpop.f32.mrf.mxu0
        %v2404 = vpop.f32.mrf.mxu0
        %v2405 = vadd.f32 0.0, %v2404
        %v2406 = vpop.f32.mrf.mxu0
        %2407 = vmatprep.mubr.bf16.mxu0 0
        %2408 = vmatmul.mubr.bf16.gmra.mxu0 %v2327
        %v2409 = vpop.f32.mrf.mxu0
        %v2410 = vadd.f32 0.0, %v2409
        %v2411 = vpop.f32.mrf.mxu0
        %v2412 = vpop.f32.mrf.mxu0
        %v2413 = vadd.f32 0.0, %v2412
        %v2414 = vpop.f32.mrf.mxu0
        %2415 = vmatprep.mubr.bf16.mxu0 0
        %2416 = vmatmul.mubr.bf16.gmra.mxu0 %v2330
        %v2417 = vpop.f32.mrf.mxu0
        %v2418 = vadd.f32 0.0, %v2417
        %v2419 = vpop.f32.mrf.mxu0
        %v2420 = vpop.f32.mrf.mxu0
        %v2421 = vadd.f32 0.0, %v2420
        %v2422 = vpop.f32.mrf.mxu0
        %2423 = vmatprep.mubr.bf16.mxu0 0
        %2424 = vmatmul.mubr.bf16.gmra.mxu0 %v2333
        %v2425 = vpop.f32.mrf.mxu0
        %v2426 = vadd.f32 0.0, %v2425
        %v2427 = vpop.f32.mrf.mxu0
        %v2428 = vpop.f32.mrf.mxu0
        %v2429 = vadd.f32 0.0, %v2428
        %v2430 = vpop.f32.mrf.mxu0
        %2431 = vdwg.mxu0
        %v2432 = vadd.f32 %v2254, %v2370
        %v2433 = vadd.f32 %v2255, %v2373
        %v2434 = vadd.f32 %v2256, %v2378
        %v2435 = vadd.f32 %v2257, %v2381
        %v2436 = vadd.f32 %v2258, %v2386
        %v2437 = vadd.f32 %v2259, %v2389
        %v2438 = vadd.f32 %v2260, %v2394
        %v2439 = vadd.f32 %v2261, %v2397
        %v2440 = vadd.f32 %v2262, %v2402
        %v2441 = vadd.f32 %v2263, %v2405
        %v2442 = vadd.f32 %v2264, %v2410
        %v2443 = vadd.f32 %v2265, %v2413
        %v2444 = vadd.f32 %v2266, %v2418
        %v2445 = vadd.f32 %v2267, %v2421
        %v2446 = vadd.f32 %v2268, %v2426
        %v2447 = vadd.f32 %v2269, %v2429
        %s2448 = scalar_select %p464, 7, 5
        %s2449 = scalar_select %p1258, 13, 12
        %v2450 = vstv %s2448
        %vm2451 = vcmp.ge.s32.totalorder %v932, %v2450
        %vm2452 = vcmp.ge.s32.totalorder %v933, %v2450
        %v2453 = vstv %s2449
        %vm2454 = vcmp.le.s32.totalorder %v932, %v2453
        %vm2455 = vcmp.le.s32.totalorder %v933, %v2453
        %vm2456 = vmand %vm2451, %vm2454
        %vm2457 = vmand %vm2452, %vm2455
        %v2458 = vsel %vm2456, 1, 0
        %v2459 = vsel %vm2457, 1, 0
        %vm2460 = vcmp.eq.s32.totalorder %v2458, 1
        %vm2461 = vcmp.eq.s32.totalorder %v2459, 1
        %v2462 = vsel %vm2460, %v2432, -inf
        %v2463 = vsel %vm2461, %v2433, -inf
        %v2464 = vsel %vm2460, %v2434, -inf
        %v2465 = vsel %vm2461, %v2435, -inf
        %v2466 = vsel %vm2460, %v2436, -inf
        %v2467 = vsel %vm2461, %v2437, -inf
        %v2468 = vsel %vm2460, %v2438, -inf
        %v2469 = vsel %vm2461, %v2439, -inf
        %v2470 = vsel %vm2460, %v2440, -inf
        %v2471 = vsel %vm2461, %v2441, -inf
        %v2472 = vsel %vm2460, %v2442, -inf
        %v2473 = vsel %vm2461, %v2443, -inf
        %v2474 = vsel %vm2460, %v2444, -inf
        %v2475 = vsel %vm2461, %v2445, -inf
        %v2476 = vsel %vm2460, %v2446, -inf
        %v2477 = vsel %vm2461, %v2447, -inf
        %v2478 = vld [vmem:[#allocation5] sm:$0xff]
        %v2479 = vsel %vm979, %v2462, -inf
        %v2480 = vsel %vm979, %v2463, -inf
        %v2481 = vmax.f32 %v2479, %v2480
        %v2482 = vrot.slane %v2481, 4
        %v2483 = vmax.f32 %v2481, %v2482
        %v2484 = vrot.slane %v2483, 2
        %v2485 = vmax.f32 %v2483, %v2484
        %v2486 = vrot.slane %v2485, 1
        %v2487 = vmax.f32 %v2485, %v2486
        %v2488 = vsel %vm979, %v2464, -inf
        %v2489 = vsel %vm979, %v2465, -inf
        %v2490 = vmax.f32 %v2488, %v2489
        %v2491 = vrot.slane %v2490, 4
        %v2492 = vmax.f32 %v2490, %v2491
        %v2493 = vrot.slane %v2492, 2
        %v2494 = vmax.f32 %v2492, %v2493
        %v2495 = vrot.slane %v2494, 1
        %v2496 = vmax.f32 %v2494, %v2495
        %v2497 = vsel %vm979, %v2466, -inf
        %v2498 = vsel %vm979, %v2467, -inf
        %v2499 = vmax.f32 %v2497, %v2498
        %v2500 = vrot.slane %v2499, 4
        %v2501 = vmax.f32 %v2499, %v2500
        %v2502 = vrot.slane %v2501, 2
        %v2503 = vmax.f32 %v2501, %v2502
        %v2504 = vrot.slane %v2503, 1
        %v2505 = vmax.f32 %v2503, %v2504
        %v2506 = vsel %vm979, %v2468, -inf
        %v2507 = vsel %vm979, %v2469, -inf
        %v2508 = vmax.f32 %v2506, %v2507
        %v2509 = vrot.slane %v2508, 4
        %v2510 = vmax.f32 %v2508, %v2509
        %v2511 = vrot.slane %v2510, 2
        %v2512 = vmax.f32 %v2510, %v2511
        %v2513 = vrot.slane %v2512, 1
        %v2514 = vmax.f32 %v2512, %v2513
        %v2515 = vsel %vm979, %v2470, -inf
        %v2516 = vsel %vm979, %v2471, -inf
        %v2517 = vmax.f32 %v2515, %v2516
        %v2518 = vrot.slane %v2517, 4
        %v2519 = vmax.f32 %v2517, %v2518
        %v2520 = vrot.slane %v2519, 2
        %v2521 = vmax.f32 %v2519, %v2520
        %v2522 = vrot.slane %v2521, 1
        %v2523 = vmax.f32 %v2521, %v2522
        %v2524 = vsel %vm979, %v2472, -inf
        %v2525 = vsel %vm979, %v2473, -inf
        %v2526 = vmax.f32 %v2524, %v2525
        %v2527 = vrot.slane %v2526, 4
        %v2528 = vmax.f32 %v2526, %v2527
        %v2529 = vrot.slane %v2528, 2
        %v2530 = vmax.f32 %v2528, %v2529
        %v2531 = vrot.slane %v2530, 1
        %v2532 = vmax.f32 %v2530, %v2531
        %v2533 = vsel %vm979, %v2474, -inf
        %v2534 = vsel %vm979, %v2475, -inf
        %v2535 = vmax.f32 %v2533, %v2534
        %v2536 = vrot.slane %v2535, 4
        %v2537 = vmax.f32 %v2535, %v2536
        %v2538 = vrot.slane %v2537, 2
        %v2539 = vmax.f32 %v2537, %v2538
        %v2540 = vrot.slane %v2539, 1
        %v2541 = vmax.f32 %v2539, %v2540
        %v2542 = vsel %vm979, %v2476, -inf
        %v2543 = vsel %vm979, %v2477, -inf
        %v2544 = vmax.f32 %v2542, %v2543
        %v2545 = vrot.slane %v2544, 4
        %v2546 = vmax.f32 %v2544, %v2545
        %v2547 = vrot.slane %v2546, 2
        %v2548 = vmax.f32 %v2546, %v2547
        %v2549 = vrot.slane %v2548, 1
        %v2550 = vmax.f32 %v2548, %v2549
        %v2559 = vsel %vm1368, %v2496, %v2487
        %v2560 = vsel %vm1370, %v2505, %v2559
        %v2561 = vsel %vm1372, %v2514, %v2560
        %v2562 = vsel %vm1374, %v2523, %v2561
        %v2563 = vsel %vm1376, %v2532, %v2562
        %v2564 = vsel %vm1378, %v2541, %v2563
        %v2565 = vsel %vm1380, %v2550, %v2564
        %v2567 = vmax.f32 %v2478, %v2565
        %2568 = vst.msk [vmem:[#allocation5] sm:$0xff] %vm979, %v2567
        %v2569 = vld [vmem:[#allocation2 + $0x4] sm:$0xc]
        %v2570 = vld [vmem:[#allocation2 + $0x10] sm:$0xc]
        %v2571 = vld [vmem:[#allocation2 + $0x1c] sm:$0xc]
        %v2572 = vld [vmem:[#allocation2 + $0x28] sm:$0xc]
        %v2573 = vld [vmem:[#allocation2 + $0x34] sm:$0xc]
        %v2574 = vld [vmem:[#allocation2 + $0x40] sm:$0xc]
        %v2575 = vld [vmem:[#allocation2 + $0x4c] sm:$0xc]
        %v2576 = vld [vmem:[#allocation2 + $0x58] sm:$0xc]
        %vm2577 = vcmask 257026
        %vm2578 = vsmask.f32 7946
        %vm2579 = vmand %vm2577, %vm2578
        %v2580 = vld [vmem:[#allocation2] sm:$0xc]
        %v2581 = vsel %vm2579, %v2569, %v2580
        %2582 = vst [vmem:[#allocation2] sm:$0xc] %v2581
        %v2583 = vld [vmem:[#allocation2 + $0xc] sm:$0xc]
        %v2584 = vsel %vm2579, %v2570, %v2583
        %2585 = vst [vmem:[#allocation2 + $0xc] sm:$0xc] %v2584
        %v2586 = vld [vmem:[#allocation2 + $0x18] sm:$0xc]
        %v2587 = vsel %vm2579, %v2571, %v2586
        %2588 = vst [vmem:[#allocation2 + $0x18] sm:$0xc] %v2587
        %v2589 = vld [vmem:[#allocation2 + $0x24] sm:$0xc]
        %v2590 = vsel %vm2579, %v2572, %v2589
        %2591 = vst [vmem:[#allocation2 + $0x24] sm:$0xc] %v2590
        %v2592 = vld [vmem:[#allocation2 + $0x30] sm:$0xc]
        %v2593 = vsel %vm2579, %v2573, %v2592
        %2594 = vst [vmem:[#allocation2 + $0x30] sm:$0xc] %v2593
        %v2595 = vld [vmem:[#allocation2 + $0x3c] sm:$0xc]
        %v2596 = vsel %vm2579, %v2574, %v2595
        %2597 = vst [vmem:[#allocation2 + $0x3c] sm:$0xc] %v2596
        %v2598 = vld [vmem:[#allocation2 + $0x48] sm:$0xc]
        %v2599 = vsel %vm2579, %v2575, %v2598
        %2600 = vst [vmem:[#allocation2 + $0x48] sm:$0xc] %v2599
        %v2601 = vld [vmem:[#allocation2 + $0x54] sm:$0xc]
        %v2602 = vsel %vm2579, %v2576, %v2601
        %2603 = vst [vmem:[#allocation2 + $0x54] sm:$0xc] %v2602
        // Predicated region
        $region85: #{tpu_custom_call.1} parent=55 // pred_check
          %p2604 = pneg %p1258
        $region86: #{tpu_custom_call.1} parent=55 // pred_check_branch
          %2606 = sbr.rel (%p2604) target = $region88
        $region87: #{tpu_custom_call.1} parent=55 // pred_region
          %v2607 = vld [vmem:[%s3] sm:$0x7]
          %v2608 = vld [vmem:[#allocation3] sm:$0xff]
          %v2609 = vlaneseq
          %v2610 = vshrl.u32 %v2609, 7
          %v2611 = vsub.s32 0, %v2610
          %v2612 = vrot.slane %v2607, %v2611
          %v2613 = vadd.f32 %v2608, %v2612
          %v2614 = vmax.f32 %v2613, 0.0
          %v2615 = vld [vmem:[#allocation4] sm:$0xff]
          %v2616 = vlaneseq
          %v2617 = vshrl.u32 %v2616, 7
          %v2618 = vsub.s32 1, %v2617
          %v2619 = vrot.slane %v2607, %v2618
          %v2620 = vadd.f32 %v2615, %v2619
          %v2621 = vmax.f32 %v2620, 0.0
          %v2622 = vld [vmem:[#allocation5] sm:$0xff]
          %v2623 = vlaneseq
          %v2624 = vshrl.u32 %v2623, 7
          %v2625 = vsub.s32 2, %v2624
          %v2626 = vrot.slane %v2607, %v2625
          %v2627 = vadd.f32 %v2622, %v2626
          %v2628 = vmax.f32 %v2627, 0.0
          %v2629 = vld [vmem:[#allocation12] sm:$0xf]
          %v2630 = vld [vmem:[#allocation12 + $0x4] sm:$0xf]
          %v2631 = vld [vmem:[#allocation12 + $0x8] sm:$0xf]
          %v2632 = vld [vmem:[#allocation12 + $0xc] sm:$0xf]
          %s2633 = scalar_lea.vmem [#allocation12], 16
          %v2634 = vld [vmem:[%s2633] sm:$0xf]
          %v2635 = vld [vmem:[%s2633 + $0x4] sm:$0xf]
          %v2636 = vld [vmem:[%s2633 + $0x8] sm:$0xf]
          %v2637 = vld [vmem:[%s2633 + $0xc] sm:$0xf]
          %v2642 = vunpack.c.l.b16 %v2634
          %v2643 = vunpack.c.l.b16 %v2635
          %v2644 = vunpack.c.l.b16 %v2636
          %v2645 = vunpack.c.l.b16 %v2637
          %v2646 = vpack.c.b16 %v2643, %v2642
          %v2647 = vpack.c.b16 %v2645, %v2644
          %v2651 = vsel %vm979, %v2621, 0
          %2653 = vmatprep.subr.bf16.mxu0 0
          %2654 = vmatpush1.bf16.msra.mxu0 0
          %2655 = vmatprep.subr.bf16.mxu0 0
          %2656 = vmatpush1.bf16.msra.mxu0 0
          %2657 = vmatprep.subr.bf16.mxu0 0
          %2658 = vmatpush1.bf16.msra.mxu0 0
          %2659 = vmatprep.subr.bf16.mxu0 0
          %2660 = vmatpush1.bf16.msra.mxu0 0
          %2661 = vmatprep.subr.bf16.mxu0 0
          %2662 = vmatpush1.bf16.msra.mxu0 0
          %2663 = vmatprep.subr.bf16.mxu0 0
          %2664 = vmatpush1.bf16.msra.mxu0 0
          %2665 = vmatprep.subr.bf16.mxu0 0
          %2666 = vmatpush1.bf16.msra.mxu0 %v2647
          %2667 = vmatprep.subr.bf16.mxu0 0
          %2668 = vmatpush1.bf16.msra.mxu0 %v2646
          %2669 = vmatprep.subr.bf16.mxu0 0
          %2670 = vmatpush2.bf16.msra.mxu0 0
          %2671 = vmatprep.subr.bf16.mxu0 0
          %2672 = vmatpush2.bf16.msra.mxu0 0
          %2673 = vmatprep.subr.bf16.mxu0 0
          %2674 = vmatpush2.bf16.msra.mxu0 0
          %2675 = vmatprep.subr.bf16.mxu0 0
          %2676 = vmatpush2.bf16.msra.mxu0 0
          %2677 = vmatprep.subr.bf16.mxu0 0
          %2678 = vmatpush2.bf16.msra.mxu0 0
          %2679 = vmatprep.subr.bf16.mxu0 0
          %2680 = vmatpush2.bf16.msra.mxu0 0
          %2681 = vmatprep.subr.bf16.mxu0 0
          %2682 = vmatpush2.bf16.msra.mxu0 0
          %2683 = vmatprep.subr.bf16.mxu0 0
          %2684 = vmatpush2.bf16.msra.mxu0 0
          %2685 = vmatprep.mubr.f32.mxu0 0.0
          %2686 = vmatmul.mubr.f32.gmra.mxu0 %v2651
          %v2687 = vpop.f32.mrf.mxu0
          %v2688 = vadd.f32 0.0, %v2687
          %v2689 = vpop.f32.mrf.mxu0
          %2690 = vdwg.mxu0
          %v2695 = vunpack.c.l.b16 %v2629
          %v2696 = vunpack.c.l.b16 %v2630
          %v2697 = vunpack.c.l.b16 %v2631
          %v2698 = vunpack.c.l.b16 %v2632
          %v2699 = vpack.c.b16 %v2696, %v2695
          %v2700 = vpack.c.b16 %v2698, %v2697
          %v2704 = vsel %vm979, %v2614, 0
          %2706 = vmatprep.subr.bf16.mxu0 0
          %2707 = vmatpush1.bf16.msra.mxu0 0
          %2708 = vmatprep.subr.bf16.mxu0 0
          %2709 = vmatpush1.bf16.msra.mxu0 0
          %2710 = vmatprep.subr.bf16.mxu0 0
          %2711 = vmatpush1.bf16.msra.mxu0 0
          %2712 = vmatprep.subr.bf16.mxu0 0
          %2713 = vmatpush1.bf16.msra.mxu0 0
          %2714 = vmatprep.subr.bf16.mxu0 0
          %2715 = vmatpush1.bf16.msra.mxu0 0
          %2716 = vmatprep.subr.bf16.mxu0 0
          %2717 = vmatpush1.bf16.msra.mxu0 0
          %2718 = vmatprep.subr.bf16.mxu0 0
          %2719 = vmatpush1.bf16.msra.mxu0 %v2700
          %2720 = vmatprep.subr.bf16.mxu0 0
          %2721 = vmatpush1.bf16.msra.mxu0 %v2699
          %2722 = vmatprep.subr.bf16.mxu0 0
          %2723 = vmatpush2.bf16.msra.mxu0 0
          %2724 = vmatprep.subr.bf16.mxu0 0
          %2725 = vmatpush2.bf16.msra.mxu0 0
          %2726 = vmatprep.subr.bf16.mxu0 0
          %2727 = vmatpush2.bf16.msra.mxu0 0
          %2728 = vmatprep.subr.bf16.mxu0 0
          %2729 = vmatpush2.bf16.msra.mxu0 0
          %2730 = vmatprep.subr.bf16.mxu0 0
          %2731 = vmatpush2.bf16.msra.mxu0 0
          %2732 = vmatprep.subr.bf16.mxu0 0
          %2733 = vmatpush2.bf16.msra.mxu0 0
          %2734 = vmatprep.subr.bf16.mxu0 0
          %2735 = vmatpush2.bf16.msra.mxu0 0
          %2736 = vmatprep.subr.bf16.mxu0 0
          %2737 = vmatpush2.bf16.msra.mxu0 0
          %2738 = vmatprep.mubr.f32.mxu0 0.0
          %2739 = vmatmul.mubr.f32.gmra.mxu0 %v2704
          %v2740 = vpop.f32.mrf.mxu0
          %v2741 = vadd.f32 %v2688, %v2740
          %v2742 = vpop.f32.mrf.mxu0
          %2743 = vdwg.mxu0
          %s2744 = scalar_lea.vmem [#allocation12], 32
          %v2745 = vld [vmem:[%s2744] sm:$0xf]
          %v2746 = vld [vmem:[%s2744 + $0x4] sm:$0xf]
          %v2747 = vld [vmem:[%s2744 + $0x8] sm:$0xf]
          %v2748 = vld [vmem:[%s2744 + $0xc] sm:$0xf]
          %v2753 = vunpack.c.l.b16 %v2745
          %v2754 = vunpack.c.l.b16 %v2746
          %v2755 = vunpack.c.l.b16 %v2747
          %v2756 = vunpack.c.l.b16 %v2748
          %v2757 = vpack.c.b16 %v2754, %v2753
          %v2758 = vpack.c.b16 %v2756, %v2755
          %v2762 = vsel %vm979, %v2628, 0
          %2764 = vmatprep.subr.bf16.mxu0 0
          %2765 = vmatpush1.bf16.msra.mxu0 0
          %2766 = vmatprep.subr.bf16.mxu0 0
          %2767 = vmatpush1.bf16.msra.mxu0 0
          %2768 = vmatprep.subr.bf16.mxu0 0
          %2769 = vmatpush1.bf16.msra.mxu0 0
          %2770 = vmatprep.subr.bf16.mxu0 0
          %2771 = vmatpush1.bf16.msra.mxu0 0
          %2772 = vmatprep.subr.bf16.mxu0 0
          %2773 = vmatpush1.bf16.msra.mxu0 0
          %2774 = vmatprep.subr.bf16.mxu0 0
          %2775 = vmatpush1.bf16.msra.mxu0 0
          %2776 = vmatprep.subr.bf16.mxu0 0
          %2777 = vmatpush1.bf16.msra.mxu0 %v2758
          %2778 = vmatprep.subr.bf16.mxu0 0
          %2779 = vmatpush1.bf16.msra.mxu0 %v2757
          %2780 = vmatprep.subr.bf16.mxu0 0
          %2781 = vmatpush2.bf16.msra.mxu0 0
          %2782 = vmatprep.subr.bf16.mxu0 0
          %2783 = vmatpush2.bf16.msra.mxu0 0
          %2784 = vmatprep.subr.bf16.mxu0 0
          %2785 = vmatpush2.bf16.msra.mxu0 0
          %2786 = vmatprep.subr.bf16.mxu0 0
          %2787 = vmatpush2.bf16.msra.mxu0 0
          %2788 = vmatprep.subr.bf16.mxu0 0
          %2789 = vmatpush2.bf16.msra.mxu0 0
          %2790 = vmatprep.subr.bf16.mxu0 0
          %2791 = vmatpush2.bf16.msra.mxu0 0
          %2792 = vmatprep.subr.bf16.mxu0 0
          %2793 = vmatpush2.bf16.msra.mxu0 0
          %2794 = vmatprep.subr.bf16.mxu0 0
          %2795 = vmatpush2.bf16.msra.mxu0 0
          %2796 = vmatprep.mubr.f32.mxu0 0.0
          %2797 = vmatmul.mubr.f32.gmra.mxu0 %v2762
          %v2798 = vpop.f32.mrf.mxu0
          %v2799 = vadd.f32 0.0, %v2798
          %v2800 = vpop.f32.mrf.mxu0
          %2801 = vdwg.mxu0
          %v2802 = vadd.f32 %v2741, %v2799
          %v2803 = vld [vmem:[%s5] sm:$0x1]
          %v2805 = vlaneseq
          %v2806 = vshrl.u32 %v2805, 7
          %v2807 = vsub.s32 0, %v2806
          %v2808 = vrot.slane %v2803, %v2807
          %v2810 = vadd.f32 %v2802, %v2808
          %v2811 = vld [vmem:[%s406] sm:$0xff]
          %v2812 = vld [vmem:[#allocation14] sm:$0xff]
          %v2813 = vld [vmem:[#allocation14 + $0x8] sm:$0xff]
          %v2814 = vld [vmem:[#allocation14 + $0x10] sm:$0xff]
          %v2815 = vld [vmem:[#allocation14 + $0x18] sm:$0xff]
          %v2816 = vld [vmem:[#allocation15] sm:$0xff]
          %v2817 = vld [vmem:[#allocation15 + $0x8] sm:$0xff]
          %v2818 = vld [vmem:[#allocation15 + $0x10] sm:$0xff]
          %v2819 = vld [vmem:[#allocation15 + $0x18] sm:$0xff]
          %v2820 = vld [vmem:[#allocation15 + $0x20] sm:$0xff]
          %v2821 = vld [vmem:[#allocation15 + $0x28] sm:$0xff]
          %v2822 = vld [vmem:[#allocation15 + $0x30] sm:$0xff]
          %v2823 = vld [vmem:[#allocation15 + $0x38] sm:$0xff]
          %v2824 = vld [vmem:[#allocation15 + $0x40] sm:$0xff]
          %v2825 = vld [vmem:[#allocation15 + $0x48] sm:$0xff]
          %v2826 = vld [vmem:[#allocation15 + $0x50] sm:$0xff]
          %v2827 = vld [vmem:[#allocation15 + $0x58] sm:$0xff]
          %v2828 = vld [vmem:[#allocation15 + $0x60] sm:$0xff]
          %v2829 = vld [vmem:[#allocation15 + $0x68] sm:$0xff]
          %v2830 = vld [vmem:[#allocation15 + $0x70] sm:$0xff]
          %v2831 = vld [vmem:[#allocation15 + $0x78] sm:$0xff]
          %2832 = vmatprep.subr.mxu0 0.0
          %2833 = vmatpush1.msra.mxu0 %v2831
          %2834 = vmatprep.subr.mxu0 0.0
          %2835 = vmatpush1.msra.mxu0 %v2830
          %2836 = vmatprep.subr.mxu0 0.0
          %2837 = vmatpush1.msra.mxu0 %v2829
          %2838 = vmatprep.subr.mxu0 0.0
          %2839 = vmatpush1.msra.mxu0 %v2828
          %2840 = vmatprep.subr.mxu0 0.0
          %2841 = vmatpush1.msra.mxu0 %v2827
          %2842 = vmatprep.subr.mxu0 0.0
          %2843 = vmatpush1.msra.mxu0 %v2826
          %2844 = vmatprep.subr.mxu0 0.0
          %2845 = vmatpush1.msra.mxu0 %v2825
          %2846 = vmatprep.subr.mxu0 0.0
          %2847 = vmatpush1.msra.mxu0 %v2824
          %2848 = vmatprep.subr.mxu0 0.0
          %2849 = vmatpush1.msra.mxu0 %v2823
          %2850 = vmatprep.subr.mxu0 0.0
          %2851 = vmatpush1.msra.mxu0 %v2822
          %2852 = vmatprep.subr.mxu0 0.0
          %2853 = vmatpush1.msra.mxu0 %v2821
          %2854 = vmatprep.subr.mxu0 0.0
          %2855 = vmatpush1.msra.mxu0 %v2820
          %2856 = vmatprep.subr.mxu0 0.0
          %2857 = vmatpush1.msra.mxu0 %v2819
          %2858 = vmatprep.subr.mxu0 0.0
          %2859 = vmatpush1.msra.mxu0 %v2818
          %2860 = vmatprep.subr.mxu0 0.0
          %2861 = vmatpush1.msra.mxu0 %v2817
          %2862 = vmatprep.subr.mxu0 0.0
          %2863 = vmatpush1.msra.mxu0 %v2816
          %2864 = vmatprep.subr.mxu0 0.0
          %2865 = vmatpush2.msra.mxu0 0.0
          %2866 = vmatprep.subr.mxu0 0.0
          %2867 = vmatpush2.msra.mxu0 0.0
          %2868 = vmatprep.subr.mxu0 0.0
          %2869 = vmatpush2.msra.mxu0 0.0
          %2870 = vmatprep.subr.mxu0 0.0
          %2871 = vmatpush2.msra.mxu0 0.0
          %2872 = vmatprep.subr.mxu0 0.0
          %2873 = vmatpush2.msra.mxu0 0.0
          %2874 = vmatprep.subr.mxu0 0.0
          %2875 = vmatpush2.msra.mxu0 0.0
          %2876 = vmatprep.subr.mxu0 0.0
          %2877 = vmatpush2.msra.mxu0 0.0
          %2878 = vmatprep.subr.mxu0 0.0
          %2879 = vmatpush2.msra.mxu0 0.0
          %2880 = vmatprep.subr.mxu0 0.0
          %2881 = vmatpush2.msra.mxu0 0.0
          %2882 = vmatprep.subr.mxu0 0.0
          %2883 = vmatpush2.msra.mxu0 0.0
          %2884 = vmatprep.subr.mxu0 0.0
          %2885 = vmatpush2.msra.mxu0 0.0
          %2886 = vmatprep.subr.mxu0 0.0
          %2887 = vmatpush2.msra.mxu0 0.0
          %2888 = vmatprep.subr.mxu0 0.0
          %2889 = vmatpush2.msra.mxu0 0.0
          %2890 = vmatprep.subr.mxu0 0.0
          %2891 = vmatpush2.msra.mxu0 0.0
          %2892 = vmatprep.subr.mxu0 0.0
          %2893 = vmatpush2.msra.mxu0 0.0
          %2894 = vmatprep.subr.mxu0 0.0
          %2895 = vmatpush2.msra.mxu0 0.0
          %2896 = vmatprep.mubr.f32.mxu0 0.0
          %2897 = vmatmul.mubr.f32.gmra.mxu0 %v2810
          %v2898 = vpop.f32.mrf.mxu0
          %v2899 = vadd.f32 0.0, %v2898
          %v2900 = vpop.f32.mrf.mxu0
          %2901 = vdwg.mxu0
          %v2903 = vsel %vm979, %v2811, 0
          %2905 = vmatprep.subr.mxu0 0.0
          %2906 = vmatpush1.msra.mxu0 0.0
          %2907 = vmatprep.subr.mxu0 0.0
          %2908 = vmatpush1.msra.mxu0 0.0
          %2909 = vmatprep.subr.mxu0 0.0
          %2910 = vmatpush1.msra.mxu0 0.0
          %2911 = vmatprep.subr.mxu0 0.0
          %2912 = vmatpush1.msra.mxu0 0.0
          %2913 = vmatprep.subr.mxu0 0.0
          %2914 = vmatpush1.msra.mxu0 0.0
          %2915 = vmatprep.subr.mxu0 0.0
          %2916 = vmatpush1.msra.mxu0 0.0
          %2917 = vmatprep.subr.mxu0 0.0
          %2918 = vmatpush1.msra.mxu0 0.0
          %2919 = vmatprep.subr.mxu0 0.0
          %2920 = vmatpush1.msra.mxu0 0.0
          %2921 = vmatprep.subr.mxu0 0.0
          %2922 = vmatpush1.msra.mxu0 0.0
          %2923 = vmatprep.subr.mxu0 0.0
          %2924 = vmatpush1.msra.mxu0 0.0
          %2925 = vmatprep.subr.mxu0 0.0
          %2926 = vmatpush1.msra.mxu0 0.0
          %2927 = vmatprep.subr.mxu0 0.0
          %2928 = vmatpush1.msra.mxu0 0.0
          %2929 = vmatprep.subr.mxu0 0.0
          %2930 = vmatpush1.msra.mxu0 %v2815
          %2931 = vmatprep.subr.mxu0 0.0
          %2932 = vmatpush1.msra.mxu0 %v2814
          %2933 = vmatprep.subr.mxu0 0.0
          %2934 = vmatpush1.msra.mxu0 %v2813
          %2935 = vmatprep.subr.mxu0 0.0
          %2936 = vmatpush1.msra.mxu0 %v2812
          %2937 = vmatprep.subr.mxu0 0.0
          %2938 = vmatpush2.msra.mxu0 0.0
          %2939 = vmatprep.subr.mxu0 0.0
          %2940 = vmatpush2.msra.mxu0 0.0
          %2941 = vmatprep.subr.mxu0 0.0
          %2942 = vmatpush2.msra.mxu0 0.0
          %2943 = vmatprep.subr.mxu0 0.0
          %2944 = vmatpush2.msra.mxu0 0.0
          %2945 = vmatprep.subr.mxu0 0.0
          %2946 = vmatpush2.msra.mxu0 0.0
          %2947 = vmatprep.subr.mxu0 0.0
          %2948 = vmatpush2.msra.mxu0 0.0
          %2949 = vmatprep.subr.mxu0 0.0
          %2950 = vmatpush2.msra.mxu0 0.0
          %2951 = vmatprep.subr.mxu0 0.0
          %2952 = vmatpush2.msra.mxu0 0.0
          %2953 = vmatprep.subr.mxu0 0.0
          %2954 = vmatpush2.msra.mxu0 0.0
          %2955 = vmatprep.subr.mxu0 0.0
          %2956 = vmatpush2.msra.mxu0 0.0
          %2957 = vmatprep.subr.mxu0 0.0
          %2958 = vmatpush2.msra.mxu0 0.0
          %2959 = vmatprep.subr.mxu0 0.0
          %2960 = vmatpush2.msra.mxu0 0.0
          %2961 = vmatprep.subr.mxu0 0.0
          %2962 = vmatpush2.msra.mxu0 0.0
          %2963 = vmatprep.subr.mxu0 0.0
          %2964 = vmatpush2.msra.mxu0 0.0
          %2965 = vmatprep.subr.mxu0 0.0
          %2966 = vmatpush2.msra.mxu0 0.0
          %2967 = vmatprep.subr.mxu0 0.0
          %2968 = vmatpush2.msra.mxu0 0.0
          %2969 = vmatprep.mubr.f32.mxu0 0.0
          %2970 = vmatmul.mubr.f32.gmra.mxu0 %v2903
          %v2971 = vpop.f32.mrf.mxu0
          %v2972 = vadd.f32 %v2899, %v2971
          %v2973 = vpop.f32.mrf.mxu0
          %2974 = vdwg.mxu0
          %v2975 = vld [vmem:[%s8] sm:$0x1]
          %v2977 = vlaneseq
          %v2978 = vshrl.u32 %v2977, 7
          %v2979 = vsub.s32 0, %v2978
          %v2980 = vrot.slane %v2975, %v2979
          %v2982 = vadd.f32 %v2972, %v2980
          %2983 = vst [vmem:[%s461] sm:$0xff] %v2982
        $region88: #{tpu_custom_call.1} parent=55 // pred_fallthru
          _
        %s2984 = sand.u32 %s252, 1
        %s2985 = scalar_lea.sflag [#allocation8], %s2984
        %s2986 = sand.u32 %s252, 1
        %s2987 = smul.addr %s2986, 8
        %s2988 = scalar_lea.vmem [#allocation17], %s2987
        // Predicated region
        $region89: #{tpu_custom_call.1} parent=55 // pred_check
          %p2989 = pneg %p262
        $region90: #{tpu_custom_call.1} parent=55 // pred_check_branch
          %2991 = sbr.rel (%p2989) target = $region92
        $region91: #{tpu_custom_call.1} parent=55 // pred_region
          %s2993 = ssub.s32 128, 128
          %2994 = vsyncadd %s2985, %s2993
          %s2995 = smul.addr %s35, 128
          %s2996 = scalar_lea.hbm %s9, %s2995
          %s2998 = sshll.u32 %s2988, 4
          %s2999 = int_to_ptr.vmem [resolvable:$true] %s2998
          %3001 = dma.vmem_to_hbm [thread:$0]  %s2999, 128, %s2996, %s2985
        $region92: #{tpu_custom_call.1} parent=55 // pred_fallthru
          _
      $region56: #{tpu_custom_call.1} parent=5 // pred_fallthru
        _
      %p3002 = scmp.le.s32.totalorder 2, %s26
      // Predicated region
      $region93: #{tpu_custom_call.1} parent=5 // pred_check
        %p3003 = pneg %p3002
      $region94: #{tpu_custom_call.1} parent=5 // pred_check_branch
        %3005 = sbr.rel (%p3003) target = $region96
      $region95: #{tpu_custom_call.1} parent=5 // pred_region
        %s3006 = ssub.s32 %s26, 2
        // Predicated region
        $region97: #{tpu_custom_call.1} parent=95 // pred_check
          %p3007 = pneg %p268
        $region98: #{tpu_custom_call.1} parent=95 // pred_check_branch
          %3009 = sbr.rel (%p3007) target = $region100
        $region99: #{tpu_custom_call.1} parent=95 // pred_region
          %s3010 = sand.u32 %s253, 1
          %s3011 = scalar_lea.sflag [#allocation8], %s3010
          %s3012 = sand.u32 %s253, 1
          %s3013 = smul.addr %s3012, 8
          %s3014 = scalar_lea.vmem [#allocation17], %s3013
          %3015 = dma.done %s3011, 128
        $region100: #{tpu_custom_call.1} parent=95 // pred_fallthru
          _
      $region96: #{tpu_custom_call.1} parent=5 // pred_fallthru
        _
    $region6: #{tpu_custom_call.1} parent=1 // loop_footer
      %s30 = sadd.s32 1, %s26
    $region7: #{tpu_custom_call.1} parent=1 // loop_footer_branch
      %25 = sbr.rel target = $region3
    $region8: #{tpu_custom_call.1} parent=1 // loop_exit
      _
    %3016 = vsyncpa [#allocation7], 1
    %s3017 = scalar_lea.sflag [#allocation7], 1
    %3018 = vsyncpa %s3017, 1
    %3019 = vsyncpa [#allocation10], 1
    %s3020 = scalar_lea.sflag [#allocation10], 1
    %3021 = vsyncpa %s3020, 1
    %3022 = vsyncpa [#allocation13], 1
    %3023 = vsyncpa [#allocation16], 1
    %3024 = vsyncpa [#allocation8], 1
    %s3025 = scalar_lea.sflag [#allocation8], 1
    %3026 = vsyncpa %s3025, 1

</llo_original>
